<compile_context>
chip_gen: v7x
topology: tpu7x:2x2x1
jax: 0.10.0
libtpu: 0.0.40
codegen_flags: <defaults>
</compile_context>

<pallas_src>
import functools
import math

import jax
import jax.numpy as jnp
from jax import lax
from jax.experimental import pallas as pl
from jax.experimental.pallas import tpu as pltpu

_BF16 = jnp.bfloat16


def _detect_vmem_budget():
    """Per-generation VMEM budget: ~96 MiB on v5e/v6e, ~48 MiB on v7x."""
    cap = 64 * 1024 * 1024
    try:
        info = pltpu.get_tpu_info()
        cap = int(getattr(info, "vmem_capacity_bytes", cap) or cap)
    except Exception:
        pass
    return min(int(cap * 3 // 4), 96 * 1024 * 1024)


_VMEM_LIMIT = _detect_vmem_budget()


def _tile(dim, cap, align):
    """Largest t <= cap with t % align == 0 and dim % t == 0, else full dim."""
    if dim <= cap or dim % align != 0:
        return dim
    t = (cap // align) * align
    while t >= align:
        if dim % t == 0:
            return t
        t -= align
    return dim


# ----------------------------------------------------------------------------
# Kernel 1: generic tiled linear  y = x @ w + b   (bf16 MXU inputs, f32 acc)
# ----------------------------------------------------------------------------
def _linear_kernel(x_ref, w_ref, b_ref, o_ref, acc_ref):
    k = pl.program_id(2)

    @pl.when(k == 0)
    def _():
        acc_ref[...] = jnp.zeros_like(acc_ref)

    acc_ref[...] += jnp.dot(x_ref[...].astype(_BF16), w_ref[...],
                            preferred_element_type=jnp.float32)

    @pl.when(k == pl.num_programs(2) - 1)
    def _():
        o_ref[...] = acc_ref[...] + b_ref[...]


def linear(x2d, w_bf16, b2d, *, tm_cap=512, tn_cap=512, tk_cap=1024):
    M, K = x2d.shape
    N = w_bf16.shape[1]
    tm = _tile(M, tm_cap, 8)
    tn = _tile(N, tn_cap, 128)
    tk = _tile(K, tk_cap, 128)
    return pl.pallas_call(
        _linear_kernel,
        out_shape=jax.ShapeDtypeStruct((M, N), jnp.float32),
        grid=(M // tm, N // tn, K // tk),
        in_specs=[
            pl.BlockSpec((tm, tk), lambda i, j, k: (i, k)),
            pl.BlockSpec((tk, tn), lambda i, j, k: (k, j)),
            pl.BlockSpec((1, tn), lambda i, j, k: (0, j)),
        ],
        out_specs=pl.BlockSpec((tm, tn), lambda i, j, k: (i, j)),
        scratch_shapes=[pltpu.VMEM((tm, tn), jnp.float32)],
        compiler_params=pltpu.CompilerParams(
            dimension_semantics=("parallel", "parallel", "arbitrary"),
            vmem_limit_bytes=_VMEM_LIMIT),
    )(x2d, w_bf16, b2d)


# ----------------------------------------------------------------------------
# Kernel 2: input projection with folded transpose + fused PE add.
#           src is read channel-major [C_tile, S]; the transpose happens in
#           VMEM (XLU), never through HBM.  Epilogue adds bias + pos-encoding.
# ----------------------------------------------------------------------------
def _inproj_kernel(x_ref, w_ref, b_ref, pe_ref, o_ref, acc_ref):
    k = pl.program_id(1)

    @pl.when(k == 0)
    def _():
        acc_ref[...] = jnp.zeros_like(acc_ref)

    xt = x_ref[...].T.astype(_BF16)                      # [S, tk]
    acc_ref[...] += jnp.dot(xt, w_ref[...], preferred_element_type=jnp.float32)

    @pl.when(k == pl.num_programs(1) - 1)
    def _():
        o_ref[...] = acc_ref[...] + b_ref[...] + pe_ref[...]


def input_projection(src_cs, w_bf16, b2d, pe_s, *, tk_cap=1024):
    """src_cs: [B, C, S] (channel-major) -> [B, S, D] = src^T @ w + b + pe."""
    B, C, S = src_cs.shape
    D = w_bf16.shape[1]
    tk = _tile(C, tk_cap, 8)
    return pl.pallas_call(
        _inproj_kernel,
        out_shape=jax.ShapeDtypeStruct((B, S, D), jnp.float32),
        grid=(B, C // tk),
        in_specs=[
            pl.BlockSpec((None, tk, S), lambda b, k: (b, k, 0)),
            pl.BlockSpec((tk, D), lambda b, k: (k, 0)),
            pl.BlockSpec((1, D), lambda b, k: (0, 0)),
            pl.BlockSpec((S, D), lambda b, k: (0, 0)),
        ],
        out_specs=pl.BlockSpec((None, S, D), lambda b, k: (b, 0, 0)),
        scratch_shapes=[pltpu.VMEM((S, D), jnp.float32)],
        compiler_params=pltpu.CompilerParams(
            dimension_semantics=("parallel", "arbitrary"),
            vmem_limit_bytes=_VMEM_LIMIT),
    )(src_cs, w_bf16, b2d, pe_s)


# ----------------------------------------------------------------------------
# Shared multi-head attention core: heads written straight into a VMEM slab.
# ----------------------------------------------------------------------------
def _mha_into(attn_ref, q, k, v, *, nhead, scale, causal):
    Sq, D = q.shape
    Sk = k.shape[0]
    Dh = D // nhead
    if causal:
        qi = lax.broadcasted_iota(jnp.int32, (Sq, Sk), 0)
        kj = lax.broadcasted_iota(jnp.int32, (Sq, Sk), 1)
        neg = jnp.where(kj <= qi, 0.0, -jnp.inf).astype(jnp.float32)
    for h in range(nhead):                                # static unroll
        lo = h * Dh
        qh = q[:, lo:lo + Dh].astype(_BF16)
        kh = k[:, lo:lo + Dh].astype(_BF16)
        vh = v[:, lo:lo + Dh].astype(_BF16)
        # contract the head dim directly (no explicit K transpose).
        s = lax.dot_general(qh, kh, (((1,), (1,)), ((), ())),
                            preferred_element_type=jnp.float32) * scale
        if causal:
            s = s + neg
        m = jnp.max(s, axis=-1, keepdims=True)
        p = jnp.exp(s - m)
        denom = jnp.sum(p, axis=-1, keepdims=True)
        p = p * pl.reciprocal(denom, approx=True)
        attn_ref[:, lo:lo + Dh] = jnp.dot(p.astype(_BF16), vh,
                                          preferred_element_type=jnp.float32)


# ----------------------------------------------------------------------------
# Kernel 3: fused self-attention block (per batch element):
#           LN(x + OutProj(MHA(QKV(x))))  -- one pallas_call per layer.
# ----------------------------------------------------------------------------
def _self_block_kernel(x_ref, wqkv_ref, bqkv_ref, wo_ref, bo_ref, g_ref, bt_ref,
                       o_ref, attn_ref, *, nhead, scale, causal):
    x = x_ref[...]                                        # [S, D] f32
    D = x.shape[1]
    qkv = jnp.dot(x.astype(_BF16), wqkv_ref[...],
                  preferred_element_type=jnp.float32) + bqkv_ref[...]   # [S, 3D]
    _mha_into(attn_ref, qkv[:, :D], qkv[:, D:2 * D], qkv[:, 2 * D:3 * D],
              nhead=nhead, scale=scale, causal=causal)
    y = jnp.dot(attn_ref[...].astype(_BF16), wo_ref[...],
                preferred_element_type=jnp.float32) + bo_ref[...] + x
    mu = jnp.mean(y, axis=-1, keepdims=True)
    var = jnp.mean(jnp.square(y - mu), axis=-1, keepdims=True)
    o_ref[...] = (y - mu) * lax.rsqrt(var + 1e-5) * g_ref[...] + bt_ref[...]


def self_attention_block(x, w_qkv, b_qkv, wo, bo, g, bt, *, nhead, causal):
    """x: [B, S, D] -> LayerNorm(x + MHA(x)Wo + bo), grid over B."""
    B, S, D = x.shape
    scale = 1.0 / math.sqrt(D // nhead)
    return pl.pallas_call(
        functools.partial(_self_block_kernel, nhead=nhead, scale=scale,
                          causal=causal),
        out_shape=jax.ShapeDtypeStruct((B, S, D), jnp.float32),
        grid=(B,),
        in_specs=[
            pl.BlockSpec((None, S, D), lambda b: (b, 0, 0)),
            pl.BlockSpec((D, 3 * D), lambda b: (0, 0)),
            pl.BlockSpec((1, 3 * D), lambda b: (0, 0)),
            pl.BlockSpec((D, D), lambda b: (0, 0)),
            pl.BlockSpec((1, D), lambda b: (0, 0)),
            pl.BlockSpec((1, D), lambda b: (0, 0)),
            pl.BlockSpec((1, D), lambda b: (0, 0)),
        ],
        out_specs=pl.BlockSpec((None, S, D), lambda b: (b, 0, 0)),
        scratch_shapes=[pltpu.VMEM((S, D), jnp.float32)],
        compiler_params=pltpu.CompilerParams(
            dimension_semantics=("parallel",),
            vmem_limit_bytes=_VMEM_LIMIT),
    )(x, w_qkv, b_qkv, wo, bo, g, bt)


# ----------------------------------------------------------------------------
# Kernel 4: fused cross-attention block (per batch element):
#           LN(y + OutProj(MHA(Q(y), KV(memory))))
# ----------------------------------------------------------------------------
def _cross_block_kernel(y_ref, m_ref, wq_ref, bq_ref, wkv_ref, bkv_ref,
                        wo_ref, bo_ref, g_ref, bt_ref, o_ref, attn_ref,
                        *, nhead, scale):
    y = y_ref[...]                                        # [T, D]
    mem = m_ref[...]                                      # [S, D]
    D = y.shape[1]
    q = jnp.dot(y.astype(_BF16), wq_ref[...],
                preferred_element_type=jnp.float32) + bq_ref[...]        # [T, D]
    kv = jnp.dot(mem.astype(_BF16), wkv_ref[...],
                 preferred_element_type=jnp.float32) + bkv_ref[...]      # [S, 2D]
    _mha_into(attn_ref, q, kv[:, :D], kv[:, D:2 * D],
              nhead=nhead, scale=scale, causal=False)
    out = jnp.dot(attn_ref[...].astype(_BF16), wo_ref[...],
                  preferred_element_type=jnp.float32) + bo_ref[...] + y
    mu = jnp.mean(out, axis=-1, keepdims=True)
    var = jnp.mean(jnp.square(out - mu), axis=-1, keepdims=True)
    o_ref[...] = (out - mu) * lax.rsqrt(var + 1e-5) * g_ref[...] + bt_ref[...]


def cross_attention_block(y, memory, wq, bq, w_kv, b_kv, wo, bo, g, bt, *, nhead):
    B, T, D = y.shape
    S = memory.shape[1]
    scale = 1.0 / math.sqrt(D // nhead)
    return pl.pallas_call(
        functools.partial(_cross_block_kernel, nhead=nhead, scale=scale),
        out_shape=jax.ShapeDtypeStruct((B, T, D), jnp.float32),
        grid=(B,),
        in_specs=[
            pl.BlockSpec((None, T, D), lambda b: (b, 0, 0)),
            pl.BlockSpec((None, S, D), lambda b: (b, 0, 0)),
            pl.BlockSpec((D, D), lambda b: (0, 0)),
            pl.BlockSpec((1, D), lambda b: (0, 0)),
            pl.BlockSpec((D, 2 * D), lambda b: (0, 0)),
            pl.BlockSpec((1, 2 * D), lambda b: (0, 0)),
            pl.BlockSpec((D, D), lambda b: (0, 0)),
            pl.BlockSpec((1, D), lambda b: (0, 0)),
            pl.BlockSpec((1, D), lambda b: (0, 0)),
            pl.BlockSpec((1, D), lambda b: (0, 0)),
        ],
        out_specs=pl.BlockSpec((None, T, D), lambda b: (b, 0, 0)),
        scratch_shapes=[pltpu.VMEM((T, D), jnp.float32)],
        compiler_params=pltpu.CompilerParams(
            dimension_semantics=("parallel",),
            vmem_limit_bytes=_VMEM_LIMIT),
    )(y, memory, wq, bq, w_kv, b_kv, wo, bo, g, bt)


# ----------------------------------------------------------------------------
# Kernel 5: fused FFN   LayerNorm(x + relu(x@w1+b1)@w2 + b2) * g + beta
#           dim_ff is the K-reduction grid axis; the hidden never hits HBM.
# ----------------------------------------------------------------------------
def _ffn_kernel(x_ref, w1_ref, b1_ref, w2_ref, b2_ref, g_ref, bt_ref,
                o_ref, acc_ref):
    f = pl.program_id(1)

    @pl.when(f == 0)
    def _():
        acc_ref[...] = jnp.zeros_like(acc_ref)

    x = x_ref[...]
    h = jnp.dot(x.astype(_BF16), w1_ref[...],
                preferred_element_type=jnp.float32) + b1_ref[...]
    h = jnp.maximum(h, 0.0)
    acc_ref[...] += jnp.dot(h.astype(_BF16), w2_ref[...],
                            preferred_element_type=jnp.float32)

    @pl.when(f == pl.num_programs(1) - 1)
    def _():
        y = acc_ref[...] + b2_ref[...] + x
        mu = jnp.mean(y, axis=-1, keepdims=True)
        var = jnp.mean(jnp.square(y - mu), axis=-1, keepdims=True)
        o_ref[...] = (y - mu) * lax.rsqrt(var + 1e-5) * g_ref[...] + bt_ref[...]


def ffn_ln_residual(x2d, w1, b1, w2, b2, gamma, beta, *, tm_cap=512, tf_cap=1024):
    M, D = x2d.shape
    F = w1.shape[1]
    tm = _tile(M, tm_cap, 8)
    tf = _tile(F, tf_cap, 128)
    return pl.pallas_call(
        _ffn_kernel,
        out_shape=jax.ShapeDtypeStruct((M, D), jnp.float32),
        grid=(M // tm, F // tf),
        in_specs=[
            pl.BlockSpec((tm, D), lambda i, f: (i, 0)),
            pl.BlockSpec((D, tf), lambda i, f: (0, f)),
            pl.BlockSpec((1, tf), lambda i, f: (0, f)),
            pl.BlockSpec((tf, D), lambda i, f: (f, 0)),
            pl.BlockSpec((1, D), lambda i, f: (0, 0)),
            pl.BlockSpec((1, D), lambda i, f: (0, 0)),
            pl.BlockSpec((1, D), lambda i, f: (0, 0)),
        ],
        out_specs=pl.BlockSpec((tm, D), lambda i, f: (i, 0)),
        scratch_shapes=[pltpu.VMEM((tm, D), jnp.float32)],
        compiler_params=pltpu.CompilerParams(
            dimension_semantics=("parallel", "arbitrary"),
            vmem_limit_bytes=_VMEM_LIMIT),
    )(x2d, w1, b1, w2, b2, gamma, beta)


# ----------------------------------------------------------------------------
# Model glue (only cheap reshapes / gathers; all heavy compute is in kernels)
# ----------------------------------------------------------------------------
def make_pe(max_len, d_model):
    position = jnp.arange(max_len, dtype=jnp.float32)[:, None]
    div_term = jnp.exp(jnp.arange(0, d_model, 2, dtype=jnp.float32)
                       * (-math.log(10000.0) / d_model))
    pe = jnp.zeros((max_len, d_model), jnp.float32)
    pe = pe.at[:, 0::2].set(jnp.sin(position * div_term))
    pe = pe.at[:, 1::2].set(jnp.cos(position * div_term))
    return pe                                                  # [max_len, D]


def transformer_ocr_forward(params, cnn_features, tgt_tokens, *, nhead):
    B, C, H, W = cnn_features.shape
    d_model = params["enc_in_w"].shape[1]
    S = H * W
    pe = params["pe"]

    # ---------------- Encoder ----------------
    # Channel-major view; the [B,C,S] -> [B,S,C] transpose is folded into the
    # projection kernel, and the positional encoding is fused into its epilogue.
    src_cs = cnn_features.reshape(B, C, S)
    x = input_projection(src_cs, params["enc_in_w"], params["enc_in_b"],
                         pe[:S])                               # [B, S, D]
    for lp in params["enc_layers"]:
        sa = lp["self_attn"]
        x = self_attention_block(x, sa["w_qkv"], sa["b_qkv"], sa["wo"], sa["bo"],
                                 lp["ln1_g"], lp["ln1_b"],
                                 nhead=nhead, causal=False)
        x = ffn_ln_residual(x.reshape(B * S, d_model),
                            lp["ff1_w"], lp["ff1_b"], lp["ff2_w"], lp["ff2_b"],
                            lp["ln2_g"], lp["ln2_b"]).reshape(B, S, d_model)
    memory = x                                                 # [B, S, D]

    # ---------------- Decoder ----------------
    T = tgt_tokens.shape[1]
    y = jnp.take(params["embed"], tgt_tokens, axis=0) + pe[None, :T, :]
    for lp in params["dec_layers"]:
        sa = lp["self_attn"]
        y = self_attention_block(y, sa["w_qkv"], sa["b_qkv"], sa["wo"], sa["bo"],
                                 lp["ln1_g"], lp["ln1_b"],
                                 nhead=nhead, causal=True)
        ca = lp["cross_attn"]
        y = cross_attention_block(y, memory, ca["wq"], ca["bq"],
                                  ca["w_kv"], ca["b_kv"], ca["wo"], ca["bo"],
                                  lp["ln2_g"], lp["ln2_b"], nhead=nhead)
        y = ffn_ln_residual(y.reshape(B * T, d_model),
                            lp["ff1_w"], lp["ff1_b"], lp["ff2_w"], lp["ff2_b"],
                            lp["ln3_g"], lp["ln3_b"]).reshape(B, T, d_model)

    # ---------------- Classifier (fc padded to 128-multiple at init) ----------
    out_dim = params["embed"].shape[0]
    logits = linear(y.reshape(B * T, d_model), params["fc_w"], params["fc_b"])
    logits = logits[:, :out_dim].reshape(B, T, out_dim)
    return logits.transpose(1, 0, 2)                           # [T, B, output_dim]


# ----------------------------------------------------------------------------
# Deterministic parameter initialization (shapes follow the PyTorch __init__).
# Weights live in bf16 (HBM traffic / MXU rate); biases, LN params, embedding
# and positional encoding stay f32.
# ----------------------------------------------------------------------------
def init_params(key, input_dim, output_dim, d_model, n_enc, n_dec, dim_ff,
                max_len=64):
    keys = iter(jax.random.split(key, 512))

    def wf(shape, scale=0.02):
        return scale * jax.random.normal(next(keys), shape, dtype=jnp.float32)

    def wb(shape, scale=0.02):
        return wf(shape, scale).astype(_BF16)

    zeros = lambda s: jnp.zeros(s, jnp.float32)
    ones = lambda s: jnp.ones(s, jnp.float32)

    def attn_self():
        return {"w_qkv": wb((d_model, 3 * d_model)),     # [q | k | v] columns
                "b_qkv": zeros((1, 3 * d_model)),
                "wo": wb((d_model, d_model)), "bo": zeros((1, d_model))}

    def attn_cross():
        return {"wq": wb((d_model, d_model)), "bq": zeros((1, d_model)),
                "w_kv": wb((d_model, 2 * d_model)),      # [k | v] columns
                "b_kv": zeros((1, 2 * d_model)),
                "wo": wb((d_model, d_model)), "bo": zeros((1, d_model))}

    def ffn():
        return {"ff1_w": wb((d_model, dim_ff)), "ff1_b": zeros((1, dim_ff)),
                "ff2_w": wb((dim_ff, d_model)), "ff2_b": zeros((1, d_model))}

    def enc_layer():
        return {"self_attn": attn_self(), **ffn(),
                "ln1_g": ones((1, d_model)), "ln1_b": zeros((1, d_model)),
                "ln2_g": ones((1, d_model)), "ln2_b": zeros((1, d_model))}

    def dec_layer():
        return {"self_attn": attn_self(), "cross_attn": attn_cross(), **ffn(),
                "ln1_g": ones((1, d_model)), "ln1_b": zeros((1, d_model)),
                "ln2_g": ones((1, d_model)), "ln2_b": zeros((1, d_model)),
                "ln3_g": ones((1, d_model)), "ln3_b": zeros((1, d_model))}

    # classifier padded once (lane-dense stores), sliced back in the wrapper
    n_pad = ((output_dim + 127) // 128) * 128
    fc_w = jnp.pad(wf((d_model, output_dim)), ((0, 0), (0, n_pad - output_dim)))
    fc_b = jnp.zeros((1, n_pad), jnp.float32)

    return {
        "enc_in_w": wb((input_dim, d_model)), "enc_in_b": zeros((1, d_model)),
        "embed": wf((output_dim, d_model), scale=1.0),
        "pe": make_pe(max_len, d_model),
        "enc_layers": [enc_layer() for _ in range(n_enc)],
        "dec_layers": [dec_layer() for _ in range(n_dec)],
        "fc_w": fc_w.astype(_BF16), "fc_b": fc_b,
    }


# ----------------------------------------------------------------------------
if __name__ == "__main__":
    key = jax.random.PRNGKey(0)
    k_params, k_img, k_tgt = jax.random.split(key, 3)

    # Small config consistent with the module (scaled from 2048/512/82/6/2048).
    B, C, H, W = 2, 16, 4, 4          # cnn_features: [B, feature_dim, H, W]
    T = 8                             # target sequence length
    d_model, nhead = 32, 4
    n_enc, n_dec, dim_ff = 2, 2, 64
    output_dim = 20

    params = init_params(k_params, C, output_dim, d_model, n_enc, n_dec, dim_ff,
                         max_len=64)
    cnn_features = jax.random.normal(k_img, (B, C, H, W), dtype=jnp.float32)
    tgt = jax.random.randint(k_tgt, (B, T), 0, output_dim, dtype=jnp.int32)

    fwd = jax.jit(functools.partial(transformer_ocr_forward, nhead=nhead))
    out = fwd(params, cnn_features, tgt)
    jax.block_until_ready(out)
    assert out.shape == (T, B, output_dim), out.shape
    assert bool(jnp.all(jnp.isfinite(out)))
    print("KERNEL_OK")
</pallas_src>

<mosaic_0001>
module attributes {stable_mosaic.version = 11 : i64} {
  func.func @_self_block_kernel(%arg0: i32, %arg1: memref<1x16x32xf32, #tpu.memory_space<vmem>>, %arg2: memref<32x96xbf16, #tpu.memory_space<vmem>>, %arg3: memref<1x96xf32, #tpu.memory_space<vmem>>, %arg4: memref<32x32xbf16, #tpu.memory_space<vmem>>, %arg5: memref<1x32xf32, #tpu.memory_space<vmem>>, %arg6: memref<1x32xf32, #tpu.memory_space<vmem>>, %arg7: memref<1x32xf32, #tpu.memory_space<vmem>>, %arg8: memref<1x16x32xf32, #tpu.memory_space<vmem>>, %arg9: memref<16x32xf32, #tpu.memory_space<vmem>>) attributes {dimension_semantics = [#tpu.dimension_semantics<parallel>], iteration_bounds = array<i64: 2>, scalar_prefetch = 0 : i64, scratch_operands = 1 : i64, tpu.core_type = #tpu.core_type<tc>, window_params = [{transform_indices = @transform_0, window_bounds = array<i64: 1, 16, 32>}, {pipeline_mode = #tpu.pipeline_mode<synchronous>, transform_indices = @transform_1, window_bounds = array<i64: 32, 96>}, {pipeline_mode = #tpu.pipeline_mode<synchronous>, transform_indices = @transform_2, window_bounds = array<i64: 1, 96>}, {pipeline_mode = #tpu.pipeline_mode<synchronous>, transform_indices = @transform_3, window_bounds = array<i64: 32, 32>}, {pipeline_mode = #tpu.pipeline_mode<synchronous>, transform_indices = @transform_4, window_bounds = array<i64: 1, 32>}, {pipeline_mode = #tpu.pipeline_mode<synchronous>, transform_indices = @transform_5, window_bounds = array<i64: 1, 32>}, {pipeline_mode = #tpu.pipeline_mode<synchronous>, transform_indices = @transform_6, window_bounds = array<i64: 1, 32>}, {transform_indices = @transform_7, window_bounds = array<i64: 1, 16, 32>}]} {
    %c0 = arith.constant 0 : index
    %c0_0 = arith.constant 0 : index
    %c0_1 = arith.constant 0 : index
    %0 = vector.load %arg1[%c0, %c0_0, %c0_1] : memref<1x16x32xf32, #tpu.memory_space<vmem>>, vector<1x16x32xf32>
    %1 = vector.shape_cast %0 : vector<1x16x32xf32> to vector<16x32xf32>
    %2 = arith.truncf %1 : vector<16x32xf32> to vector<16x32xbf16>
    %c0_2 = arith.constant 0 : index
    %c0_3 = arith.constant 0 : index
    %3 = vector.load %arg2[%c0_2, %c0_3] : memref<32x96xbf16, #tpu.memory_space<vmem>>, vector<32x96xbf16>
    %cst = arith.constant dense<0.000000e+00> : vector<16x96xf32>
    %4 = tpu.matmul %2, %3, %cst {dimension_numbers = #tpu.dot_dimension_numbers<[1], [0], [0], [1], [0, 0, 1, 1], [], []>} : vector<16x32xbf16>, vector<32x96xbf16>, vector<16x96xf32> -> vector<16x96xf32>
    %c0_4 = arith.constant 0 : index
    %c0_5 = arith.constant 0 : index
    %5 = vector.load %arg3[%c0_4, %c0_5] : memref<1x96xf32, #tpu.memory_space<vmem>>, vector<1x96xf32>
    %6 = vector.broadcast %5 : vector<1x96xf32> to vector<16x96xf32>
    %7 = arith.addf %4, %6 : vector<16x96xf32>
    %8 = vector.extract_strided_slice %7 {offsets = [0, 0], sizes = [16, 32], strides = [1, 1]} : vector<16x96xf32> to vector<16x32xf32>
    %9 = vector.extract_strided_slice %7 {offsets = [0, 32], sizes = [16, 32], strides = [1, 1]} : vector<16x96xf32> to vector<16x32xf32>
    %10 = vector.extract_strided_slice %7 {offsets = [0, 64], sizes = [16, 32], strides = [1, 1]} : vector<16x96xf32> to vector<16x32xf32>
    %11 = vector.extract_strided_slice %8 {offsets = [0, 0], sizes = [16, 8], strides = [1, 1]} : vector<16x32xf32> to vector<16x8xf32>
    %12 = arith.truncf %11 : vector<16x8xf32> to vector<16x8xbf16>
    %13 = vector.extract_strided_slice %9 {offsets = [0, 0], sizes = [16, 8], strides = [1, 1]} : vector<16x32xf32> to vector<16x8xf32>
    %14 = arith.truncf %13 : vector<16x8xf32> to vector<16x8xbf16>
    %15 = vector.extract_strided_slice %10 {offsets = [0, 0], sizes = [16, 8], strides = [1, 1]} : vector<16x32xf32> to vector<16x8xf32>
    %16 = arith.truncf %15 : vector<16x8xf32> to vector<16x8xbf16>
    %cst_6 = arith.constant dense<0.000000e+00> : vector<16x16xf32>
    %17 = tpu.matmul %12, %14, %cst_6 {dimension_numbers = #tpu.dot_dimension_numbers<[1], [1], [0], [0], [0, 0, 1, 0], [], []>} : vector<16x8xbf16>, vector<16x8xbf16>, vector<16x16xf32> -> vector<16x16xf32>
    %cst_7 = arith.constant 0.353553385 : f32
    %18 = vector.broadcast %cst_7 : f32 to vector<16x16xf32>
    %19 = arith.mulf %17, %18 : vector<16x16xf32>
    %cst_8 = arith.constant dense<0xFF800000> : vector<16xf32>
    %20 = vector.multi_reduction <maximumf>, %19, %cst_8 [1] : vector<16x16xf32> to vector<16xf32>
    %21 = vector.shape_cast %20 : vector<16xf32> to vector<16x1xf32>
    %22 = vector.broadcast %21 : vector<16x1xf32> to vector<16x16xf32>
    %23 = arith.subf %19, %22 : vector<16x16xf32>
    %24 = math.exp %23 : vector<16x16xf32>
    %cst_9 = arith.constant dense<0.000000e+00> : vector<16xf32>
    %25 = vector.multi_reduction <add>, %24, %cst_9 [1] : vector<16x16xf32> to vector<16xf32>
    %26 = vector.shape_cast %25 : vector<16xf32> to vector<16x1xf32>
    %27 = tpu.reciprocal %26 {approx = true} : vector<16x1xf32> -> vector<16x1xf32>
    %28 = vector.broadcast %27 : vector<16x1xf32> to vector<16x16xf32>
    %29 = arith.mulf %24, %28 : vector<16x16xf32>
    %30 = arith.truncf %29 : vector<16x16xf32> to vector<16x16xbf16>
    %cst_10 = arith.constant dense<0.000000e+00> : vector<16x8xf32>
    %31 = tpu.matmul %30, %16, %cst_10 {dimension_numbers = #tpu.dot_dimension_numbers<[1], [0], [0], [1], [0, 0, 1, 1], [], []>} : vector<16x16xbf16>, vector<16x8xbf16>, vector<16x8xf32> -> vector<16x8xf32>
    %c0_11 = arith.constant 0 : index
    %c0_12 = arith.constant 0 : index
    %32 = vector.load %arg9[%c0_11, %c0_12] : memref<16x32xf32, #tpu.memory_space<vmem>>, vector<16x8xf32>
    tpu.vector_store %arg9[%c0_11, %c0_12], %31 {strides = array<i32>} : memref<16x32xf32, #tpu.memory_space<vmem>>, vector<16x8xf32>,
    %33 = vector.extract_strided_slice %8 {offsets = [0, 8], sizes = [16, 8], strides = [1, 1]} : vector<16x32xf32> to vector<16x8xf32>
    %34 = arith.truncf %33 : vector<16x8xf32> to vector<16x8xbf16>
    %35 = vector.extract_strided_slice %9 {offsets = [0, 8], sizes = [16, 8], strides = [1, 1]} : vector<16x32xf32> to vector<16x8xf32>
    %36 = arith.truncf %35 : vector<16x8xf32> to vector<16x8xbf16>
    %37 = vector.extract_strided_slice %10 {offsets = [0, 8], sizes = [16, 8], strides = [1, 1]} : vector<16x32xf32> to vector<16x8xf32>
    %38 = arith.truncf %37 : vector<16x8xf32> to vector<16x8xbf16>
    %cst_13 = arith.constant dense<0.000000e+00> : vector<16x16xf32>
    %39 = tpu.matmul %34, %36, %cst_13 {dimension_numbers = #tpu.dot_dimension_numbers<[1], [1], [0], [0], [0, 0, 1, 0], [], []>} : vector<16x8xbf16>, vector<16x8xbf16>, vector<16x16xf32> -> vector<16x16xf32>
    %cst_14 = arith.constant 0.353553385 : f32
    %40 = vector.broadcast %cst_14 : f32 to vector<16x16xf32>
    %41 = arith.mulf %39, %40 : vector<16x16xf32>
    %cst_15 = arith.constant dense<0xFF800000> : vector<16xf32>
    %42 = vector.multi_reduction <maximumf>, %41, %cst_15 [1] : vector<16x16xf32> to vector<16xf32>
    %43 = vector.shape_cast %42 : vector<16xf32> to vector<16x1xf32>
    %44 = vector.broadcast %43 : vector<16x1xf32> to vector<16x16xf32>
    %45 = arith.subf %41, %44 : vector<16x16xf32>
    %46 = math.exp %45 : vector<16x16xf32>
    %cst_16 = arith.constant dense<0.000000e+00> : vector<16xf32>
    %47 = vector.multi_reduction <add>, %46, %cst_16 [1] : vector<16x16xf32> to vector<16xf32>
    %48 = vector.shape_cast %47 : vector<16xf32> to vector<16x1xf32>
    %49 = tpu.reciprocal %48 {approx = true} : vector<16x1xf32> -> vector<16x1xf32>
    %50 = vector.broadcast %49 : vector<16x1xf32> to vector<16x16xf32>
    %51 = arith.mulf %46, %50 : vector<16x16xf32>
    %52 = arith.truncf %51 : vector<16x16xf32> to vector<16x16xbf16>
    %cst_17 = arith.constant dense<0.000000e+00> : vector<16x8xf32>
    %53 = tpu.matmul %52, %38, %cst_17 {dimension_numbers = #tpu.dot_dimension_numbers<[1], [0], [0], [1], [0, 0, 1, 1], [], []>} : vector<16x16xbf16>, vector<16x8xbf16>, vector<16x8xf32> -> vector<16x8xf32>
    %c0_18 = arith.constant 0 : index
    %c8 = arith.constant 8 : index
    %54 = vector.load %arg9[%c0_18, %c8] : memref<16x32xf32, #tpu.memory_space<vmem>>, vector<16x8xf32>
    tpu.vector_store %arg9[%c0_18, %c8], %53 {strides = array<i32>} : memref<16x32xf32, #tpu.memory_space<vmem>>, vector<16x8xf32>,
    %55 = vector.extract_strided_slice %8 {offsets = [0, 16], sizes = [16, 8], strides = [1, 1]} : vector<16x32xf32> to vector<16x8xf32>
    %56 = arith.truncf %55 : vector<16x8xf32> to vector<16x8xbf16>
    %57 = vector.extract_strided_slice %9 {offsets = [0, 16], sizes = [16, 8], strides = [1, 1]} : vector<16x32xf32> to vector<16x8xf32>
    %58 = arith.truncf %57 : vector<16x8xf32> to vector<16x8xbf16>
    %59 = vector.extract_strided_slice %10 {offsets = [0, 16], sizes = [16, 8], strides = [1, 1]} : vector<16x32xf32> to vector<16x8xf32>
    %60 = arith.truncf %59 : vector<16x8xf32> to vector<16x8xbf16>
    %cst_19 = arith.constant dense<0.000000e+00> : vector<16x16xf32>
    %61 = tpu.matmul %56, %58, %cst_19 {dimension_numbers = #tpu.dot_dimension_numbers<[1], [1], [0], [0], [0, 0, 1, 0], [], []>} : vector<16x8xbf16>, vector<16x8xbf16>, vector<16x16xf32> -> vector<16x16xf32>
    %cst_20 = arith.constant 0.353553385 : f32
    %62 = vector.broadcast %cst_20 : f32 to vector<16x16xf32>
    %63 = arith.mulf %61, %62 : vector<16x16xf32>
    %cst_21 = arith.constant dense<0xFF800000> : vector<16xf32>
    %64 = vector.multi_reduction <maximumf>, %63, %cst_21 [1] : vector<16x16xf32> to vector<16xf32>
    %65 = vector.shape_cast %64 : vector<16xf32> to vector<16x1xf32>
    %66 = vector.broadcast %65 : vector<16x1xf32> to vector<16x16xf32>
    %67 = arith.subf %63, %66 : vector<16x16xf32>
    %68 = math.exp %67 : vector<16x16xf32>
    %cst_22 = arith.constant dense<0.000000e+00> : vector<16xf32>
    %69 = vector.multi_reduction <add>, %68, %cst_22 [1] : vector<16x16xf32> to vector<16xf32>
    %70 = vector.shape_cast %69 : vector<16xf32> to vector<16x1xf32>
    %71 = tpu.reciprocal %70 {approx = true} : vector<16x1xf32> -> vector<16x1xf32>
    %72 = vector.broadcast %71 : vector<16x1xf32> to vector<16x16xf32>
    %73 = arith.mulf %68, %72 : vector<16x16xf32>
    %74 = arith.truncf %73 : vector<16x16xf32> to vector<16x16xbf16>
    %cst_23 = arith.constant dense<0.000000e+00> : vector<16x8xf32>
    %75 = tpu.matmul %74, %60, %cst_23 {dimension_numbers = #tpu.dot_dimension_numbers<[1], [0], [0], [1], [0, 0, 1, 1], [], []>} : vector<16x16xbf16>, vector<16x8xbf16>, vector<16x8xf32> -> vector<16x8xf32>
    %c0_24 = arith.constant 0 : index
    %c16 = arith.constant 16 : index
    %76 = vector.load %arg9[%c0_24, %c16] : memref<16x32xf32, #tpu.memory_space<vmem>>, vector<16x8xf32>
    tpu.vector_store %arg9[%c0_24, %c16], %75 {strides = array<i32>} : memref<16x32xf32, #tpu.memory_space<vmem>>, vector<16x8xf32>,
    %77 = vector.extract_strided_slice %8 {offsets = [0, 24], sizes = [16, 8], strides = [1, 1]} : vector<16x32xf32> to vector<16x8xf32>
    %78 = arith.truncf %77 : vector<16x8xf32> to vector<16x8xbf16>
    %79 = vector.extract_strided_slice %9 {offsets = [0, 24], sizes = [16, 8], strides = [1, 1]} : vector<16x32xf32> to vector<16x8xf32>
    %80 = arith.truncf %79 : vector<16x8xf32> to vector<16x8xbf16>
    %81 = vector.extract_strided_slice %10 {offsets = [0, 24], sizes = [16, 8], strides = [1, 1]} : vector<16x32xf32> to vector<16x8xf32>
    %82 = arith.truncf %81 : vector<16x8xf32> to vector<16x8xbf16>
    %cst_25 = arith.constant dense<0.000000e+00> : vector<16x16xf32>
    %83 = tpu.matmul %78, %80, %cst_25 {dimension_numbers = #tpu.dot_dimension_numbers<[1], [1], [0], [0], [0, 0, 1, 0], [], []>} : vector<16x8xbf16>, vector<16x8xbf16>, vector<16x16xf32> -> vector<16x16xf32>
    %cst_26 = arith.constant 0.353553385 : f32
    %84 = vector.broadcast %cst_26 : f32 to vector<16x16xf32>
    %85 = arith.mulf %83, %84 : vector<16x16xf32>
    %cst_27 = arith.constant dense<0xFF800000> : vector<16xf32>
    %86 = vector.multi_reduction <maximumf>, %85, %cst_27 [1] : vector<16x16xf32> to vector<16xf32>
    %87 = vector.shape_cast %86 : vector<16xf32> to vector<16x1xf32>
    %88 = vector.broadcast %87 : vector<16x1xf32> to vector<16x16xf32>
    %89 = arith.subf %85, %88 : vector<16x16xf32>
    %90 = math.exp %89 : vector<16x16xf32>
    %cst_28 = arith.constant dense<0.000000e+00> : vector<16xf32>
    %91 = vector.multi_reduction <add>, %90, %cst_28 [1] : vector<16x16xf32> to vector<16xf32>
    %92 = vector.shape_cast %91 : vector<16xf32> to vector<16x1xf32>
    %93 = tpu.reciprocal %92 {approx = true} : vector<16x1xf32> -> vector<16x1xf32>
    %94 = vector.broadcast %93 : vector<16x1xf32> to vector<16x16xf32>
    %95 = arith.mulf %90, %94 : vector<16x16xf32>
    %96 = arith.truncf %95 : vector<16x16xf32> to vector<16x16xbf16>
    %cst_29 = arith.constant dense<0.000000e+00> : vector<16x8xf32>
    %97 = tpu.matmul %96, %82, %cst_29 {dimension_numbers = #tpu.dot_dimension_numbers<[1], [0], [0], [1], [0, 0, 1, 1], [], []>} : vector<16x16xbf16>, vector<16x8xbf16>, vector<16x8xf32> -> vector<16x8xf32>
    %c0_30 = arith.constant 0 : index
    %c24 = arith.constant 24 : index
    %98 = vector.load %arg9[%c0_30, %c24] : memref<16x32xf32, #tpu.memory_space<vmem>>, vector<16x8xf32>
    tpu.vector_store %arg9[%c0_30, %c24], %97 {strides = array<i32>} : memref<16x32xf32, #tpu.memory_space<vmem>>, vector<16x8xf32>,
    %c0_31 = arith.constant 0 : index
    %c0_32 = arith.constant 0 : index
    %99 = vector.load %arg9[%c0_31, %c0_32] : memref<16x32xf32, #tpu.memory_space<vmem>>, vector<16x32xf32>
    %100 = arith.truncf %99 : vector<16x32xf32> to vector<16x32xbf16>
    %c0_33 = arith.constant 0 : index
    %c0_34 = arith.constant 0 : index
    %101 = vector.load %arg4[%c0_33, %c0_34] : memref<32x32xbf16, #tpu.memory_space<vmem>>, vector<32x32xbf16>
    %cst_35 = arith.constant dense<0.000000e+00> : vector<16x32xf32>
    %102 = tpu.matmul %100, %101, %cst_35 {dimension_numbers = #tpu.dot_dimension_numbers<[1], [0], [0], [1], [0, 0, 1, 1], [], []>} : vector<16x32xbf16>, vector<32x32xbf16>, vector<16x32xf32> -> vector<16x32xf32>
    %c0_36 = arith.constant 0 : index
    %c0_37 = arith.constant 0 : index
    %103 = vector.load %arg5[%c0_36, %c0_37] : memref<1x32xf32, #tpu.memory_space<vmem>>, vector<1x32xf32>
    %104 = vector.broadcast %103 : vector<1x32xf32> to vector<16x32xf32>
    %105 = arith.addf %102, %104 : vector<16x32xf32>
    %106 = arith.addf %105, %1 : vector<16x32xf32>
    %cst_38 = arith.constant dense<0.000000e+00> : vector<16xf32>
    %107 = vector.multi_reduction <add>, %106, %cst_38 [1] : vector<16x32xf32> to vector<16xf32>
    %108 = vector.shape_cast %107 : vector<16xf32> to vector<16x1xf32>
    %cst_39 = arith.constant 3.200000e+01 : f32
    %109 = vector.broadcast %cst_39 : f32 to vector<16x1xf32>
    %110 = arith.divf %108, %109 : vector<16x1xf32>
    %111 = vector.broadcast %110 : vector<16x1xf32> to vector<16x32xf32>
    %112 = arith.subf %106, %111 : vector<16x32xf32>
    %113 = arith.mulf %112, %112 : vector<16x32xf32>
    %cst_40 = arith.constant dense<0.000000e+00> : vector<16xf32>
    %114 = vector.multi_reduction <add>, %113, %cst_40 [1] : vector<16x32xf32> to vector<16xf32>
    %115 = vector.shape_cast %114 : vector<16xf32> to vector<16x1xf32>
    %cst_41 = arith.constant 3.200000e+01 : f32
    %116 = vector.broadcast %cst_41 : f32 to vector<16x1xf32>
    %117 = arith.divf %115, %116 : vector<16x1xf32>
    %118 = vector.broadcast %110 : vector<16x1xf32> to vector<16x32xf32>
    %119 = arith.subf %106, %118 : vector<16x32xf32>
    %cst_42 = arith.constant 9.99999974E-6 : f32
    %120 = vector.broadcast %cst_42 : f32 to vector<16x1xf32>
    %121 = arith.addf %117, %120 : vector<16x1xf32>
    %122 = math.rsqrt %121 : vector<16x1xf32>
    %123 = vector.broadcast %122 : vector<16x1xf32> to vector<16x32xf32>
    %124 = arith.mulf %119, %123 : vector<16x32xf32>
    %c0_43 = arith.constant 0 : index
    %c0_44 = arith.constant 0 : index
    %125 = vector.load %arg6[%c0_43, %c0_44] : memref<1x32xf32, #tpu.memory_space<vmem>>, vector<1x32xf32>
    %126 = vector.broadcast %125 : vector<1x32xf32> to vector<16x32xf32>
    %127 = arith.mulf %124, %126 : vector<16x32xf32>
    %c0_45 = arith.constant 0 : index
    %c0_46 = arith.constant 0 : index
    %128 = vector.load %arg7[%c0_45, %c0_46] : memref<1x32xf32, #tpu.memory_space<vmem>>, vector<1x32xf32>
    %129 = vector.broadcast %128 : vector<1x32xf32> to vector<16x32xf32>
    %130 = arith.addf %127, %129 : vector<16x32xf32>
    %c0_47 = arith.constant 0 : index
    %c0_48 = arith.constant 0 : index
    %c0_49 = arith.constant 0 : index
    %131 = vector.load %arg8[%c0_47, %c0_48, %c0_49] : memref<1x16x32xf32, #tpu.memory_space<vmem>>, vector<1x16x32xf32>
    %132 = vector.shape_cast %131 : vector<1x16x32xf32> to vector<16x32xf32>
    %133 = vector.shape_cast %130 : vector<16x32xf32> to vector<1x16x32xf32>
    tpu.vector_store %arg8[%c0_47, %c0_48, %c0_49], %133 {strides = array<i32>} : memref<1x16x32xf32, #tpu.memory_space<vmem>>, vector<1x16x32xf32>,
    return
  }
  func.func @transform_0(%arg0: i32) -> (i32, i32, i32) {
    %c0_i32 = arith.constant 0 : i32
    %c0_i32_0 = arith.constant 0 : i32
    %c0_i32_1 = arith.constant 0 : i32
    return %arg0, %c0_i32, %c0_i32_0 : i32, i32, i32
  }
  func.func @transform_1(%arg0: i32) -> (i32, i32) {
    %c0_i32 = arith.constant 0 : i32
    %c0_i32_0 = arith.constant 0 : i32
    %c0_i32_1 = arith.constant 0 : i32
    return %c0_i32, %c0_i32_0 : i32, i32
  }
  func.func @transform_2(%arg0: i32) -> (i32, i32) {
    %c0_i32 = arith.constant 0 : i32
    %c0_i32_0 = arith.constant 0 : i32
    %c0_i32_1 = arith.constant 0 : i32
    return %c0_i32, %c0_i32_0 : i32, i32
  }
  func.func @transform_3(%arg0: i32) -> (i32, i32) {
    %c0_i32 = arith.constant 0 : i32
    %c0_i32_0 = arith.constant 0 : i32
    %c0_i32_1 = arith.constant 0 : i32
    return %c0_i32, %c0_i32_0 : i32, i32
  }
  func.func @transform_4(%arg0: i32) -> (i32, i32) {
    %c0_i32 = arith.constant 0 : i32
    %c0_i32_0 = arith.constant 0 : i32
    %c0_i32_1 = arith.constant 0 : i32
    return %c0_i32, %c0_i32_0 : i32, i32
  }
  func.func @transform_5(%arg0: i32) -> (i32, i32) {
    %c0_i32 = arith.constant 0 : i32
    %c0_i32_0 = arith.constant 0 : i32
    %c0_i32_1 = arith.constant 0 : i32
    return %c0_i32, %c0_i32_0 : i32, i32
  }
  func.func @transform_6(%arg0: i32) -> (i32, i32) {
    %c0_i32 = arith.constant 0 : i32
    %c0_i32_0 = arith.constant 0 : i32
    %c0_i32_1 = arith.constant 0 : i32
    return %c0_i32, %c0_i32_0 : i32, i32
  }
  func.func @transform_7(%arg0: i32) -> (i32, i32, i32) {
    %c0_i32 = arith.constant 0 : i32
    %c0_i32_0 = arith.constant 0 : i32
    %c0_i32_1 = arith.constant 0 : i32
    return %arg0, %c0_i32, %c0_i32_0 : i32, i32, i32
  }
}

module attributes {stable_mosaic.version = 11 : i64} {
  func.func @_inproj_kernel(%arg0: i32, %arg1: i32, %arg2: memref<1x16x16xf32, #tpu.memory_space<vmem>>, %arg3: memref<16x32xbf16, #tpu.memory_space<vmem>>, %arg4: memref<1x32xf32, #tpu.memory_space<vmem>>, %arg5: memref<16x32xf32, #tpu.memory_space<vmem>>, %arg6: memref<1x16x32xf32, #tpu.memory_space<vmem>>, %arg7: memref<16x32xf32, #tpu.memory_space<vmem>>) attributes {dimension_semantics = [#tpu.dimension_semantics<parallel>, #tpu.dimension_semantics<arbitrary>], iteration_bounds = array<i64: 2, 1>, scalar_prefetch = 0 : i64, scratch_operands = 1 : i64, tpu.core_type = #tpu.core_type<tc>, window_params = [{transform_indices = @transform_0, window_bounds = array<i64: 1, 16, 16>}, {transform_indices = @transform_1, window_bounds = array<i64: 16, 32>}, {pipeline_mode = #tpu.pipeline_mode<synchronous>, transform_indices = @transform_2, window_bounds = array<i64: 1, 32>}, {pipeline_mode = #tpu.pipeline_mode<synchronous>, transform_indices = @transform_3, window_bounds = array<i64: 16, 32>}, {transform_indices = @transform_4, window_bounds = array<i64: 1, 16, 32>}]} {
    %c0_i32 = arith.constant 0 : i32
    %0 = arith.cmpi eq, %arg1, %c0_i32 : i32
    %1 = arith.extui %0 : i1 to i32
    %c0_i32_0 = arith.constant 0 : i32
    %2 = arith.cmpi ne, %1, %c0_i32_0 : i32
    scf.if %2 {
      %cst_11 = arith.constant 0.000000e+00 : f32
      %15 = vector.broadcast %cst_11 : f32 to vector<16x32xf32>
      %c0_12 = arith.constant 0 : index
      %c0_13 = arith.constant 0 : index
      %16 = vector.load %arg7[%c0_12, %c0_13] : memref<16x32xf32, #tpu.memory_space<vmem>>, vector<16x32xf32>
      tpu.vector_store %arg7[%c0_12, %c0_13], %15 {strides = array<i32>} : memref<16x32xf32, #tpu.memory_space<vmem>>, vector<16x32xf32>,
    } else {
    }
    %c0 = arith.constant 0 : index
    %c0_1 = arith.constant 0 : index
    %c0_2 = arith.constant 0 : index
    %3 = vector.load %arg2[%c0, %c0_1, %c0_2] : memref<1x16x16xf32, #tpu.memory_space<vmem>>, vector<1x16x16xf32>
    %4 = vector.shape_cast %3 : vector<1x16x16xf32> to vector<16x16xf32>
    %5 = tpu.transpose %4, [1, 0] : vector<16x16xf32> -> vector<16x16xf32>
    %6 = arith.truncf %5 : vector<16x16xf32> to vector<16x16xbf16>
    %c0_3 = arith.constant 0 : index
    %c0_4 = arith.constant 0 : index
    %7 = vector.load %arg7[%c0_3, %c0_4] : memref<16x32xf32, #tpu.memory_space<vmem>>, vector<16x32xf32>
    %c0_5 = arith.constant 0 : index
    %c0_6 = arith.constant 0 : index
    %8 = vector.load %arg3[%c0_5, %c0_6] : memref<16x32xbf16, #tpu.memory_space<vmem>>, vector<16x32xbf16>
    %cst = arith.constant dense<0.000000e+00> : vector<16x32xf32>
    %9 = tpu.matmul %6, %8, %cst {dimension_numbers = #tpu.dot_dimension_numbers<[1], [0], [0], [1], [0, 0, 1, 1], [], []>} : vector<16x16xbf16>, vector<16x32xbf16>, vector<16x32xf32> -> vector<16x32xf32>
    %10 = arith.addf %7, %9 : vector<16x32xf32>
    %c0_7 = arith.constant 0 : index
    %c0_8 = arith.constant 0 : index
    %11 = vector.load %arg7[%c0_7, %c0_8] : memref<16x32xf32, #tpu.memory_space<vmem>>, vector<16x32xf32>
    tpu.vector_store %arg7[%c0_7, %c0_8], %10 {strides = array<i32>} : memref<16x32xf32, #tpu.memory_space<vmem>>, vector<16x32xf32>,
    %c0_i32_9 = arith.constant 0 : i32
    %12 = arith.cmpi eq, %arg1, %c0_i32_9 : i32
    %13 = arith.extui %12 : i1 to i32
    %c0_i32_10 = arith.constant 0 : i32
    %14 = arith.cmpi ne, %13, %c0_i32_10 : i32
    scf.if %14 {
      %c0_11 = arith.constant 0 : index
      %c0_12 = arith.constant 0 : index
      %15 = vector.load %arg7[%c0_11, %c0_12] : memref<16x32xf32, #tpu.memory_space<vmem>>, vector<16x32xf32>
      %c0_13 = arith.constant 0 : index
      %c0_14 = arith.constant 0 : index
      %16 = vector.load %arg4[%c0_13, %c0_14] : memref<1x32xf32, #tpu.memory_space<vmem>>, vector<1x32xf32>
      %17 = vector.broadcast %16 : vector<1x32xf32> to vector<16x32xf32>
      %18 = arith.addf %15, %17 : vector<16x32xf32>
      %c0_15 = arith.constant 0 : index
      %c0_16 = arith.constant 0 : index
      %19 = vector.load %arg5[%c0_15, %c0_16] : memref<16x32xf32, #tpu.memory_space<vmem>>, vector<16x32xf32>
      %20 = arith.addf %18, %19 : vector<16x32xf32>
      %c0_17 = arith.constant 0 : index
      %c0_18 = arith.constant 0 : index
      %c0_19 = arith.constant 0 : index
      %21 = vector.load %arg6[%c0_17, %c0_18, %c0_19] : memref<1x16x32xf32, #tpu.memory_space<vmem>>, vector<1x16x32xf32>
      %22 = vector.shape_cast %21 : vector<1x16x32xf32> to vector<16x32xf32>
      %23 = vector.shape_cast %20 : vector<16x32xf32> to vector<1x16x32xf32>
      tpu.vector_store %arg6[%c0_17, %c0_18, %c0_19], %23 {strides = array<i32>} : memref<1x16x32xf32, #tpu.memory_space<vmem>>, vector<1x16x32xf32>,
    } else {
    }
    return
  }
  func.func @transform_0(%arg0: i32, %arg1: i32) -> (i32, i32, i32) {
    %c0_i32 = arith.constant 0 : i32
    %c0_i32_0 = arith.constant 0 : i32
    return %arg0, %arg1, %c0_i32 : i32, i32, i32
  }
  func.func @transform_1(%arg0: i32, %arg1: i32) -> (i32, i32) {
    %c0_i32 = arith.constant 0 : i32
    %c0_i32_0 = arith.constant 0 : i32
    return %arg1, %c0_i32 : i32, i32
  }
  func.func @transform_2(%arg0: i32, %arg1: i32) -> (i32, i32) {
    %c0_i32 = arith.constant 0 : i32
    %c0_i32_0 = arith.constant 0 : i32
    %c0_i32_1 = arith.constant 0 : i32
    return %c0_i32, %c0_i32_0 : i32, i32
  }
  func.func @transform_3(%arg0: i32, %arg1: i32) -> (i32, i32) {
    %c0_i32 = arith.constant 0 : i32
    %c0_i32_0 = arith.constant 0 : i32
    %c0_i32_1 = arith.constant 0 : i32
    return %c0_i32, %c0_i32_0 : i32, i32
  }
  func.func @transform_4(%arg0: i32, %arg1: i32) -> (i32, i32, i32) {
    %c0_i32 = arith.constant 0 : i32
    %c0_i32_0 = arith.constant 0 : i32
    %c0_i32_1 = arith.constant 0 : i32
    return %arg0, %c0_i32, %c0_i32_0 : i32, i32, i32
  }
}

module attributes {stable_mosaic.version = 11 : i64} {
  func.func @_ffn_kernel(%arg0: i32, %arg1: i32, %arg2: memref<32x32xf32, #tpu.memory_space<vmem>>, %arg3: memref<32x64xbf16, #tpu.memory_space<vmem>>, %arg4: memref<1x64xf32, #tpu.memory_space<vmem>>, %arg5: memref<64x32xbf16, #tpu.memory_space<vmem>>, %arg6: memref<1x32xf32, #tpu.memory_space<vmem>>, %arg7: memref<1x32xf32, #tpu.memory_space<vmem>>, %arg8: memref<1x32xf32, #tpu.memory_space<vmem>>, %arg9: memref<32x32xf32, #tpu.memory_space<vmem>>, %arg10: memref<32x32xf32, #tpu.memory_space<vmem>>) attributes {dimension_semantics = [#tpu.dimension_semantics<parallel>, #tpu.dimension_semantics<arbitrary>], iteration_bounds = array<i64: 1, 1>, scalar_prefetch = 0 : i64, scratch_operands = 1 : i64, tpu.core_type = #tpu.core_type<tc>, window_params = [{transform_indices = @transform_0, window_bounds = array<i64: 32, 32>}, {transform_indices = @transform_1, window_bounds = array<i64: 32, 64>}, {transform_indices = @transform_2, window_bounds = array<i64: 1, 64>}, {transform_indices = @transform_3, window_bounds = array<i64: 64, 32>}, {pipeline_mode = #tpu.pipeline_mode<synchronous>, transform_indices = @transform_4, window_bounds = array<i64: 1, 32>}, {pipeline_mode = #tpu.pipeline_mode<synchronous>, transform_indices = @transform_5, window_bounds = array<i64: 1, 32>}, {pipeline_mode = #tpu.pipeline_mode<synchronous>, transform_indices = @transform_6, window_bounds = array<i64: 1, 32>}, {transform_indices = @transform_7, window_bounds = array<i64: 32, 32>}]} {
    %c0_i32 = arith.constant 0 : i32
    %0 = arith.cmpi eq, %arg1, %c0_i32 : i32
    %1 = arith.extui %0 : i1 to i32
    %c0_i32_0 = arith.constant 0 : i32
    %2 = arith.cmpi ne, %1, %c0_i32_0 : i32
    scf.if %2 {
      %cst_16 = arith.constant 0.000000e+00 : f32
      %21 = vector.broadcast %cst_16 : f32 to vector<32x32xf32>
      %c0_17 = arith.constant 0 : index
      %c0_18 = arith.constant 0 : index
      %22 = vector.load %arg10[%c0_17, %c0_18] : memref<32x32xf32, #tpu.memory_space<vmem>>, vector<32x32xf32>
      tpu.vector_store %arg10[%c0_17, %c0_18], %21 {strides = array<i32>} : memref<32x32xf32, #tpu.memory_space<vmem>>, vector<32x32xf32>,
    } else {
    }
    %c0 = arith.constant 0 : index
    %c0_1 = arith.constant 0 : index
    %3 = vector.load %arg2[%c0, %c0_1] : memref<32x32xf32, #tpu.memory_space<vmem>>, vector<32x32xf32>
    %4 = arith.truncf %3 : vector<32x32xf32> to vector<32x32xbf16>
    %c0_2 = arith.constant 0 : index
    %c0_3 = arith.constant 0 : index
    %5 = vector.load %arg3[%c0_2, %c0_3] : memref<32x64xbf16, #tpu.memory_space<vmem>>, vector<32x64xbf16>
    %cst = arith.constant dense<0.000000e+00> : vector<32x64xf32>
    %6 = tpu.matmul %4, %5, %cst {dimension_numbers = #tpu.dot_dimension_numbers<[1], [0], [0], [1], [0, 0, 1, 1], [], []>} : vector<32x32xbf16>, vector<32x64xbf16>, vector<32x64xf32> -> vector<32x64xf32>
    %c0_4 = arith.constant 0 : index
    %c0_5 = arith.constant 0 : index
    %7 = vector.load %arg4[%c0_4, %c0_5] : memref<1x64xf32, #tpu.memory_space<vmem>>, vector<1x64xf32>
    %8 = vector.broadcast %7 : vector<1x64xf32> to vector<32x64xf32>
    %9 = arith.addf %6, %8 : vector<32x64xf32>
    %cst_6 = arith.constant 0.000000e+00 : f32
    %10 = vector.broadcast %cst_6 : f32 to vector<32x64xf32>
    %11 = arith.maximumf %9, %10 : vector<32x64xf32>
    %c0_7 = arith.constant 0 : index
    %c0_8 = arith.constant 0 : index
    %12 = vector.load %arg10[%c0_7, %c0_8] : memref<32x32xf32, #tpu.memory_space<vmem>>, vector<32x32xf32>
    %13 = arith.truncf %11 : vector<32x64xf32> to vector<32x64xbf16>
    %c0_9 = arith.constant 0 : index
    %c0_10 = arith.constant 0 : index
    %14 = vector.load %arg5[%c0_9, %c0_10] : memref<64x32xbf16, #tpu.memory_space<vmem>>, vector<64x32xbf16>
    %cst_11 = arith.constant dense<0.000000e+00> : vector<32x32xf32>
    %15 = tpu.matmul %13, %14, %cst_11 {dimension_numbers = #tpu.dot_dimension_numbers<[1], [0], [0], [1], [0, 0, 1, 1], [], []>} : vector<32x64xbf16>, vector<64x32xbf16>, vector<32x32xf32> -> vector<32x32xf32>
    %16 = arith.addf %12, %15 : vector<32x32xf32>
    %c0_12 = arith.constant 0 : index
    %c0_13 = arith.constant 0 : index
    %17 = vector.load %arg10[%c0_12, %c0_13] : memref<32x32xf32, #tpu.memory_space<vmem>>, vector<32x32xf32>
    tpu.vector_store %arg10[%c0_12, %c0_13], %16 {strides = array<i32>} : memref<32x32xf32, #tpu.memory_space<vmem>>, vector<32x32xf32>,
    %c0_i32_14 = arith.constant 0 : i32
    %18 = arith.cmpi eq, %arg1, %c0_i32_14 : i32
    %19 = arith.extui %18 : i1 to i32
    %c0_i32_15 = arith.constant 0 : i32
    %20 = arith.cmpi ne, %19, %c0_i32_15 : i32
    scf.if %20 {
      %c0_16 = arith.constant 0 : index
      %c0_17 = arith.constant 0 : index
      %21 = vector.load %arg10[%c0_16, %c0_17] : memref<32x32xf32, #tpu.memory_space<vmem>>, vector<32x32xf32>
      %c0_18 = arith.constant 0 : index
      %c0_19 = arith.constant 0 : index
      %22 = vector.load %arg6[%c0_18, %c0_19] : memref<1x32xf32, #tpu.memory_space<vmem>>, vector<1x32xf32>
      %23 = vector.broadcast %22 : vector<1x32xf32> to vector<32x32xf32>
      %24 = arith.addf %21, %23 : vector<32x32xf32>
      %25 = arith.addf %24, %3 : vector<32x32xf32>
      %cst_20 = arith.constant dense<0.000000e+00> : vector<32xf32>
      %26 = vector.multi_reduction <add>, %25, %cst_20 [1] : vector<32x32xf32> to vector<32xf32>
      %27 = vector.shape_cast %26 : vector<32xf32> to vector<32x1xf32>
      %cst_21 = arith.constant 3.200000e+01 : f32
      %28 = vector.broadcast %cst_21 : f32 to vector<32x1xf32>
      %29 = arith.divf %27, %28 : vector<32x1xf32>
      %30 = vector.broadcast %29 : vector<32x1xf32> to vector<32x32xf32>
      %31 = arith.subf %25, %30 : vector<32x32xf32>
      %32 = arith.mulf %31, %31 : vector<32x32xf32>
      %cst_22 = arith.constant dense<0.000000e+00> : vector<32xf32>
      %33 = vector.multi_reduction <add>, %32, %cst_22 [1] : vector<32x32xf32> to vector<32xf32>
      %34 = vector.shape_cast %33 : vector<32xf32> to vector<32x1xf32>
      %cst_23 = arith.constant 3.200000e+01 : f32
      %35 = vector.broadcast %cst_23 : f32 to vector<32x1xf32>
      %36 = arith.divf %34, %35 : vector<32x1xf32>
      %37 = vector.broadcast %29 : vector<32x1xf32> to vector<32x32xf32>
      %38 = arith.subf %25, %37 : vector<32x32xf32>
      %cst_24 = arith.constant 9.99999974E-6 : f32
      %39 = vector.broadcast %cst_24 : f32 to vector<32x1xf32>
      %40 = arith.addf %36, %39 : vector<32x1xf32>
      %41 = math.rsqrt %40 : vector<32x1xf32>
      %42 = vector.broadcast %41 : vector<32x1xf32> to vector<32x32xf32>
      %43 = arith.mulf %38, %42 : vector<32x32xf32>
      %c0_25 = arith.constant 0 : index
      %c0_26 = arith.constant 0 : index
      %44 = vector.load %arg7[%c0_25, %c0_26] : memref<1x32xf32, #tpu.memory_space<vmem>>, vector<1x32xf32>
      %45 = vector.broadcast %44 : vector<1x32xf32> to vector<32x32xf32>
      %46 = arith.mulf %43, %45 : vector<32x32xf32>
      %c0_27 = arith.constant 0 : index
      %c0_28 = arith.constant 0 : index
      %47 = vector.load %arg8[%c0_27, %c0_28] : memref<1x32xf32, #tpu.memory_space<vmem>>, vector<1x32xf32>
      %48 = vector.broadcast %47 : vector<1x32xf32> to vector<32x32xf32>
      %49 = arith.addf %46, %48 : vector<32x32xf32>
      %c0_29 = arith.constant 0 : index
      %c0_30 = arith.constant 0 : index
      %50 = vector.load %arg9[%c0_29, %c0_30] : memref<32x32xf32, #tpu.memory_space<vmem>>, vector<32x32xf32>
      tpu.vector_store %arg9[%c0_29, %c0_30], %49 {strides = array<i32>} : memref<32x32xf32, #tpu.memory_space<vmem>>, vector<32x32xf32>,
    } else {
    }
    return
  }
  func.func @transform_0(%arg0: i32, %arg1: i32) -> (i32, i32) {
    %c0_i32 = arith.constant 0 : i32
    %c0_i32_0 = arith.constant 0 : i32
    return %arg0, %c0_i32 : i32, i32
  }
  func.func @transform_1(%arg0: i32, %arg1: i32) -> (i32, i32) {
    %c0_i32 = arith.constant 0 : i32
    %c0_i32_0 = arith.constant 0 : i32
    return %c0_i32, %arg1 : i32, i32
  }
  func.func @transform_2(%arg0: i32, %arg1: i32) -> (i32, i32) {
    %c0_i32 = arith.constant 0 : i32
    %c0_i32_0 = arith.constant 0 : i32
    return %c0_i32, %arg1 : i32, i32
  }
  func.func @transform_3(%arg0: i32, %arg1: i32) -> (i32, i32) {
    %c0_i32 = arith.constant 0 : i32
    %c0_i32_0 = arith.constant 0 : i32
    return %arg1, %c0_i32 : i32, i32
  }
  func.func @transform_4(%arg0: i32, %arg1: i32) -> (i32, i32) {
    %c0_i32 = arith.constant 0 : i32
    %c0_i32_0 = arith.constant 0 : i32
    %c0_i32_1 = arith.constant 0 : i32
    return %c0_i32, %c0_i32_0 : i32, i32
  }
  func.func @transform_5(%arg0: i32, %arg1: i32) -> (i32, i32) {
    %c0_i32 = arith.constant 0 : i32
    %c0_i32_0 = arith.constant 0 : i32
    %c0_i32_1 = arith.constant 0 : i32
    return %c0_i32, %c0_i32_0 : i32, i32
  }
  func.func @transform_6(%arg0: i32, %arg1: i32) -> (i32, i32) {
    %c0_i32 = arith.constant 0 : i32
    %c0_i32_0 = arith.constant 0 : i32
    %c0_i32_1 = arith.constant 0 : i32
    return %c0_i32, %c0_i32_0 : i32, i32
  }
  func.func @transform_7(%arg0: i32, %arg1: i32) -> (i32, i32) {
    %c0_i32 = arith.constant 0 : i32
    %c0_i32_0 = arith.constant 0 : i32
    return %arg0, %c0_i32 : i32, i32
  }
}

module attributes {stable_mosaic.version = 11 : i64} {
  func.func @_self_block_kernel(%arg0: i32, %arg1: memref<1x8x32xf32, #tpu.memory_space<vmem>>, %arg2: memref<32x96xbf16, #tpu.memory_space<vmem>>, %arg3: memref<1x96xf32, #tpu.memory_space<vmem>>, %arg4: memref<32x32xbf16, #tpu.memory_space<vmem>>, %arg5: memref<1x32xf32, #tpu.memory_space<vmem>>, %arg6: memref<1x32xf32, #tpu.memory_space<vmem>>, %arg7: memref<1x32xf32, #tpu.memory_space<vmem>>, %arg8: memref<1x8x32xf32, #tpu.memory_space<vmem>>, %arg9: memref<8x32xf32, #tpu.memory_space<vmem>>) attributes {dimension_semantics = [#tpu.dimension_semantics<parallel>], iteration_bounds = array<i64: 2>, scalar_prefetch = 0 : i64, scratch_operands = 1 : i64, tpu.core_type = #tpu.core_type<tc>, window_params = [{transform_indices = @transform_0, window_bounds = array<i64: 1, 8, 32>}, {pipeline_mode = #tpu.pipeline_mode<synchronous>, transform_indices = @transform_1, window_bounds = array<i64: 32, 96>}, {pipeline_mode = #tpu.pipeline_mode<synchronous>, transform_indices = @transform_2, window_bounds = array<i64: 1, 96>}, {pipeline_mode = #tpu.pipeline_mode<synchronous>, transform_indices = @transform_3, window_bounds = array<i64: 32, 32>}, {pipeline_mode = #tpu.pipeline_mode<synchronous>, transform_indices = @transform_4, window_bounds = array<i64: 1, 32>}, {pipeline_mode = #tpu.pipeline_mode<synchronous>, transform_indices = @transform_5, window_bounds = array<i64: 1, 32>}, {pipeline_mode = #tpu.pipeline_mode<synchronous>, transform_indices = @transform_6, window_bounds = array<i64: 1, 32>}, {transform_indices = @transform_7, window_bounds = array<i64: 1, 8, 32>}]} {
    %c0 = arith.constant 0 : index
    %c0_0 = arith.constant 0 : index
    %c0_1 = arith.constant 0 : index
    %0 = vector.load %arg1[%c0, %c0_0, %c0_1] : memref<1x8x32xf32, #tpu.memory_space<vmem>>, vector<1x8x32xf32>
    %1 = vector.shape_cast %0 : vector<1x8x32xf32> to vector<8x32xf32>
    %2 = arith.truncf %1 : vector<8x32xf32> to vector<8x32xbf16>
    %c0_2 = arith.constant 0 : index
    %c0_3 = arith.constant 0 : index
    %3 = vector.load %arg2[%c0_2, %c0_3] : memref<32x96xbf16, #tpu.memory_space<vmem>>, vector<32x96xbf16>
    %cst = arith.constant dense<0.000000e+00> : vector<8x96xf32>
    %4 = tpu.matmul %2, %3, %cst {dimension_numbers = #tpu.dot_dimension_numbers<[1], [0], [0], [1], [0, 0, 1, 1], [], []>} : vector<8x32xbf16>, vector<32x96xbf16>, vector<8x96xf32> -> vector<8x96xf32>
    %c0_4 = arith.constant 0 : index
    %c0_5 = arith.constant 0 : index
    %5 = vector.load %arg3[%c0_4, %c0_5] : memref<1x96xf32, #tpu.memory_space<vmem>>, vector<1x96xf32>
    %6 = vector.broadcast %5 : vector<1x96xf32> to vector<8x96xf32>
    %7 = arith.addf %4, %6 : vector<8x96xf32>
    %8 = vector.extract_strided_slice %7 {offsets = [0, 0], sizes = [8, 32], strides = [1, 1]} : vector<8x96xf32> to vector<8x32xf32>
    %9 = vector.extract_strided_slice %7 {offsets = [0, 32], sizes = [8, 32], strides = [1, 1]} : vector<8x96xf32> to vector<8x32xf32>
    %10 = vector.extract_strided_slice %7 {offsets = [0, 64], sizes = [8, 32], strides = [1, 1]} : vector<8x96xf32> to vector<8x32xf32>
    %11 = tpu.iota {dimensions = array<i32: 0>} : vector<8x8xi32>
    %12 = tpu.iota {dimensions = array<i32: 1>} : vector<8x8xi32>
    %13 = arith.cmpi sle, %12, %11 : vector<8x8xi32>
    %cst_6 = arith.constant 0.000000e+00 : f32
    %cst_7 = arith.constant 0xFF800000 : f32
    %14 = vector.broadcast %cst_6 : f32 to vector<8x8xf32>
    %15 = vector.broadcast %cst_7 : f32 to vector<8x8xf32>
    %16 = arith.select %13, %14, %15 : vector<8x8xi1>, vector<8x8xf32>
    %17 = vector.extract_strided_slice %8 {offsets = [0, 0], sizes = [8, 8], strides = [1, 1]} : vector<8x32xf32> to vector<8x8xf32>
    %18 = arith.truncf %17 : vector<8x8xf32> to vector<8x8xbf16>
    %19 = vector.extract_strided_slice %9 {offsets = [0, 0], sizes = [8, 8], strides = [1, 1]} : vector<8x32xf32> to vector<8x8xf32>
    %20 = arith.truncf %19 : vector<8x8xf32> to vector<8x8xbf16>
    %21 = vector.extract_strided_slice %10 {offsets = [0, 0], sizes = [8, 8], strides = [1, 1]} : vector<8x32xf32> to vector<8x8xf32>
    %22 = arith.truncf %21 : vector<8x8xf32> to vector<8x8xbf16>
    %cst_8 = arith.constant dense<0.000000e+00> : vector<8x8xf32>
    %23 = tpu.matmul %18, %20, %cst_8 {dimension_numbers = #tpu.dot_dimension_numbers<[1], [1], [0], [0], [0, 0, 1, 0], [], []>} : vector<8x8xbf16>, vector<8x8xbf16>, vector<8x8xf32> -> vector<8x8xf32>
    %cst_9 = arith.constant 0.353553385 : f32
    %24 = vector.broadcast %cst_9 : f32 to vector<8x8xf32>
    %25 = arith.mulf %23, %24 : vector<8x8xf32>
    %26 = arith.addf %25, %16 : vector<8x8xf32>
    %cst_10 = arith.constant dense<0xFF800000> : vector<8xf32>
    %27 = vector.multi_reduction <maximumf>, %26, %cst_10 [1] : vector<8x8xf32> to vector<8xf32>
    %28 = vector.shape_cast %27 : vector<8xf32> to vector<8x1xf32>
    %29 = vector.broadcast %28 : vector<8x1xf32> to vector<8x8xf32>
    %30 = arith.subf %26, %29 : vector<8x8xf32>
    %31 = math.exp %30 : vector<8x8xf32>
    %cst_11 = arith.constant dense<0.000000e+00> : vector<8xf32>
    %32 = vector.multi_reduction <add>, %31, %cst_11 [1] : vector<8x8xf32> to vector<8xf32>
    %33 = vector.shape_cast %32 : vector<8xf32> to vector<8x1xf32>
    %34 = tpu.reciprocal %33 {approx = true} : vector<8x1xf32> -> vector<8x1xf32>
    %35 = vector.broadcast %34 : vector<8x1xf32> to vector<8x8xf32>
    %36 = arith.mulf %31, %35 : vector<8x8xf32>
    %37 = arith.truncf %36 : vector<8x8xf32> to vector<8x8xbf16>
    %cst_12 = arith.constant dense<0.000000e+00> : vector<8x8xf32>
    %38 = tpu.matmul %37, %22, %cst_12 {dimension_numbers = #tpu.dot_dimension_numbers<[1], [0], [0], [1], [0, 0, 1, 1], [], []>} : vector<8x8xbf16>, vector<8x8xbf16>, vector<8x8xf32> -> vector<8x8xf32>
    %c0_13 = arith.constant 0 : index
    %c0_14 = arith.constant 0 : index
    %39 = vector.load %arg9[%c0_13, %c0_14] : memref<8x32xf32, #tpu.memory_space<vmem>>, vector<8x8xf32>
    tpu.vector_store %arg9[%c0_13, %c0_14], %38 {strides = array<i32>} : memref<8x32xf32, #tpu.memory_space<vmem>>, vector<8x8xf32>,
    %40 = vector.extract_strided_slice %8 {offsets = [0, 8], sizes = [8, 8], strides = [1, 1]} : vector<8x32xf32> to vector<8x8xf32>
    %41 = arith.truncf %40 : vector<8x8xf32> to vector<8x8xbf16>
    %42 = vector.extract_strided_slice %9 {offsets = [0, 8], sizes = [8, 8], strides = [1, 1]} : vector<8x32xf32> to vector<8x8xf32>
    %43 = arith.truncf %42 : vector<8x8xf32> to vector<8x8xbf16>
    %44 = vector.extract_strided_slice %10 {offsets = [0, 8], sizes = [8, 8], strides = [1, 1]} : vector<8x32xf32> to vector<8x8xf32>
    %45 = arith.truncf %44 : vector<8x8xf32> to vector<8x8xbf16>
    %cst_15 = arith.constant dense<0.000000e+00> : vector<8x8xf32>
    %46 = tpu.matmul %41, %43, %cst_15 {dimension_numbers = #tpu.dot_dimension_numbers<[1], [1], [0], [0], [0, 0, 1, 0], [], []>} : vector<8x8xbf16>, vector<8x8xbf16>, vector<8x8xf32> -> vector<8x8xf32>
    %cst_16 = arith.constant 0.353553385 : f32
    %47 = vector.broadcast %cst_16 : f32 to vector<8x8xf32>
    %48 = arith.mulf %46, %47 : vector<8x8xf32>
    %49 = arith.addf %48, %16 : vector<8x8xf32>
    %cst_17 = arith.constant dense<0xFF800000> : vector<8xf32>
    %50 = vector.multi_reduction <maximumf>, %49, %cst_17 [1] : vector<8x8xf32> to vector<8xf32>
    %51 = vector.shape_cast %50 : vector<8xf32> to vector<8x1xf32>
    %52 = vector.broadcast %51 : vector<8x1xf32> to vector<8x8xf32>
    %53 = arith.subf %49, %52 : vector<8x8xf32>
    %54 = math.exp %53 : vector<8x8xf32>
    %cst_18 = arith.constant dense<0.000000e+00> : vector<8xf32>
    %55 = vector.multi_reduction <add>, %54, %cst_18 [1] : vector<8x8xf32> to vector<8xf32>
    %56 = vector.shape_cast %55 : vector<8xf32> to vector<8x1xf32>
    %57 = tpu.reciprocal %56 {approx = true} : vector<8x1xf32> -> vector<8x1xf32>
    %58 = vector.broadcast %57 : vector<8x1xf32> to vector<8x8xf32>
    %59 = arith.mulf %54, %58 : vector<8x8xf32>
    %60 = arith.truncf %59 : vector<8x8xf32> to vector<8x8xbf16>
    %cst_19 = arith.constant dense<0.000000e+00> : vector<8x8xf32>
    %61 = tpu.matmul %60, %45, %cst_19 {dimension_numbers = #tpu.dot_dimension_numbers<[1], [0], [0], [1], [0, 0, 1, 1], [], []>} : vector<8x8xbf16>, vector<8x8xbf16>, vector<8x8xf32> -> vector<8x8xf32>
    %c0_20 = arith.constant 0 : index
    %c8 = arith.constant 8 : index
    %62 = vector.load %arg9[%c0_20, %c8] : memref<8x32xf32, #tpu.memory_space<vmem>>, vector<8x8xf32>
    tpu.vector_store %arg9[%c0_20, %c8], %61 {strides = array<i32>} : memref<8x32xf32, #tpu.memory_space<vmem>>, vector<8x8xf32>,
    %63 = vector.extract_strided_slice %8 {offsets = [0, 16], sizes = [8, 8], strides = [1, 1]} : vector<8x32xf32> to vector<8x8xf32>
    %64 = arith.truncf %63 : vector<8x8xf32> to vector<8x8xbf16>
    %65 = vector.extract_strided_slice %9 {offsets = [0, 16], sizes = [8, 8], strides = [1, 1]} : vector<8x32xf32> to vector<8x8xf32>
    %66 = arith.truncf %65 : vector<8x8xf32> to vector<8x8xbf16>
    %67 = vector.extract_strided_slice %10 {offsets = [0, 16], sizes = [8, 8], strides = [1, 1]} : vector<8x32xf32> to vector<8x8xf32>
    %68 = arith.truncf %67 : vector<8x8xf32> to vector<8x8xbf16>
    %cst_21 = arith.constant dense<0.000000e+00> : vector<8x8xf32>
    %69 = tpu.matmul %64, %66, %cst_21 {dimension_numbers = #tpu.dot_dimension_numbers<[1], [1], [0], [0], [0, 0, 1, 0], [], []>} : vector<8x8xbf16>, vector<8x8xbf16>, vector<8x8xf32> -> vector<8x8xf32>
    %cst_22 = arith.constant 0.353553385 : f32
    %70 = vector.broadcast %cst_22 : f32 to vector<8x8xf32>
    %71 = arith.mulf %69, %70 : vector<8x8xf32>
    %72 = arith.addf %71, %16 : vector<8x8xf32>
    %cst_23 = arith.constant dense<0xFF800000> : vector<8xf32>
    %73 = vector.multi_reduction <maximumf>, %72, %cst_23 [1] : vector<8x8xf32> to vector<8xf32>
    %74 = vector.shape_cast %73 : vector<8xf32> to vector<8x1xf32>
    %75 = vector.broadcast %74 : vector<8x1xf32> to vector<8x8xf32>
    %76 = arith.subf %72, %75 : vector<8x8xf32>
    %77 = math.exp %76 : vector<8x8xf32>
    %cst_24 = arith.constant dense<0.000000e+00> : vector<8xf32>
    %78 = vector.multi_reduction <add>, %77, %cst_24 [1] : vector<8x8xf32> to vector<8xf32>
    %79 = vector.shape_cast %78 : vector<8xf32> to vector<8x1xf32>
    %80 = tpu.reciprocal %79 {approx = true} : vector<8x1xf32> -> vector<8x1xf32>
    %81 = vector.broadcast %80 : vector<8x1xf32> to vector<8x8xf32>
    %82 = arith.mulf %77, %81 : vector<8x8xf32>
    %83 = arith.truncf %82 : vector<8x8xf32> to vector<8x8xbf16>
    %cst_25 = arith.constant dense<0.000000e+00> : vector<8x8xf32>
    %84 = tpu.matmul %83, %68, %cst_25 {dimension_numbers = #tpu.dot_dimension_numbers<[1], [0], [0], [1], [0, 0, 1, 1], [], []>} : vector<8x8xbf16>, vector<8x8xbf16>, vector<8x8xf32> -> vector<8x8xf32>
    %c0_26 = arith.constant 0 : index
    %c16 = arith.constant 16 : index
    %85 = vector.load %arg9[%c0_26, %c16] : memref<8x32xf32, #tpu.memory_space<vmem>>, vector<8x8xf32>
    tpu.vector_store %arg9[%c0_26, %c16], %84 {strides = array<i32>} : memref<8x32xf32, #tpu.memory_space<vmem>>, vector<8x8xf32>,
    %86 = vector.extract_strided_slice %8 {offsets = [0, 24], sizes = [8, 8], strides = [1, 1]} : vector<8x32xf32> to vector<8x8xf32>
    %87 = arith.truncf %86 : vector<8x8xf32> to vector<8x8xbf16>
    %88 = vector.extract_strided_slice %9 {offsets = [0, 24], sizes = [8, 8], strides = [1, 1]} : vector<8x32xf32> to vector<8x8xf32>
    %89 = arith.truncf %88 : vector<8x8xf32> to vector<8x8xbf16>
    %90 = vector.extract_strided_slice %10 {offsets = [0, 24], sizes = [8, 8], strides = [1, 1]} : vector<8x32xf32> to vector<8x8xf32>
    %91 = arith.truncf %90 : vector<8x8xf32> to vector<8x8xbf16>
    %cst_27 = arith.constant dense<0.000000e+00> : vector<8x8xf32>
    %92 = tpu.matmul %87, %89, %cst_27 {dimension_numbers = #tpu.dot_dimension_numbers<[1], [1], [0], [0], [0, 0, 1, 0], [], []>} : vector<8x8xbf16>, vector<8x8xbf16>, vector<8x8xf32> -> vector<8x8xf32>
    %cst_28 = arith.constant 0.353553385 : f32
    %93 = vector.broadcast %cst_28 : f32 to vector<8x8xf32>
    %94 = arith.mulf %92, %93 : vector<8x8xf32>
    %95 = arith.addf %94, %16 : vector<8x8xf32>
    %cst_29 = arith.constant dense<0xFF800000> : vector<8xf32>
    %96 = vector.multi_reduction <maximumf>, %95, %cst_29 [1] : vector<8x8xf32> to vector<8xf32>
    %97 = vector.shape_cast %96 : vector<8xf32> to vector<8x1xf32>
    %98 = vector.broadcast %97 : vector<8x1xf32> to vector<8x8xf32>
    %99 = arith.subf %95, %98 : vector<8x8xf32>
    %100 = math.exp %99 : vector<8x8xf32>
    %cst_30 = arith.constant dense<0.000000e+00> : vector<8xf32>
    %101 = vector.multi_reduction <add>, %100, %cst_30 [1] : vector<8x8xf32> to vector<8xf32>
    %102 = vector.shape_cast %101 : vector<8xf32> to vector<8x1xf32>
    %103 = tpu.reciprocal %102 {approx = true} : vector<8x1xf32> -> vector<8x1xf32>
    %104 = vector.broadcast %103 : vector<8x1xf32> to vector<8x8xf32>
    %105 = arith.mulf %100, %104 : vector<8x8xf32>
    %106 = arith.truncf %105 : vector<8x8xf32> to vector<8x8xbf16>
    %cst_31 = arith.constant dense<0.000000e+00> : vector<8x8xf32>
    %107 = tpu.matmul %106, %91, %cst_31 {dimension_numbers = #tpu.dot_dimension_numbers<[1], [0], [0], [1], [0, 0, 1, 1], [], []>} : vector<8x8xbf16>, vector<8x8xbf16>, vector<8x8xf32> -> vector<8x8xf32>
    %c0_32 = arith.constant 0 : index
    %c24 = arith.constant 24 : index
    %108 = vector.load %arg9[%c0_32, %c24] : memref<8x32xf32, #tpu.memory_space<vmem>>, vector<8x8xf32>
    tpu.vector_store %arg9[%c0_32, %c24], %107 {strides = array<i32>} : memref<8x32xf32, #tpu.memory_space<vmem>>, vector<8x8xf32>,
    %c0_33 = arith.constant 0 : index
    %c0_34 = arith.constant 0 : index
    %109 = vector.load %arg9[%c0_33, %c0_34] : memref<8x32xf32, #tpu.memory_space<vmem>>, vector<8x32xf32>
    %110 = arith.truncf %109 : vector<8x32xf32> to vector<8x32xbf16>
    %c0_35 = arith.constant 0 : index
    %c0_36 = arith.constant 0 : index
    %111 = vector.load %arg4[%c0_35, %c0_36] : memref<32x32xbf16, #tpu.memory_space<vmem>>, vector<32x32xbf16>
    %cst_37 = arith.constant dense<0.000000e+00> : vector<8x32xf32>
    %112 = tpu.matmul %110, %111, %cst_37 {dimension_numbers = #tpu.dot_dimension_numbers<[1], [0], [0], [1], [0, 0, 1, 1], [], []>} : vector<8x32xbf16>, vector<32x32xbf16>, vector<8x32xf32> -> vector<8x32xf32>
    %c0_38 = arith.constant 0 : index
    %c0_39 = arith.constant 0 : index
    %113 = vector.load %arg5[%c0_38, %c0_39] : memref<1x32xf32, #tpu.memory_space<vmem>>, vector<1x32xf32>
    %114 = vector.broadcast %113 : vector<1x32xf32> to vector<8x32xf32>
    %115 = arith.addf %112, %114 : vector<8x32xf32>
    %116 = arith.addf %115, %1 : vector<8x32xf32>
    %cst_40 = arith.constant dense<0.000000e+00> : vector<8xf32>
    %117 = vector.multi_reduction <add>, %116, %cst_40 [1] : vector<8x32xf32> to vector<8xf32>
    %118 = vector.shape_cast %117 : vector<8xf32> to vector<8x1xf32>
    %cst_41 = arith.constant 3.200000e+01 : f32
    %119 = vector.broadcast %cst_41 : f32 to vector<8x1xf32>
    %120 = arith.divf %118, %119 : vector<8x1xf32>
    %121 = vector.broadcast %120 : vector<8x1xf32> to vector<8x32xf32>
    %122 = arith.subf %116, %121 : vector<8x32xf32>
    %123 = arith.mulf %122, %122 : vector<8x32xf32>
    %cst_42 = arith.constant dense<0.000000e+00> : vector<8xf32>
    %124 = vector.multi_reduction <add>, %123, %cst_42 [1] : vector<8x32xf32> to vector<8xf32>
    %125 = vector.shape_cast %124 : vector<8xf32> to vector<8x1xf32>
    %cst_43 = arith.constant 3.200000e+01 : f32
    %126 = vector.broadcast %cst_43 : f32 to vector<8x1xf32>
    %127 = arith.divf %125, %126 : vector<8x1xf32>
    %128 = vector.broadcast %120 : vector<8x1xf32> to vector<8x32xf32>
    %129 = arith.subf %116, %128 : vector<8x32xf32>
    %cst_44 = arith.constant 9.99999974E-6 : f32
    %130 = vector.broadcast %cst_44 : f32 to vector<8x1xf32>
    %131 = arith.addf %127, %130 : vector<8x1xf32>
    %132 = math.rsqrt %131 : vector<8x1xf32>
    %133 = vector.broadcast %132 : vector<8x1xf32> to vector<8x32xf32>
    %134 = arith.mulf %129, %133 : vector<8x32xf32>
    %c0_45 = arith.constant 0 : index
    %c0_46 = arith.constant 0 : index
    %135 = vector.load %arg6[%c0_45, %c0_46] : memref<1x32xf32, #tpu.memory_space<vmem>>, vector<1x32xf32>
    %136 = vector.broadcast %135 : vector<1x32xf32> to vector<8x32xf32>
    %137 = arith.mulf %134, %136 : vector<8x32xf32>
    %c0_47 = arith.constant 0 : index
    %c0_48 = arith.constant 0 : index
    %138 = vector.load %arg7[%c0_47, %c0_48] : memref<1x32xf32, #tpu.memory_space<vmem>>, vector<1x32xf32>
    %139 = vector.broadcast %138 : vector<1x32xf32> to vector<8x32xf32>
    %140 = arith.addf %137, %139 : vector<8x32xf32>
    %c0_49 = arith.constant 0 : index
    %c0_50 = arith.constant 0 : index
    %c0_51 = arith.constant 0 : index
    %141 = vector.load %arg8[%c0_49, %c0_50, %c0_51] : memref<1x8x32xf32, #tpu.memory_space<vmem>>, vector<1x8x32xf32>
    %142 = vector.shape_cast %141 : vector<1x8x32xf32> to vector<8x32xf32>
    %143 = vector.shape_cast %140 : vector<8x32xf32> to vector<1x8x32xf32>
    tpu.vector_store %arg8[%c0_49, %c0_50, %c0_51], %143 {strides = array<i32>} : memref<1x8x32xf32, #tpu.memory_space<vmem>>, vector<1x8x32xf32>,
    return
  }
  func.func @transform_0(%arg0: i32) -> (i32, i32, i32) {
    %c0_i32 = arith.constant 0 : i32
    %c0_i32_0 = arith.constant 0 : i32
    %c0_i32_1 = arith.constant 0 : i32
    return %arg0, %c0_i32, %c0_i32_0 : i32, i32, i32
  }
  func.func @transform_1(%arg0: i32) -> (i32, i32) {
    %c0_i32 = arith.constant 0 : i32
    %c0_i32_0 = arith.constant 0 : i32
    %c0_i32_1 = arith.constant 0 : i32
    return %c0_i32, %c0_i32_0 : i32, i32
  }
  func.func @transform_2(%arg0: i32) -> (i32, i32) {
    %c0_i32 = arith.constant 0 : i32
    %c0_i32_0 = arith.constant 0 : i32
    %c0_i32_1 = arith.constant 0 : i32
    return %c0_i32, %c0_i32_0 : i32, i32
  }
  func.func @transform_3(%arg0: i32) -> (i32, i32) {
    %c0_i32 = arith.constant 0 : i32
    %c0_i32_0 = arith.constant 0 : i32
    %c0_i32_1 = arith.constant 0 : i32
    return %c0_i32, %c0_i32_0 : i32, i32
  }
  func.func @transform_4(%arg0: i32) -> (i32, i32) {
    %c0_i32 = arith.constant 0 : i32
    %c0_i32_0 = arith.constant 0 : i32
    %c0_i32_1 = arith.constant 0 : i32
    return %c0_i32, %c0_i32_0 : i32, i32
  }
  func.func @transform_5(%arg0: i32) -> (i32, i32) {
    %c0_i32 = arith.constant 0 : i32
    %c0_i32_0 = arith.constant 0 : i32
    %c0_i32_1 = arith.constant 0 : i32
    return %c0_i32, %c0_i32_0 : i32, i32
  }
  func.func @transform_6(%arg0: i32) -> (i32, i32) {
    %c0_i32 = arith.constant 0 : i32
    %c0_i32_0 = arith.constant 0 : i32
    %c0_i32_1 = arith.constant 0 : i32
    return %c0_i32, %c0_i32_0 : i32, i32
  }
  func.func @transform_7(%arg0: i32) -> (i32, i32, i32) {
    %c0_i32 = arith.constant 0 : i32
    %c0_i32_0 = arith.constant 0 : i32
    %c0_i32_1 = arith.constant 0 : i32
    return %arg0, %c0_i32, %c0_i32_0 : i32, i32, i32
  }
}

module attributes {stable_mosaic.version = 11 : i64} {
  func.func @_cross_block_kernel(%arg0: i32, %arg1: memref<1x8x32xf32, #tpu.memory_space<vmem>>, %arg2: memref<1x16x32xf32, #tpu.memory_space<vmem>>, %arg3: memref<32x32xbf16, #tpu.memory_space<vmem>>, %arg4: memref<1x32xf32, #tpu.memory_space<vmem>>, %arg5: memref<32x64xbf16, #tpu.memory_space<vmem>>, %arg6: memref<1x64xf32, #tpu.memory_space<vmem>>, %arg7: memref<32x32xbf16, #tpu.memory_space<vmem>>, %arg8: memref<1x32xf32, #tpu.memory_space<vmem>>, %arg9: memref<1x32xf32, #tpu.memory_space<vmem>>, %arg10: memref<1x32xf32, #tpu.memory_space<vmem>>, %arg11: memref<1x8x32xf32, #tpu.memory_space<vmem>>, %arg12: memref<8x32xf32, #tpu.memory_space<vmem>>) attributes {dimension_semantics = [#tpu.dimension_semantics<parallel>], iteration_bounds = array<i64: 2>, scalar_prefetch = 0 : i64, scratch_operands = 1 : i64, tpu.core_type = #tpu.core_type<tc>, window_params = [{transform_indices = @transform_0, window_bounds = array<i64: 1, 8, 32>}, {transform_indices = @transform_1, window_bounds = array<i64: 1, 16, 32>}, {pipeline_mode = #tpu.pipeline_mode<synchronous>, transform_indices = @transform_2, window_bounds = array<i64: 32, 32>}, {pipeline_mode = #tpu.pipeline_mode<synchronous>, transform_indices = @transform_3, window_bounds = array<i64: 1, 32>}, {pipeline_mode = #tpu.pipeline_mode<synchronous>, transform_indices = @transform_4, window_bounds = array<i64: 32, 64>}, {pipeline_mode = #tpu.pipeline_mode<synchronous>, transform_indices = @transform_5, window_bounds = array<i64: 1, 64>}, {pipeline_mode = #tpu.pipeline_mode<synchronous>, transform_indices = @transform_6, window_bounds = array<i64: 32, 32>}, {pipeline_mode = #tpu.pipeline_mode<synchronous>, transform_indices = @transform_7, window_bounds = array<i64: 1, 32>}, {pipeline_mode = #tpu.pipeline_mode<synchronous>, transform_indices = @transform_8, window_bounds = array<i64: 1, 32>}, {pipeline_mode = #tpu.pipeline_mode<synchronous>, transform_indices = @transform_9, window_bounds = array<i64: 1, 32>}, {transform_indices = @transform_10, window_bounds = array<i64: 1, 8, 32>}]} {
    %c0 = arith.constant 0 : index
    %c0_0 = arith.constant 0 : index
    %c0_1 = arith.constant 0 : index
    %0 = vector.load %arg1[%c0, %c0_0, %c0_1] : memref<1x8x32xf32, #tpu.memory_space<vmem>>, vector<1x8x32xf32>
    %1 = vector.shape_cast %0 : vector<1x8x32xf32> to vector<8x32xf32>
    %c0_2 = arith.constant 0 : index
    %c0_3 = arith.constant 0 : index
    %c0_4 = arith.constant 0 : index
    %2 = vector.load %arg2[%c0_2, %c0_3, %c0_4] : memref<1x16x32xf32, #tpu.memory_space<vmem>>, vector<1x16x32xf32>
    %3 = vector.shape_cast %2 : vector<1x16x32xf32> to vector<16x32xf32>
    %4 = arith.truncf %1 : vector<8x32xf32> to vector<8x32xbf16>
    %c0_5 = arith.constant 0 : index
    %c0_6 = arith.constant 0 : index
    %5 = vector.load %arg3[%c0_5, %c0_6] : memref<32x32xbf16, #tpu.memory_space<vmem>>, vector<32x32xbf16>
    %cst = arith.constant dense<0.000000e+00> : vector<8x32xf32>
    %6 = tpu.matmul %4, %5, %cst {dimension_numbers = #tpu.dot_dimension_numbers<[1], [0], [0], [1], [0, 0, 1, 1], [], []>} : vector<8x32xbf16>, vector<32x32xbf16>, vector<8x32xf32> -> vector<8x32xf32>
    %c0_7 = arith.constant 0 : index
    %c0_8 = arith.constant 0 : index
    %7 = vector.load %arg4[%c0_7, %c0_8] : memref<1x32xf32, #tpu.memory_space<vmem>>, vector<1x32xf32>
    %8 = vector.broadcast %7 : vector<1x32xf32> to vector<8x32xf32>
    %9 = arith.addf %6, %8 : vector<8x32xf32>
    %10 = arith.truncf %3 : vector<16x32xf32> to vector<16x32xbf16>
    %c0_9 = arith.constant 0 : index
    %c0_10 = arith.constant 0 : index
    %11 = vector.load %arg5[%c0_9, %c0_10] : memref<32x64xbf16, #tpu.memory_space<vmem>>, vector<32x64xbf16>
    %cst_11 = arith.constant dense<0.000000e+00> : vector<16x64xf32>
    %12 = tpu.matmul %10, %11, %cst_11 {dimension_numbers = #tpu.dot_dimension_numbers<[1], [0], [0], [1], [0, 0, 1, 1], [], []>} : vector<16x32xbf16>, vector<32x64xbf16>, vector<16x64xf32> -> vector<16x64xf32>
    %c0_12 = arith.constant 0 : index
    %c0_13 = arith.constant 0 : index
    %13 = vector.load %arg6[%c0_12, %c0_13] : memref<1x64xf32, #tpu.memory_space<vmem>>, vector<1x64xf32>
    %14 = vector.broadcast %13 : vector<1x64xf32> to vector<16x64xf32>
    %15 = arith.addf %12, %14 : vector<16x64xf32>
    %16 = vector.extract_strided_slice %15 {offsets = [0, 0], sizes = [16, 32], strides = [1, 1]} : vector<16x64xf32> to vector<16x32xf32>
    %17 = vector.extract_strided_slice %15 {offsets = [0, 32], sizes = [16, 32], strides = [1, 1]} : vector<16x64xf32> to vector<16x32xf32>
    %18 = vector.extract_strided_slice %9 {offsets = [0, 0], sizes = [8, 8], strides = [1, 1]} : vector<8x32xf32> to vector<8x8xf32>
    %19 = arith.truncf %18 : vector<8x8xf32> to vector<8x8xbf16>
    %20 = vector.extract_strided_slice %16 {offsets = [0, 0], sizes = [16, 8], strides = [1, 1]} : vector<16x32xf32> to vector<16x8xf32>
    %21 = arith.truncf %20 : vector<16x8xf32> to vector<16x8xbf16>
    %22 = vector.extract_strided_slice %17 {offsets = [0, 0], sizes = [16, 8], strides = [1, 1]} : vector<16x32xf32> to vector<16x8xf32>
    %23 = arith.truncf %22 : vector<16x8xf32> to vector<16x8xbf16>
    %cst_14 = arith.constant dense<0.000000e+00> : vector<8x16xf32>
    %24 = tpu.matmul %19, %21, %cst_14 {dimension_numbers = #tpu.dot_dimension_numbers<[1], [1], [0], [0], [0, 0, 1, 0], [], []>} : vector<8x8xbf16>, vector<16x8xbf16>, vector<8x16xf32> -> vector<8x16xf32>
    %cst_15 = arith.constant 0.353553385 : f32
    %25 = vector.broadcast %cst_15 : f32 to vector<8x16xf32>
    %26 = arith.mulf %24, %25 : vector<8x16xf32>
    %cst_16 = arith.constant dense<0xFF800000> : vector<8xf32>
    %27 = vector.multi_reduction <maximumf>, %26, %cst_16 [1] : vector<8x16xf32> to vector<8xf32>
    %28 = vector.shape_cast %27 : vector<8xf32> to vector<8x1xf32>
    %29 = vector.broadcast %28 : vector<8x1xf32> to vector<8x16xf32>
    %30 = arith.subf %26, %29 : vector<8x16xf32>
    %31 = math.exp %30 : vector<8x16xf32>
    %cst_17 = arith.constant dense<0.000000e+00> : vector<8xf32>
    %32 = vector.multi_reduction <add>, %31, %cst_17 [1] : vector<8x16xf32> to vector<8xf32>
    %33 = vector.shape_cast %32 : vector<8xf32> to vector<8x1xf32>
    %34 = tpu.reciprocal %33 {approx = true} : vector<8x1xf32> -> vector<8x1xf32>
    %35 = vector.broadcast %34 : vector<8x1xf32> to vector<8x16xf32>
    %36 = arith.mulf %31, %35 : vector<8x16xf32>
    %37 = arith.truncf %36 : vector<8x16xf32> to vector<8x16xbf16>
    %cst_18 = arith.constant dense<0.000000e+00> : vector<8x8xf32>
    %38 = tpu.matmul %37, %23, %cst_18 {dimension_numbers = #tpu.dot_dimension_numbers<[1], [0], [0], [1], [0, 0, 1, 1], [], []>} : vector<8x16xbf16>, vector<16x8xbf16>, vector<8x8xf32> -> vector<8x8xf32>
    %c0_19 = arith.constant 0 : index
    %c0_20 = arith.constant 0 : index
    %39 = vector.load %arg12[%c0_19, %c0_20] : memref<8x32xf32, #tpu.memory_space<vmem>>, vector<8x8xf32>
    tpu.vector_store %arg12[%c0_19, %c0_20], %38 {strides = array<i32>} : memref<8x32xf32, #tpu.memory_space<vmem>>, vector<8x8xf32>,
    %40 = vector.extract_strided_slice %9 {offsets = [0, 8], sizes = [8, 8], strides = [1, 1]} : vector<8x32xf32> to vector<8x8xf32>
    %41 = arith.truncf %40 : vector<8x8xf32> to vector<8x8xbf16>
    %42 = vector.extract_strided_slice %16 {offsets = [0, 8], sizes = [16, 8], strides = [1, 1]} : vector<16x32xf32> to vector<16x8xf32>
    %43 = arith.truncf %42 : vector<16x8xf32> to vector<16x8xbf16>
    %44 = vector.extract_strided_slice %17 {offsets = [0, 8], sizes = [16, 8], strides = [1, 1]} : vector<16x32xf32> to vector<16x8xf32>
    %45 = arith.truncf %44 : vector<16x8xf32> to vector<16x8xbf16>
    %cst_21 = arith.constant dense<0.000000e+00> : vector<8x16xf32>
    %46 = tpu.matmul %41, %43, %cst_21 {dimension_numbers = #tpu.dot_dimension_numbers<[1], [1], [0], [0], [0, 0, 1, 0], [], []>} : vector<8x8xbf16>, vector<16x8xbf16>, vector<8x16xf32> -> vector<8x16xf32>
    %cst_22 = arith.constant 0.353553385 : f32
    %47 = vector.broadcast %cst_22 : f32 to vector<8x16xf32>
    %48 = arith.mulf %46, %47 : vector<8x16xf32>
    %cst_23 = arith.constant dense<0xFF800000> : vector<8xf32>
    %49 = vector.multi_reduction <maximumf>, %48, %cst_23 [1] : vector<8x16xf32> to vector<8xf32>
    %50 = vector.shape_cast %49 : vector<8xf32> to vector<8x1xf32>
    %51 = vector.broadcast %50 : vector<8x1xf32> to vector<8x16xf32>
    %52 = arith.subf %48, %51 : vector<8x16xf32>
    %53 = math.exp %52 : vector<8x16xf32>
    %cst_24 = arith.constant dense<0.000000e+00> : vector<8xf32>
    %54 = vector.multi_reduction <add>, %53, %cst_24 [1] : vector<8x16xf32> to vector<8xf32>
    %55 = vector.shape_cast %54 : vector<8xf32> to vector<8x1xf32>
    %56 = tpu.reciprocal %55 {approx = true} : vector<8x1xf32> -> vector<8x1xf32>
    %57 = vector.broadcast %56 : vector<8x1xf32> to vector<8x16xf32>
    %58 = arith.mulf %53, %57 : vector<8x16xf32>
    %59 = arith.truncf %58 : vector<8x16xf32> to vector<8x16xbf16>
    %cst_25 = arith.constant dense<0.000000e+00> : vector<8x8xf32>
    %60 = tpu.matmul %59, %45, %cst_25 {dimension_numbers = #tpu.dot_dimension_numbers<[1], [0], [0], [1], [0, 0, 1, 1], [], []>} : vector<8x16xbf16>, vector<16x8xbf16>, vector<8x8xf32> -> vector<8x8xf32>
    %c0_26 = arith.constant 0 : index
    %c8 = arith.constant 8 : index
    %61 = vector.load %arg12[%c0_26, %c8] : memref<8x32xf32, #tpu.memory_space<vmem>>, vector<8x8xf32>
    tpu.vector_store %arg12[%c0_26, %c8], %60 {strides = array<i32>} : memref<8x32xf32, #tpu.memory_space<vmem>>, vector<8x8xf32>,
    %62 = vector.extract_strided_slice %9 {offsets = [0, 16], sizes = [8, 8], strides = [1, 1]} : vector<8x32xf32> to vector<8x8xf32>
    %63 = arith.truncf %62 : vector<8x8xf32> to vector<8x8xbf16>
    %64 = vector.extract_strided_slice %16 {offsets = [0, 16], sizes = [16, 8], strides = [1, 1]} : vector<16x32xf32> to vector<16x8xf32>
    %65 = arith.truncf %64 : vector<16x8xf32> to vector<16x8xbf16>
    %66 = vector.extract_strided_slice %17 {offsets = [0, 16], sizes = [16, 8], strides = [1, 1]} : vector<16x32xf32> to vector<16x8xf32>
    %67 = arith.truncf %66 : vector<16x8xf32> to vector<16x8xbf16>
    %cst_27 = arith.constant dense<0.000000e+00> : vector<8x16xf32>
    %68 = tpu.matmul %63, %65, %cst_27 {dimension_numbers = #tpu.dot_dimension_numbers<[1], [1], [0], [0], [0, 0, 1, 0], [], []>} : vector<8x8xbf16>, vector<16x8xbf16>, vector<8x16xf32> -> vector<8x16xf32>
    %cst_28 = arith.constant 0.353553385 : f32
    %69 = vector.broadcast %cst_28 : f32 to vector<8x16xf32>
    %70 = arith.mulf %68, %69 : vector<8x16xf32>
    %cst_29 = arith.constant dense<0xFF800000> : vector<8xf32>
    %71 = vector.multi_reduction <maximumf>, %70, %cst_29 [1] : vector<8x16xf32> to vector<8xf32>
    %72 = vector.shape_cast %71 : vector<8xf32> to vector<8x1xf32>
    %73 = vector.broadcast %72 : vector<8x1xf32> to vector<8x16xf32>
    %74 = arith.subf %70, %73 : vector<8x16xf32>
    %75 = math.exp %74 : vector<8x16xf32>
    %cst_30 = arith.constant dense<0.000000e+00> : vector<8xf32>
    %76 = vector.multi_reduction <add>, %75, %cst_30 [1] : vector<8x16xf32> to vector<8xf32>
    %77 = vector.shape_cast %76 : vector<8xf32> to vector<8x1xf32>
    %78 = tpu.reciprocal %77 {approx = true} : vector<8x1xf32> -> vector<8x1xf32>
    %79 = vector.broadcast %78 : vector<8x1xf32> to vector<8x16xf32>
    %80 = arith.mulf %75, %79 : vector<8x16xf32>
    %81 = arith.truncf %80 : vector<8x16xf32> to vector<8x16xbf16>
    %cst_31 = arith.constant dense<0.000000e+00> : vector<8x8xf32>
    %82 = tpu.matmul %81, %67, %cst_31 {dimension_numbers = #tpu.dot_dimension_numbers<[1], [0], [0], [1], [0, 0, 1, 1], [], []>} : vector<8x16xbf16>, vector<16x8xbf16>, vector<8x8xf32> -> vector<8x8xf32>
    %c0_32 = arith.constant 0 : index
    %c16 = arith.constant 16 : index
    %83 = vector.load %arg12[%c0_32, %c16] : memref<8x32xf32, #tpu.memory_space<vmem>>, vector<8x8xf32>
    tpu.vector_store %arg12[%c0_32, %c16], %82 {strides = array<i32>} : memref<8x32xf32, #tpu.memory_space<vmem>>, vector<8x8xf32>,
    %84 = vector.extract_strided_slice %9 {offsets = [0, 24], sizes = [8, 8], strides = [1, 1]} : vector<8x32xf32> to vector<8x8xf32>
    %85 = arith.truncf %84 : vector<8x8xf32> to vector<8x8xbf16>
    %86 = vector.extract_strided_slice %16 {offsets = [0, 24], sizes = [16, 8], strides = [1, 1]} : vector<16x32xf32> to vector<16x8xf32>
    %87 = arith.truncf %86 : vector<16x8xf32> to vector<16x8xbf16>
    %88 = vector.extract_strided_slice %17 {offsets = [0, 24], sizes = [16, 8], strides = [1, 1]} : vector<16x32xf32> to vector<16x8xf32>
    %89 = arith.truncf %88 : vector<16x8xf32> to vector<16x8xbf16>
    %cst_33 = arith.constant dense<0.000000e+00> : vector<8x16xf32>
    %90 = tpu.matmul %85, %87, %cst_33 {dimension_numbers = #tpu.dot_dimension_numbers<[1], [1], [0], [0], [0, 0, 1, 0], [], []>} : vector<8x8xbf16>, vector<16x8xbf16>, vector<8x16xf32> -> vector<8x16xf32>
    %cst_34 = arith.constant 0.353553385 : f32
    %91 = vector.broadcast %cst_34 : f32 to vector<8x16xf32>
    %92 = arith.mulf %90, %91 : vector<8x16xf32>
    %cst_35 = arith.constant dense<0xFF800000> : vector<8xf32>
    %93 = vector.multi_reduction <maximumf>, %92, %cst_35 [1] : vector<8x16xf32> to vector<8xf32>
    %94 = vector.shape_cast %93 : vector<8xf32> to vector<8x1xf32>
    %95 = vector.broadcast %94 : vector<8x1xf32> to vector<8x16xf32>
    %96 = arith.subf %92, %95 : vector<8x16xf32>
    %97 = math.exp %96 : vector<8x16xf32>
    %cst_36 = arith.constant dense<0.000000e+00> : vector<8xf32>
    %98 = vector.multi_reduction <add>, %97, %cst_36 [1] : vector<8x16xf32> to vector<8xf32>
    %99 = vector.shape_cast %98 : vector<8xf32> to vector<8x1xf32>
    %100 = tpu.reciprocal %99 {approx = true} : vector<8x1xf32> -> vector<8x1xf32>
    %101 = vector.broadcast %100 : vector<8x1xf32> to vector<8x16xf32>
    %102 = arith.mulf %97, %101 : vector<8x16xf32>
    %103 = arith.truncf %102 : vector<8x16xf32> to vector<8x16xbf16>
    %cst_37 = arith.constant dense<0.000000e+00> : vector<8x8xf32>
    %104 = tpu.matmul %103, %89, %cst_37 {dimension_numbers = #tpu.dot_dimension_numbers<[1], [0], [0], [1], [0, 0, 1, 1], [], []>} : vector<8x16xbf16>, vector<16x8xbf16>, vector<8x8xf32> -> vector<8x8xf32>
    %c0_38 = arith.constant 0 : index
    %c24 = arith.constant 24 : index
    %105 = vector.load %arg12[%c0_38, %c24] : memref<8x32xf32, #tpu.memory_space<vmem>>, vector<8x8xf32>
    tpu.vector_store %arg12[%c0_38, %c24], %104 {strides = array<i32>} : memref<8x32xf32, #tpu.memory_space<vmem>>, vector<8x8xf32>,
    %c0_39 = arith.constant 0 : index
    %c0_40 = arith.constant 0 : index
    %106 = vector.load %arg12[%c0_39, %c0_40] : memref<8x32xf32, #tpu.memory_space<vmem>>, vector<8x32xf32>
    %107 = arith.truncf %106 : vector<8x32xf32> to vector<8x32xbf16>
    %c0_41 = arith.constant 0 : index
    %c0_42 = arith.constant 0 : index
    %108 = vector.load %arg7[%c0_41, %c0_42] : memref<32x32xbf16, #tpu.memory_space<vmem>>, vector<32x32xbf16>
    %cst_43 = arith.constant dense<0.000000e+00> : vector<8x32xf32>
    %109 = tpu.matmul %107, %108, %cst_43 {dimension_numbers = #tpu.dot_dimension_numbers<[1], [0], [0], [1], [0, 0, 1, 1], [], []>} : vector<8x32xbf16>, vector<32x32xbf16>, vector<8x32xf32> -> vector<8x32xf32>
    %c0_44 = arith.constant 0 : index
    %c0_45 = arith.constant 0 : index
    %110 = vector.load %arg8[%c0_44, %c0_45] : memref<1x32xf32, #tpu.memory_space<vmem>>, vector<1x32xf32>
    %111 = vector.broadcast %110 : vector<1x32xf32> to vector<8x32xf32>
    %112 = arith.addf %109, %111 : vector<8x32xf32>
    %113 = arith.addf %112, %1 : vector<8x32xf32>
    %cst_46 = arith.constant dense<0.000000e+00> : vector<8xf32>
    %114 = vector.multi_reduction <add>, %113, %cst_46 [1] : vector<8x32xf32> to vector<8xf32>
    %115 = vector.shape_cast %114 : vector<8xf32> to vector<8x1xf32>
    %cst_47 = arith.constant 3.200000e+01 : f32
    %116 = vector.broadcast %cst_47 : f32 to vector<8x1xf32>
    %117 = arith.divf %115, %116 : vector<8x1xf32>
    %118 = vector.broadcast %117 : vector<8x1xf32> to vector<8x32xf32>
    %119 = arith.subf %113, %118 : vector<8x32xf32>
    %120 = arith.mulf %119, %119 : vector<8x32xf32>
    %cst_48 = arith.constant dense<0.000000e+00> : vector<8xf32>
    %121 = vector.multi_reduction <add>, %120, %cst_48 [1] : vector<8x32xf32> to vector<8xf32>
    %122 = vector.shape_cast %121 : vector<8xf32> to vector<8x1xf32>
    %cst_49 = arith.constant 3.200000e+01 : f32
    %123 = vector.broadcast %cst_49 : f32 to vector<8x1xf32>
    %124 = arith.divf %122, %123 : vector<8x1xf32>
    %125 = vector.broadcast %117 : vector<8x1xf32> to vector<8x32xf32>
    %126 = arith.subf %113, %125 : vector<8x32xf32>
    %cst_50 = arith.constant 9.99999974E-6 : f32
    %127 = vector.broadcast %cst_50 : f32 to vector<8x1xf32>
    %128 = arith.addf %124, %127 : vector<8x1xf32>
    %129 = math.rsqrt %128 : vector<8x1xf32>
    %130 = vector.broadcast %129 : vector<8x1xf32> to vector<8x32xf32>
    %131 = arith.mulf %126, %130 : vector<8x32xf32>
    %c0_51 = arith.constant 0 : index
    %c0_52 = arith.constant 0 : index
    %132 = vector.load %arg9[%c0_51, %c0_52] : memref<1x32xf32, #tpu.memory_space<vmem>>, vector<1x32xf32>
    %133 = vector.broadcast %132 : vector<1x32xf32> to vector<8x32xf32>
    %134 = arith.mulf %131, %133 : vector<8x32xf32>
    %c0_53 = arith.constant 0 : index
    %c0_54 = arith.constant 0 : index
    %135 = vector.load %arg10[%c0_53, %c0_54] : memref<1x32xf32, #tpu.memory_space<vmem>>, vector<1x32xf32>
    %136 = vector.broadcast %135 : vector<1x32xf32> to vector<8x32xf32>
    %137 = arith.addf %134, %136 : vector<8x32xf32>
    %c0_55 = arith.constant 0 : index
    %c0_56 = arith.constant 0 : index
    %c0_57 = arith.constant 0 : index
    %138 = vector.load %arg11[%c0_55, %c0_56, %c0_57] : memref<1x8x32xf32, #tpu.memory_space<vmem>>, vector<1x8x32xf32>
    %139 = vector.shape_cast %138 : vector<1x8x32xf32> to vector<8x32xf32>
    %140 = vector.shape_cast %137 : vector<8x32xf32> to vector<1x8x32xf32>
    tpu.vector_store %arg11[%c0_55, %c0_56, %c0_57], %140 {strides = array<i32>} : memref<1x8x32xf32, #tpu.memory_space<vmem>>, vector<1x8x32xf32>,
    return
  }
  func.func @transform_0(%arg0: i32) -> (i32, i32, i32) {
    %c0_i32 = arith.constant 0 : i32
    %c0_i32_0 = arith.constant 0 : i32
    %c0_i32_1 = arith.constant 0 : i32
    return %arg0, %c0_i32, %c0_i32_0 : i32, i32, i32
  }
  func.func @transform_1(%arg0: i32) -> (i32, i32, i32) {
    %c0_i32 = arith.constant 0 : i32
    %c0_i32_0 = arith.constant 0 : i32
    %c0_i32_1 = arith.constant 0 : i32
    return %arg0, %c0_i32, %c0_i32_0 : i32, i32, i32
  }
  func.func @transform_2(%arg0: i32) -> (i32, i32) {
    %c0_i32 = arith.constant 0 : i32
    %c0_i32_0 = arith.constant 0 : i32
    %c0_i32_1 = arith.constant 0 : i32
    return %c0_i32, %c0_i32_0 : i32, i32
  }
  func.func @transform_3(%arg0: i32) -> (i32, i32) {
    %c0_i32 = arith.constant 0 : i32
    %c0_i32_0 = arith.constant 0 : i32
    %c0_i32_1 = arith.constant 0 : i32
    return %c0_i32, %c0_i32_0 : i32, i32
  }
  func.func @transform_4(%arg0: i32) -> (i32, i32) {
    %c0_i32 = arith.constant 0 : i32
    %c0_i32_0 = arith.constant 0 : i32
    %c0_i32_1 = arith.constant 0 : i32
    return %c0_i32, %c0_i32_0 : i32, i32
  }
  func.func @transform_5(%arg0: i32) -> (i32, i32) {
    %c0_i32 = arith.constant 0 : i32
    %c0_i32_0 = arith.constant 0 : i32
    %c0_i32_1 = arith.constant 0 : i32
    return %c0_i32, %c0_i32_0 : i32, i32
  }
  func.func @transform_6(%arg0: i32) -> (i32, i32) {
    %c0_i32 = arith.constant 0 : i32
    %c0_i32_0 = arith.constant 0 : i32
    %c0_i32_1 = arith.constant 0 : i32
    return %c0_i32, %c0_i32_0 : i32, i32
  }
  func.func @transform_7(%arg0: i32) -> (i32, i32) {
    %c0_i32 = arith.constant 0 : i32
    %c0_i32_0 = arith.constant 0 : i32
    %c0_i32_1 = arith.constant 0 : i32
    return %c0_i32, %c0_i32_0 : i32, i32
  }
  func.func @transform_8(%arg0: i32) -> (i32, i32) {
    %c0_i32 = arith.constant 0 : i32
    %c0_i32_0 = arith.constant 0 : i32
    %c0_i32_1 = arith.constant 0 : i32
    return %c0_i32, %c0_i32_0 : i32, i32
  }
  func.func @transform_9(%arg0: i32) -> (i32, i32) {
    %c0_i32 = arith.constant 0 : i32
    %c0_i32_0 = arith.constant 0 : i32
    %c0_i32_1 = arith.constant 0 : i32
    return %c0_i32, %c0_i32_0 : i32, i32
  }
  func.func @transform_10(%arg0: i32) -> (i32, i32, i32) {
    %c0_i32 = arith.constant 0 : i32
    %c0_i32_0 = arith.constant 0 : i32
    %c0_i32_1 = arith.constant 0 : i32
    return %arg0, %c0_i32, %c0_i32_0 : i32, i32, i32
  }
}

module attributes {stable_mosaic.version = 11 : i64} {
  func.func @_linear_kernel(%arg0: i32, %arg1: i32, %arg2: i32, %arg3: memref<16x32xf32, #tpu.memory_space<vmem>>, %arg4: memref<32x128xbf16, #tpu.memory_space<vmem>>, %arg5: memref<1x128xf32, #tpu.memory_space<vmem>>, %arg6: memref<16x128xf32, #tpu.memory_space<vmem>>, %arg7: memref<16x128xf32, #tpu.memory_space<vmem>>) attributes {dimension_semantics = [#tpu.dimension_semantics<parallel>, #tpu.dimension_semantics<parallel>, #tpu.dimension_semantics<arbitrary>], iteration_bounds = array<i64: 1, 1, 1>, scalar_prefetch = 0 : i64, scratch_operands = 1 : i64, tpu.core_type = #tpu.core_type<tc>, window_params = [{transform_indices = @transform_0, window_bounds = array<i64: 16, 32>}, {transform_indices = @transform_1, window_bounds = array<i64: 32, 128>}, {transform_indices = @transform_2, window_bounds = array<i64: 1, 128>}, {transform_indices = @transform_3, window_bounds = array<i64: 16, 128>}]} {
    %c0_i32 = arith.constant 0 : i32
    %0 = arith.cmpi eq, %arg2, %c0_i32 : i32
    %1 = arith.extui %0 : i1 to i32
    %c0_i32_0 = arith.constant 0 : i32
    %2 = arith.cmpi ne, %1, %c0_i32_0 : i32
    scf.if %2 {
      %cst_10 = arith.constant 0.000000e+00 : f32
      %13 = vector.broadcast %cst_10 : f32 to vector<16x128xf32>
      %c0_11 = arith.constant 0 : index
      %c0_12 = arith.constant 0 : index
      %14 = vector.load %arg7[%c0_11, %c0_12] : memref<16x128xf32, #tpu.memory_space<vmem>>, vector<16x128xf32>
      tpu.vector_store %arg7[%c0_11, %c0_12], %13 {strides = array<i32>} : memref<16x128xf32, #tpu.memory_space<vmem>>, vector<16x128xf32>,
    } else {
    }
    %c0 = arith.constant 0 : index
    %c0_1 = arith.constant 0 : index
    %3 = vector.load %arg7[%c0, %c0_1] : memref<16x128xf32, #tpu.memory_space<vmem>>, vector<16x128xf32>
    %c0_2 = arith.constant 0 : index
    %c0_3 = arith.constant 0 : index
    %4 = vector.load %arg3[%c0_2, %c0_3] : memref<16x32xf32, #tpu.memory_space<vmem>>, vector<16x32xf32>
    %5 = arith.truncf %4 : vector<16x32xf32> to vector<16x32xbf16>
    %c0_4 = arith.constant 0 : index
    %c0_5 = arith.constant 0 : index
    %6 = vector.load %arg4[%c0_4, %c0_5] : memref<32x128xbf16, #tpu.memory_space<vmem>>, vector<32x128xbf16>
    %cst = arith.constant dense<0.000000e+00> : vector<16x128xf32>
    %7 = tpu.matmul %5, %6, %cst {dimension_numbers = #tpu.dot_dimension_numbers<[1], [0], [0], [1], [0, 0, 1, 1], [], []>} : vector<16x32xbf16>, vector<32x128xbf16>, vector<16x128xf32> -> vector<16x128xf32>
    %8 = arith.addf %3, %7 : vector<16x128xf32>
    %c0_6 = arith.constant 0 : index
    %c0_7 = arith.constant 0 : index
    %9 = vector.load %arg7[%c0_6, %c0_7] : memref<16x128xf32, #tpu.memory_space<vmem>>, vector<16x128xf32>
    tpu.vector_store %arg7[%c0_6, %c0_7], %8 {strides = array<i32>} : memref<16x128xf32, #tpu.memory_space<vmem>>, vector<16x128xf32>,
    %c0_i32_8 = arith.constant 0 : i32
    %10 = arith.cmpi eq, %arg2, %c0_i32_8 : i32
    %11 = arith.extui %10 : i1 to i32
    %c0_i32_9 = arith.constant 0 : i32
    %12 = arith.cmpi ne, %11, %c0_i32_9 : i32
    scf.if %12 {
      %c0_10 = arith.constant 0 : index
      %c0_11 = arith.constant 0 : index
      %13 = vector.load %arg7[%c0_10, %c0_11] : memref<16x128xf32, #tpu.memory_space<vmem>>, vector<16x128xf32>
      %c0_12 = arith.constant 0 : index
      %c0_13 = arith.constant 0 : index
      %14 = vector.load %arg5[%c0_12, %c0_13] : memref<1x128xf32, #tpu.memory_space<vmem>>, vector<1x128xf32>
      %15 = vector.broadcast %14 : vector<1x128xf32> to vector<16x128xf32>
      %16 = arith.addf %13, %15 : vector<16x128xf32>
      %c0_14 = arith.constant 0 : index
      %c0_15 = arith.constant 0 : index
      %17 = vector.load %arg6[%c0_14, %c0_15] : memref<16x128xf32, #tpu.memory_space<vmem>>, vector<16x128xf32>
      tpu.vector_store %arg6[%c0_14, %c0_15], %16 {strides = array<i32>} : memref<16x128xf32, #tpu.memory_space<vmem>>, vector<16x128xf32>,
    } else {
    }
    return
  }
  func.func @transform_0(%arg0: i32, %arg1: i32, %arg2: i32) -> (i32, i32) {
    %c0_i32 = arith.constant 0 : i32
    return %arg0, %arg2 : i32, i32
  }
  func.func @transform_1(%arg0: i32, %arg1: i32, %arg2: i32) -> (i32, i32) {
    %c0_i32 = arith.constant 0 : i32
    return %arg2, %arg1 : i32, i32
  }
  func.func @transform_2(%arg0: i32, %arg1: i32, %arg2: i32) -> (i32, i32) {
    %c0_i32 = arith.constant 0 : i32
    %c0_i32_0 = arith.constant 0 : i32
    return %c0_i32, %arg1 : i32, i32
  }
  func.func @transform_3(%arg0: i32, %arg1: i32, %arg2: i32) -> (i32, i32) {
    %c0_i32 = arith.constant 0 : i32
    return %arg0, %arg1 : i32, i32
  }
}

module attributes {stable_mosaic.version = 11 : i64} {
  func.func @_ffn_kernel(%arg0: i32, %arg1: i32, %arg2: memref<16x32xf32, #tpu.memory_space<vmem>>, %arg3: memref<32x64xbf16, #tpu.memory_space<vmem>>, %arg4: memref<1x64xf32, #tpu.memory_space<vmem>>, %arg5: memref<64x32xbf16, #tpu.memory_space<vmem>>, %arg6: memref<1x32xf32, #tpu.memory_space<vmem>>, %arg7: memref<1x32xf32, #tpu.memory_space<vmem>>, %arg8: memref<1x32xf32, #tpu.memory_space<vmem>>, %arg9: memref<16x32xf32, #tpu.memory_space<vmem>>, %arg10: memref<16x32xf32, #tpu.memory_space<vmem>>) attributes {dimension_semantics = [#tpu.dimension_semantics<parallel>, #tpu.dimension_semantics<arbitrary>], iteration_bounds = array<i64: 1, 1>, scalar_prefetch = 0 : i64, scratch_operands = 1 : i64, tpu.core_type = #tpu.core_type<tc>, window_params = [{transform_indices = @transform_0, window_bounds = array<i64: 16, 32>}, {transform_indices = @transform_1, window_bounds = array<i64: 32, 64>}, {transform_indices = @transform_2, window_bounds = array<i64: 1, 64>}, {transform_indices = @transform_3, window_bounds = array<i64: 64, 32>}, {pipeline_mode = #tpu.pipeline_mode<synchronous>, transform_indices = @transform_4, window_bounds = array<i64: 1, 32>}, {pipeline_mode = #tpu.pipeline_mode<synchronous>, transform_indices = @transform_5, window_bounds = array<i64: 1, 32>}, {pipeline_mode = #tpu.pipeline_mode<synchronous>, transform_indices = @transform_6, window_bounds = array<i64: 1, 32>}, {transform_indices = @transform_7, window_bounds = array<i64: 16, 32>}]} {
    %c0_i32 = arith.constant 0 : i32
    %0 = arith.cmpi eq, %arg1, %c0_i32 : i32
    %1 = arith.extui %0 : i1 to i32
    %c0_i32_0 = arith.constant 0 : i32
    %2 = arith.cmpi ne, %1, %c0_i32_0 : i32
    scf.if %2 {
      %cst_16 = arith.constant 0.000000e+00 : f32
      %21 = vector.broadcast %cst_16 : f32 to vector<16x32xf32>
      %c0_17 = arith.constant 0 : index
      %c0_18 = arith.constant 0 : index
      %22 = vector.load %arg10[%c0_17, %c0_18] : memref<16x32xf32, #tpu.memory_space<vmem>>, vector<16x32xf32>
      tpu.vector_store %arg10[%c0_17, %c0_18], %21 {strides = array<i32>} : memref<16x32xf32, #tpu.memory_space<vmem>>, vector<16x32xf32>,
    } else {
    }
    %c0 = arith.constant 0 : index
    %c0_1 = arith.constant 0 : index
    %3 = vector.load %arg2[%c0, %c0_1] : memref<16x32xf32, #tpu.memory_space<vmem>>, vector<16x32xf32>
    %4 = arith.truncf %3 : vector<16x32xf32> to vector<16x32xbf16>
    %c0_2 = arith.constant 0 : index
    %c0_3 = arith.constant 0 : index
    %5 = vector.load %arg3[%c0_2, %c0_3] : memref<32x64xbf16, #tpu.memory_space<vmem>>, vector<32x64xbf16>
    %cst = arith.constant dense<0.000000e+00> : vector<16x64xf32>
    %6 = tpu.matmul %4, %5, %cst {dimension_numbers = #tpu.dot_dimension_numbers<[1], [0], [0], [1], [0, 0, 1, 1], [], []>} : vector<16x32xbf16>, vector<32x64xbf16>, vector<16x64xf32> -> vector<16x64xf32>
    %c0_4 = arith.constant 0 : index
    %c0_5 = arith.constant 0 : index
    %7 = vector.load %arg4[%c0_4, %c0_5] : memref<1x64xf32, #tpu.memory_space<vmem>>, vector<1x64xf32>
    %8 = vector.broadcast %7 : vector<1x64xf32> to vector<16x64xf32>
    %9 = arith.addf %6, %8 : vector<16x64xf32>
    %cst_6 = arith.constant 0.000000e+00 : f32
    %10 = vector.broadcast %cst_6 : f32 to vector<16x64xf32>
    %11 = arith.maximumf %9, %10 : vector<16x64xf32>
    %c0_7 = arith.constant 0 : index
    %c0_8 = arith.constant 0 : index
    %12 = vector.load %arg10[%c0_7, %c0_8] : memref<16x32xf32, #tpu.memory_space<vmem>>, vector<16x32xf32>
    %13 = arith.truncf %11 : vector<16x64xf32> to vector<16x64xbf16>
    %c0_9 = arith.constant 0 : index
    %c0_10 = arith.constant 0 : index
    %14 = vector.load %arg5[%c0_9, %c0_10] : memref<64x32xbf16, #tpu.memory_space<vmem>>, vector<64x32xbf16>
    %cst_11 = arith.constant dense<0.000000e+00> : vector<16x32xf32>
    %15 = tpu.matmul %13, %14, %cst_11 {dimension_numbers = #tpu.dot_dimension_numbers<[1], [0], [0], [1], [0, 0, 1, 1], [], []>} : vector<16x64xbf16>, vector<64x32xbf16>, vector<16x32xf32> -> vector<16x32xf32>
    %16 = arith.addf %12, %15 : vector<16x32xf32>
    %c0_12 = arith.constant 0 : index
    %c0_13 = arith.constant 0 : index
    %17 = vector.load %arg10[%c0_12, %c0_13] : memref<16x32xf32, #tpu.memory_space<vmem>>, vector<16x32xf32>
    tpu.vector_store %arg10[%c0_12, %c0_13], %16 {strides = array<i32>} : memref<16x32xf32, #tpu.memory_space<vmem>>, vector<16x32xf32>,
    %c0_i32_14 = arith.constant 0 : i32
    %18 = arith.cmpi eq, %arg1, %c0_i32_14 : i32
    %19 = arith.extui %18 : i1 to i32
    %c0_i32_15 = arith.constant 0 : i32
    %20 = arith.cmpi ne, %19, %c0_i32_15 : i32
    scf.if %20 {
      %c0_16 = arith.constant 0 : index
      %c0_17 = arith.constant 0 : index
      %21 = vector.load %arg10[%c0_16, %c0_17] : memref<16x32xf32, #tpu.memory_space<vmem>>, vector<16x32xf32>
      %c0_18 = arith.constant 0 : index
      %c0_19 = arith.constant 0 : index
      %22 = vector.load %arg6[%c0_18, %c0_19] : memref<1x32xf32, #tpu.memory_space<vmem>>, vector<1x32xf32>
      %23 = vector.broadcast %22 : vector<1x32xf32> to vector<16x32xf32>
      %24 = arith.addf %21, %23 : vector<16x32xf32>
      %25 = arith.addf %24, %3 : vector<16x32xf32>
      %cst_20 = arith.constant dense<0.000000e+00> : vector<16xf32>
      %26 = vector.multi_reduction <add>, %25, %cst_20 [1] : vector<16x32xf32> to vector<16xf32>
      %27 = vector.shape_cast %26 : vector<16xf32> to vector<16x1xf32>
      %cst_21 = arith.constant 3.200000e+01 : f32
      %28 = vector.broadcast %cst_21 : f32 to vector<16x1xf32>
      %29 = arith.divf %27, %28 : vector<16x1xf32>
      %30 = vector.broadcast %29 : vector<16x1xf32> to vector<16x32xf32>
      %31 = arith.subf %25, %30 : vector<16x32xf32>
      %32 = arith.mulf %31, %31 : vector<16x32xf32>
      %cst_22 = arith.constant dense<0.000000e+00> : vector<16xf32>
      %33 = vector.multi_reduction <add>, %32, %cst_22 [1] : vector<16x32xf32> to vector<16xf32>
      %34 = vector.shape_cast %33 : vector<16xf32> to vector<16x1xf32>
      %cst_23 = arith.constant 3.200000e+01 : f32
      %35 = vector.broadcast %cst_23 : f32 to vector<16x1xf32>
      %36 = arith.divf %34, %35 : vector<16x1xf32>
      %37 = vector.broadcast %29 : vector<16x1xf32> to vector<16x32xf32>
      %38 = arith.subf %25, %37 : vector<16x32xf32>
      %cst_24 = arith.constant 9.99999974E-6 : f32
      %39 = vector.broadcast %cst_24 : f32 to vector<16x1xf32>
      %40 = arith.addf %36, %39 : vector<16x1xf32>
      %41 = math.rsqrt %40 : vector<16x1xf32>
      %42 = vector.broadcast %41 : vector<16x1xf32> to vector<16x32xf32>
      %43 = arith.mulf %38, %42 : vector<16x32xf32>
      %c0_25 = arith.constant 0 : index
      %c0_26 = arith.constant 0 : index
      %44 = vector.load %arg7[%c0_25, %c0_26] : memref<1x32xf32, #tpu.memory_space<vmem>>, vector<1x32xf32>
      %45 = vector.broadcast %44 : vector<1x32xf32> to vector<16x32xf32>
      %46 = arith.mulf %43, %45 : vector<16x32xf32>
      %c0_27 = arith.constant 0 : index
      %c0_28 = arith.constant 0 : index
      %47 = vector.load %arg8[%c0_27, %c0_28] : memref<1x32xf32, #tpu.memory_space<vmem>>, vector<1x32xf32>
      %48 = vector.broadcast %47 : vector<1x32xf32> to vector<16x32xf32>
      %49 = arith.addf %46, %48 : vector<16x32xf32>
      %c0_29 = arith.constant 0 : index
      %c0_30 = arith.constant 0 : index
      %50 = vector.load %arg9[%c0_29, %c0_30] : memref<16x32xf32, #tpu.memory_space<vmem>>, vector<16x32xf32>
      tpu.vector_store %arg9[%c0_29, %c0_30], %49 {strides = array<i32>} : memref<16x32xf32, #tpu.memory_space<vmem>>, vector<16x32xf32>,
    } else {
    }
    return
  }
  func.func @transform_0(%arg0: i32, %arg1: i32) -> (i32, i32) {
    %c0_i32 = arith.constant 0 : i32
    %c0_i32_0 = arith.constant 0 : i32
    return %arg0, %c0_i32 : i32, i32
  }
  func.func @transform_1(%arg0: i32, %arg1: i32) -> (i32, i32) {
    %c0_i32 = arith.constant 0 : i32
    %c0_i32_0 = arith.constant 0 : i32
    return %c0_i32, %arg1 : i32, i32
  }
  func.func @transform_2(%arg0: i32, %arg1: i32) -> (i32, i32) {
    %c0_i32 = arith.constant 0 : i32
    %c0_i32_0 = arith.constant 0 : i32
    return %c0_i32, %arg1 : i32, i32
  }
  func.func @transform_3(%arg0: i32, %arg1: i32) -> (i32, i32) {
    %c0_i32 = arith.constant 0 : i32
    %c0_i32_0 = arith.constant 0 : i32
    return %arg1, %c0_i32 : i32, i32
  }
  func.func @transform_4(%arg0: i32, %arg1: i32) -> (i32, i32) {
    %c0_i32 = arith.constant 0 : i32
    %c0_i32_0 = arith.constant 0 : i32
    %c0_i32_1 = arith.constant 0 : i32
    return %c0_i32, %c0_i32_0 : i32, i32
  }
  func.func @transform_5(%arg0: i32, %arg1: i32) -> (i32, i32) {
    %c0_i32 = arith.constant 0 : i32
    %c0_i32_0 = arith.constant 0 : i32
    %c0_i32_1 = arith.constant 0 : i32
    return %c0_i32, %c0_i32_0 : i32, i32
  }
  func.func @transform_6(%arg0: i32, %arg1: i32) -> (i32, i32) {
    %c0_i32 = arith.constant 0 : i32
    %c0_i32_0 = arith.constant 0 : i32
    %c0_i32_1 = arith.constant 0 : i32
    return %c0_i32, %c0_i32_0 : i32, i32
  }
  func.func @transform_7(%arg0: i32, %arg1: i32) -> (i32, i32) {
    %c0_i32 = arith.constant 0 : i32
    %c0_i32_0 = arith.constant 0 : i32
    return %arg0, %c0_i32 : i32, i32
  }
}

</mosaic_0001>

<llo_original>
// kernel: transformer_ocr_forward.12
$region0: #{transformer_ocr_forward.12}
  #allocation0 [shape = 'u32[]', space=smem, size = 0x4, offset = 0x4, fixed_abs, tag = 'smem constant byte address 0x4 - core index']
  #allocation1 [shape = 'u32[144,128]{1,0:T(1,128)}', space=vmem, size = 0x12000, scoped, tag = 'internal scratch']
  #allocation2 [shape = 'f32[16,32]{1,0:T(8,128)}', space=vmem, size = 0x2000, scoped, tag = 'scratch operand']
  %s0 = inlined_call_operand.vmem [shape: f32[2,16,16], index: 0, kind: input, shape index: {}]
  %s1 = inlined_call_operand.vmem [shape: bf16[16,32], index: 1, kind: input, shape index: {}]
  %s2 = inlined_call_operand.vmem [shape: f32[1,32], index: 2, kind: input, shape index: {}]
  %s3 = inlined_call_operand.vmem [shape: f32[16,32], index: 3, kind: input, shape index: {}]
  %s4 = inlined_call_operand.vmem [shape: f32[2,16,32], index: 4, kind: output, shape index: {}]
  %s5 = sld [smem:[#allocation0]]
  $region57: #{transformer_ocr_forward.12} parent=0
    _
  %s7 = ssub.s32 1, %s5
  %s8 = scalar_select 0, %s7, %s5
  loop: start=0, step=1, limit=4
  $region2: #{transformer_ocr_forward.12} parent=0 // loop_pre_header
    _
  $region3: #{transformer_ocr_forward.12} parent=0 // loop_header
    %s10 = sphi 0, %s14
    %p11 = scmp.ge.s32.totalorder %s10, 4
    %s17 = sphi 0, %s29
    %s18 = sphi 0, %s25
    %s19 = sphi 0, %s17
    %s20 = sphi 0, %s18
    %s21 = sphi 0, %s19
    %s22 = sphi 0, %s20
    %s34 = sphi 0, %s36
    %s37 = sphi 0, %s34
    %s38 = sphi 0, %s37
    %s54 = sphi 0, %s38
    %s60 = sphi 0, %s62
    %s63 = sphi 0, %s60
    %s64 = sphi 0, %s63
    %s80 = sphi 0, %s64
    %s84 = sphi 0, %s84
    %s86 = sphi 0, %s84
    %s87 = sphi 0, %s86
    %s101 = sphi 0, %s87
    %s105 = sphi 0, %s105
    %s107 = sphi 0, %s105
    %s108 = sphi 0, %s107
    %s122 = sphi 0, %s108
    %s128 = sphi 0, %s130
    %s131 = sphi 0, %s128
    %s132 = sphi 0, %s131
    %s148 = sphi 0, %s132
  $region4: #{transformer_ocr_forward.12} parent=0 // loop_header_branch
    %13 = sbr.rel (%p11) target = $region8
  $region5: #{transformer_ocr_forward.12} parent=0 // loop_body
    %s15 = ssub.s32 %s10, 1
    %s16 = ssub.s32 %s10, 2
    %s23 = sadd.s32 1, %s18
    %p24 = scmp.ge.s32.totalorder %s23, 1
    %s25 = scalar_select %p24, 0, %s23
    %s26 = sadd.s32 1, %s17
    %s27 = scalar_select %p24, %s26, %s17
    %p28 = scmp.ge.s32.totalorder %s27, 2
    %s29 = scalar_select %p28, 0, %s27
    %s30 = ssub.s32 %s17, %s29
    %s31 = ssub.s32 %s18, %s25
    %s32 = sor.u32 %s30, %s31
    %p33 = scmp.eq.s32.totalorder %s32, 0
    %s35 = sadd.s32 %s34, 1
    %s36 = scalar_select %p33, %s34, %s35
    %p39 = pneg %p33
    %p40 = scmp.eq.s32.totalorder %s10, 1
    %p41 = por %p39, %p40
    %p42 = scmp.ne.s32.totalorder %s34, %s37
    %p43 = scmp.eq.s32.totalorder %s10, 0
    %p44 = por %p42, %p43
    %p45 = scmp.ne.s32.totalorder %s34, %s37
    %p46 = scmp.eq.s32.totalorder %s15, 1
    %p47 = por %p45, %p46
    %p48 = scmp.ne.s32.totalorder %s37, %s38
    %p49 = scmp.eq.s32.totalorder %s15, 0
    %p50 = por %p48, %p49
    %p51 = scmp.ne.s32.totalorder %s37, %s38
    %p52 = scmp.eq.s32.totalorder %s16, 1
    %p53 = por %p51, %p52
    %p55 = scmp.ne.s32.totalorder %s38, %s54
    %p56 = scmp.eq.s32.totalorder %s16, 0
    %p57 = por %p55, %p56
    %s58 = ssub.s32 %s18, %s25
    %p59 = scmp.eq.s32.totalorder %s58, 0
    %s61 = sadd.s32 %s60, 1
    %s62 = scalar_select %p59, %s60, %s61
    %p65 = pneg %p59
    %p66 = scmp.eq.s32.totalorder %s10, 1
    %p67 = por %p65, %p66
    %p68 = scmp.ne.s32.totalorder %s60, %s63
    %p69 = scmp.eq.s32.totalorder %s10, 0
    %p70 = por %p68, %p69
    %p71 = scmp.ne.s32.totalorder %s60, %s63
    %p72 = scmp.eq.s32.totalorder %s15, 1
    %p73 = por %p71, %p72
    %p74 = scmp.ne.s32.totalorder %s63, %s64
    %p75 = scmp.eq.s32.totalorder %s15, 0
    %p76 = por %p74, %p75
    %p77 = scmp.ne.s32.totalorder %s63, %s64
    %p78 = scmp.eq.s32.totalorder %s16, 1
    %p79 = por %p77, %p78
    %p81 = scmp.ne.s32.totalorder %s64, %s80
    %p82 = scmp.eq.s32.totalorder %s16, 0
    %p83 = por %p81, %p82
    %s85 = sadd.s32 %s84, 1
    %p88 = scmp.eq.s32.totalorder %s10, 1
    %p89 = scmp.ne.s32.totalorder %s84, %s86
    %p90 = scmp.eq.s32.totalorder %s10, 0
    %p91 = por %p89, %p90
    %p92 = scmp.ne.s32.totalorder %s84, %s86
    %p93 = scmp.eq.s32.totalorder %s15, 1
    %p94 = por %p92, %p93
    %p95 = scmp.ne.s32.totalorder %s86, %s87
    %p96 = scmp.eq.s32.totalorder %s15, 0
    %p97 = por %p95, %p96
    %p98 = scmp.ne.s32.totalorder %s86, %s87
    %p99 = scmp.eq.s32.totalorder %s16, 1
    %p100 = por %p98, %p99
    %p102 = scmp.ne.s32.totalorder %s87, %s101
    %p103 = scmp.eq.s32.totalorder %s16, 0
    %p104 = por %p102, %p103
    %s106 = sadd.s32 %s105, 1
    %p109 = scmp.eq.s32.totalorder %s10, 1
    %p110 = scmp.ne.s32.totalorder %s105, %s107
    %p111 = scmp.eq.s32.totalorder %s10, 0
    %p112 = por %p110, %p111
    %p113 = scmp.ne.s32.totalorder %s105, %s107
    %p114 = scmp.eq.s32.totalorder %s15, 1
    %p115 = por %p113, %p114
    %p116 = scmp.ne.s32.totalorder %s107, %s108
    %p117 = scmp.eq.s32.totalorder %s15, 0
    %p118 = por %p116, %p117
    %p119 = scmp.ne.s32.totalorder %s107, %s108
    %p120 = scmp.eq.s32.totalorder %s16, 1
    %p121 = por %p119, %p120
    %p123 = scmp.ne.s32.totalorder %s108, %s122
    %p124 = scmp.eq.s32.totalorder %s16, 0
    %p125 = por %p123, %p124
    %s126 = ssub.s32 %s17, %s29
    %p127 = scmp.eq.s32.totalorder %s126, 0
    %s129 = sadd.s32 %s128, 1
    %s130 = scalar_select %p127, %s128, %s129
    %p133 = pneg %p127
    %p134 = scmp.eq.s32.totalorder %s10, 1
    %p135 = por %p133, %p134
    %p136 = scmp.ne.s32.totalorder %s128, %s131
    %p137 = scmp.eq.s32.totalorder %s10, 0
    %p138 = por %p136, %p137
    %p139 = scmp.ne.s32.totalorder %s128, %s131
    %p140 = scmp.eq.s32.totalorder %s15, 1
    %p141 = por %p139, %p140
    %p142 = scmp.ne.s32.totalorder %s131, %s132
    %p143 = scmp.eq.s32.totalorder %s15, 0
    %p144 = por %p142, %p143
    %p145 = scmp.ne.s32.totalorder %s131, %s132
    %p146 = scmp.eq.s32.totalorder %s16, 1
    %p147 = por %p145, %p146
    %p149 = scmp.ne.s32.totalorder %s132, %s148
    %p150 = scmp.eq.s32.totalorder %s16, 0
    %p151 = por %p149, %p150
    %p152 = scmp.le.s32.totalorder 1, %s10
    %p153 = scmp.lt.s32.totalorder %s10, 3
    %p154 = pnand %p152, %p153
    %p155 = pneg %p154
    // Predicated region
    $region9: #{transformer_ocr_forward.12} parent=5 // pred_check
      _
    $region10: #{transformer_ocr_forward.12} parent=5 // pred_check_branch
      %157 = sbr.rel (%p154) target = $region12
    $region11: #{transformer_ocr_forward.12} parent=5 // pred_region
      %s158 = ssub.s32 %s10, 1
      // Predicated region
      $region13: #{transformer_ocr_forward.12} parent=11 // pred_check
        %p159 = pneg %p76
      $region14: #{transformer_ocr_forward.12} parent=11 // pred_check_branch
        %161 = sbr.rel (%p159) target = $region16
      $region15: #{transformer_ocr_forward.12} parent=11 // pred_region
        %s162 = smul.u32 2, %s20
        %p163 = scmp.lt.s32.totalorder %s162, 1
        %s164 = scalar_select %p163, %s162, 1
        %s165 = smul.addr %s164, 4
        %s166 = scalar_lea.vmem %s1, %s165
        %s167 = smul.u32 2, %s20
      $region16: #{transformer_ocr_forward.12} parent=11 // pred_fallthru
        _
      // Predicated region
      $region17: #{transformer_ocr_forward.12} parent=11 // pred_check
        %p168 = pneg %p97
      $region18: #{transformer_ocr_forward.12} parent=11 // pred_check_branch
        %170 = sbr.rel (%p168) target = $region20
      $region19: #{transformer_ocr_forward.12} parent=11 // pred_region
        _
      $region20: #{transformer_ocr_forward.12} parent=11 // pred_fallthru
        _
      // Predicated region
      $region21: #{transformer_ocr_forward.12} parent=11 // pred_check
        %p171 = pneg %p118
      $region22: #{transformer_ocr_forward.12} parent=11 // pred_check_branch
        %173 = sbr.rel (%p171) target = $region24
      $region23: #{transformer_ocr_forward.12} parent=11 // pred_region
        _
      $region24: #{transformer_ocr_forward.12} parent=11 // pred_fallthru
        _
    $region12: #{transformer_ocr_forward.12} parent=5 // pred_fallthru
      _
    %p174 = scmp.lt.s32.totalorder %s10, 2
    // Predicated region
    $region25: #{transformer_ocr_forward.12} parent=5 // pred_check
      %p175 = pneg %p174
    $region26: #{transformer_ocr_forward.12} parent=5 // pred_check_branch
      %177 = sbr.rel (%p175) target = $region28
    $region27: #{transformer_ocr_forward.12} parent=5 // pred_region
      // Predicated region
      $region29: #{transformer_ocr_forward.12} parent=27 // pred_check
        %p178 = pneg %p44
      $region30: #{transformer_ocr_forward.12} parent=27 // pred_check_branch
        %180 = sbr.rel (%p178) target = $region32
      $region31: #{transformer_ocr_forward.12} parent=27 // pred_region
        %s181 = smul.u32 2, %s18
        %p182 = scmp.lt.s32.totalorder %s17, 1
        %s183 = scalar_select %p182, %s17, 1
        %p184 = scmp.lt.s32.totalorder %s181, 1
        %s185 = scalar_select %p184, %s181, 1
        %s186 = smul.addr %s183, 2
        %s187 = sadd.s32 %s185, %s186
        %s188 = smul.addr %s187, 8
        %s189 = scalar_lea.vmem %s0, %s188
        %s190 = smul.u32 2, %s18
      $region32: #{transformer_ocr_forward.12} parent=27 // pred_fallthru
        _
    $region28: #{transformer_ocr_forward.12} parent=5 // pred_fallthru
      _
    %p191 = scmp.le.s32.totalorder 1, %s10
    %p192 = scmp.lt.s32.totalorder %s10, 3
    %p193 = pnand %p191, %p192
    %p194 = pneg %p193
    // Predicated region
    $region33: #{transformer_ocr_forward.12} parent=5 // pred_check
      _
    $region34: #{transformer_ocr_forward.12} parent=5 // pred_check_branch
      %196 = sbr.rel (%p193) target = $region36
    $region35: #{transformer_ocr_forward.12} parent=5 // pred_region
      %s197 = ssub.s32 %s10, 1
      %s198 = smul.u32 2, %s20
      %p199 = scmp.lt.s32.totalorder %s19, 1
      %s200 = scalar_select %p199, %s19, 1
      %p201 = scmp.lt.s32.totalorder %s198, 1
      %s202 = scalar_select %p201, %s198, 1
      %s203 = smul.addr %s200, 2
      %s204 = sadd.s32 %s202, %s203
      %s205 = smul.addr %s204, 8
      %s206 = scalar_lea.vmem %s0, %s205
      %p207 = pneg %p50
      %p208 = pneg %p47
      %s209 = smul.u32 2, %s20
      %p210 = scmp.lt.s32.totalorder %s209, 1
      %s211 = scalar_select %p210, %s209, 1
      %s212 = smul.addr %s211, 4
      %s213 = scalar_lea.vmem %s1, %s212
      %p214 = pneg %p76
      %p215 = pneg %p73
      %p216 = pneg %p97
      %p217 = pneg %p94
      %p218 = pneg %p118
      %p219 = pneg %p115
      %p220 = pneg %p144
      %p221 = pneg %p141
      %p222 = scmp.lt.s32.totalorder %s19, 1
      %s223 = scalar_select %p222, %s19, 1
      %s224 = smul.addr %s223, 2
      %s225 = smul.addr %s224, 8
      %s226 = scalar_lea.vmem %s4, %s225
      %s227 = smul.u32 2, %s20
      %p228 = scmp.lt.s32.totalorder %s19, 1
      %s229 = scalar_select %p228, %s19, 1
      %p230 = scmp.lt.s32.totalorder %s227, 1
      %s231 = scalar_select %p230, %s227, 1
      %s232 = smul.addr %s229, 2
      %s233 = sadd.s32 %s231, %s232
      %s234 = smul.addr %s233, 8
      %s235 = scalar_lea.vmem %s0, %s234
      %s236 = smul.u32 2, %s20
      %s237 = smul.u32 2, %s20
      %p238 = scmp.lt.s32.totalorder %s237, 1
      %s239 = scalar_select %p238, %s237, 1
      %s240 = smul.addr %s239, 4
      %s241 = scalar_lea.vmem %s1, %s240
      %s242 = smul.u32 2, %s20
      %p243 = scmp.lt.s32.totalorder %s19, 1
      %s244 = scalar_select %p243, %s19, 1
      %s245 = smul.addr %s244, 2
      %s246 = smul.addr %s245, 8
      %s247 = scalar_lea.vmem %s4, %s246
      %p249 = scmp.eq.s32.totalorder %s20, 0
      // Predicated region
      $region37: #{transformer_ocr_forward.12} parent=35 // pred_check
        %p250 = pneg %p249
      $region38: #{transformer_ocr_forward.12} parent=35 // pred_check_branch
        %252 = sbr.rel (%p250) target = $region40
      $region39: #{transformer_ocr_forward.12} parent=35 // pred_region
        %vm253 = vcmask 261120
        %254 = vst.msk [vmem:[#allocation2] sm:$0xff] %vm253, 0.0
        %255 = vst.msk [vmem:[#allocation2 + $0x8] sm:$0xff] %vm253, 0.0
      $region40: #{transformer_ocr_forward.12} parent=35 // pred_fallthru
        _
      %v256 = vld [vmem:[%s235] sm:$0xff]
      %v257 = vld [vmem:[%s235 + $0x8] sm:$0xff]
      %258 = vxpose.xlu0.b32.start [1/16] %v256, 128
      %259 = vxpose.xlu0.b32.cont [2/16] %v257, 128
      %260 = vxpose.xlu0.b32.cont [3/16] 0.0, 128
      %261 = vxpose.xlu0.b32.cont [4/16] 0.0, 128
      %262 = vxpose.xlu0.b32.cont [5/16] 0.0, 128
      %263 = vxpose.xlu0.b32.cont [6/16] 0.0, 128
      %264 = vxpose.xlu0.b32.cont [7/16] 0.0, 128
      %265 = vxpose.xlu0.b32.cont [8/16] 0.0, 128
      %266 = vxpose.xlu0.b32.cont [9/16] 0.0, 128
      %267 = vxpose.xlu0.b32.cont [10/16] 0.0, 128
      %268 = vxpose.xlu0.b32.cont [11/16] 0.0, 128
      %269 = vxpose.xlu0.b32.cont [12/16] 0.0, 128
      %270 = vxpose.xlu0.b32.cont [13/16] 0.0, 128
      %271 = vxpose.xlu0.b32.cont [14/16] 0.0, 128
      %272 = vxpose.xlu0.b32.cont [15/16] 0.0, 128
      %273 = vxpose.xlu0.b32.end [16/16] 0.0, 128
      %v274 = vpop.trf.xlu0
      %v275 = vpop.trf.xlu0
      %v276 = vpop.trf.xlu0
      %v277 = vpop.trf.xlu0
      %v278 = vpop.trf.xlu0
      %v279 = vpop.trf.xlu0
      %v280 = vpop.trf.xlu0
      %v281 = vpop.trf.xlu0
      %v282 = vpop.trf.xlu0
      %v283 = vpop.trf.xlu0
      %v284 = vpop.trf.xlu0
      %v285 = vpop.trf.xlu0
      %v286 = vpop.trf.xlu0
      %v287 = vpop.trf.xlu0
      %v288 = vpop.trf.xlu0
      %v289 = vpop.trf.xlu0
      %v290 = vpack.c.bf16 %v275, %v274
      %v291 = vld [vmem:[#allocation2] sm:$0xff]
      %v292 = vld [vmem:[#allocation2 + $0x8] sm:$0xff]
      %v293 = vld [vmem:[%s241] sm:$0xf]
      %v294 = vld [vmem:[%s241 + $0x4] sm:$0xf]
      %v297 = vunpack.c.l.b16 %v293
      %v298 = vunpack.c.l.b16 %v294
      %v299 = vpack.c.b16 %v298, %v297
      %vm301 = vcmask 130048
      %v303 = vsel %vm301, %v290, 0
      %305 = vmatprep.subr.bf16.mxu0 0
      %306 = vmatpush1.bf16.msra.mxu0 %v299
      %307 = vmatprep.subr.bf16.mxu0 0
      %308 = vmatpush1.bf16.msra.mxu0 0
      %309 = vmatprep.subr.bf16.mxu0 0
      %310 = vmatpush1.bf16.msra.mxu0 0
      %311 = vmatprep.subr.bf16.mxu0 0
      %312 = vmatpush1.bf16.msra.mxu0 0
      %313 = vmatprep.subr.bf16.mxu0 0
      %314 = vmatpush1.bf16.msra.mxu0 0
      %315 = vmatprep.subr.bf16.mxu0 0
      %316 = vmatpush1.bf16.msra.mxu0 0
      %317 = vmatprep.subr.bf16.mxu0 0
      %318 = vmatpush1.bf16.msra.mxu0 0
      %319 = vmatprep.subr.bf16.mxu0 0
      %320 = vmatpush1.bf16.msra.mxu0 0
      %321 = vmatprep.subr.bf16.mxu0 0
      %322 = vmatpush1.bf16.msra.mxu0 0
      %323 = vmatprep.subr.bf16.mxu0 0
      %324 = vmatpush1.bf16.msra.mxu0 0
      %325 = vmatprep.subr.bf16.mxu0 0
      %326 = vmatpush1.bf16.msra.mxu0 0
      %327 = vmatprep.subr.bf16.mxu0 0
      %328 = vmatpush1.bf16.msra.mxu0 0
      %329 = vmatprep.subr.bf16.mxu0 0
      %330 = vmatpush1.bf16.msra.mxu0 0
      %331 = vmatprep.subr.bf16.mxu0 0
      %332 = vmatpush1.bf16.msra.mxu0 0
      %333 = vmatprep.subr.bf16.mxu0 0
      %334 = vmatpush1.bf16.msra.mxu0 0
      %335 = vmatprep.subr.bf16.mxu0 0
      %336 = vmatpush1.bf16.msra.mxu0 0
      %337 = vmatprep.mubr.bf16.mxu0 0
      %338 = vmatmul.mubr.bf16.gmra.mrb[0].mxu0 %v303
      %v339 = vpop.f32.mrb[0].mxu0
      %v340 = vadd.f32 0.0, %v339
      %v341 = vpop.f32.mrb[0].mxu0
      %v342 = vpop.f32.mrb[0].mxu0
      %v343 = vadd.f32 0.0, %v342
      %v344 = vpop.f32.mrb[0].mxu0
      %345 = vdwg.mxu0
      %v346 = vadd.f32 %v291, %v340
      %v347 = vadd.f32 %v292, %v343
      %vm348 = vcmask 261120
      %349 = vst.msk [vmem:[#allocation2] sm:$0xff] %vm348, %v346
      %350 = vst.msk [vmem:[#allocation2 + $0x8] sm:$0xff] %vm348, %v347
      // Predicated region
      $region41: #{transformer_ocr_forward.12} parent=35 // pred_check
        %p351 = pneg %p249
      $region42: #{transformer_ocr_forward.12} parent=35 // pred_check_branch
        %353 = sbr.rel (%p351) target = $region44
      $region43: #{transformer_ocr_forward.12} parent=35 // pred_region
        %v354 = vld [vmem:[#allocation2] sm:$0xff]
        %v355 = vld [vmem:[#allocation2 + $0x8] sm:$0xff]
        %v356 = vld [vmem:[%s2] sm:$0x1]
        %v358 = vlaneseq
        %v359 = vshrl.u32 %v358, 7
        %v360 = vsub.s32 0, %v359
        %v361 = vrot.slane %v356, %v360
        %v363 = vadd.f32 %v354, %v361
        %v364 = vadd.f32 %v355, %v361
        %v365 = vld [vmem:[%s3] sm:$0xff]
        %v366 = vld [vmem:[%s3 + $0x8] sm:$0xff]
        %v367 = vadd.f32 %v363, %v365
        %v368 = vadd.f32 %v364, %v366
        %369 = vst.msk [vmem:[%s247] sm:$0xff] %vm348, %v367
        %370 = vst.msk [vmem:[%s247 + $0x8] sm:$0xff] %vm348, %v368
      $region44: #{transformer_ocr_forward.12} parent=35 // pred_fallthru
        _
      %p371 = scmp.lt.s32.totalorder %s19, 1
      %s372 = scalar_select %p371, %s19, 1
      %s373 = smul.addr %s372, 2
      %s374 = smul.addr %s373, 8
      %s375 = scalar_lea.vmem %s4, %s374
      // Predicated region
      $region45: #{transformer_ocr_forward.12} parent=35 // pred_check
        %p376 = pneg %p141
      $region46: #{transformer_ocr_forward.12} parent=35 // pred_check_branch
        %378 = sbr.rel (%p376) target = $region48
      $region47: #{transformer_ocr_forward.12} parent=35 // pred_region
        _
      $region48: #{transformer_ocr_forward.12} parent=35 // pred_fallthru
        _
    $region36: #{transformer_ocr_forward.12} parent=5 // pred_fallthru
      _
    %p379 = scmp.le.s32.totalorder 2, %s10
    // Predicated region
    $region49: #{transformer_ocr_forward.12} parent=5 // pred_check
      %p380 = pneg %p379
    $region50: #{transformer_ocr_forward.12} parent=5 // pred_check_branch
      %382 = sbr.rel (%p380) target = $region52
    $region51: #{transformer_ocr_forward.12} parent=5 // pred_region
      %s383 = ssub.s32 %s10, 2
      // Predicated region
      $region53: #{transformer_ocr_forward.12} parent=51 // pred_check
        %p384 = pneg %p147
      $region54: #{transformer_ocr_forward.12} parent=51 // pred_check_branch
        %386 = sbr.rel (%p384) target = $region56
      $region55: #{transformer_ocr_forward.12} parent=51 // pred_region
        %p387 = scmp.lt.s32.totalorder %s21, 1
        %s388 = scalar_select %p387, %s21, 1
        %s389 = smul.addr %s388, 2
        %s390 = smul.addr %s389, 8
        %s391 = scalar_lea.vmem %s4, %s390
      $region56: #{transformer_ocr_forward.12} parent=51 // pred_fallthru
        _
    $region52: #{transformer_ocr_forward.12} parent=5 // pred_fallthru
      _
  $region6: #{transformer_ocr_forward.12} parent=0 // loop_footer
    %s14 = sadd.s32 1, %s10
  $region7: #{transformer_ocr_forward.12} parent=0 // loop_footer_branch
    %9 = sbr.rel target = $region3
  $region8: #{transformer_ocr_forward.12} parent=0 // loop_exit
    _

// kernel: transformer_ocr_forward.13
$region0: #{transformer_ocr_forward.13}
  #allocation0 [shape = 'u32[]', space=smem, size = 0x4, offset = 0x4, fixed_abs, tag = 'smem constant byte address 0x4 - core index']
  #allocation1 [shape = 'u32[144,128]{1,0:T(1,128)}', space=vmem, size = 0x12000, scoped, tag = 'internal scratch']
  #allocation2 [shape = 'f32[16,32]{1,0:T(8,128)}', space=vmem, size = 0x2000, scoped, tag = 'scratch operand']
  %s0 = inlined_call_operand.vmem [shape: f32[2,16,32], index: 0, kind: input, shape index: {}]
  %s1 = inlined_call_operand.vmem [shape: bf16[32,96], index: 1, kind: input, shape index: {}]
  %s2 = inlined_call_operand.vmem [shape: f32[1,96], index: 2, kind: input, shape index: {}]
  %s3 = inlined_call_operand.vmem [shape: bf16[32,32], index: 3, kind: input, shape index: {}]
  %s4 = inlined_call_operand.vmem [shape: f32[1,32], index: 4, kind: input, shape index: {}]
  %s5 = inlined_call_operand.vmem [shape: f32[1,32], index: 5, kind: input, shape index: {}]
  %s6 = inlined_call_operand.vmem [shape: f32[1,32], index: 6, kind: input, shape index: {}]
  %s7 = inlined_call_operand.vmem [shape: f32[2,16,32], index: 7, kind: output, shape index: {}]
  %s8 = sld [smem:[#allocation0]]
  $region61: #{transformer_ocr_forward.13} parent=0
    _
  %s10 = ssub.s32 1, %s8
  %s11 = scalar_select 0, %s10, %s8
  loop: start=0, step=1, limit=4
  $region2: #{transformer_ocr_forward.13} parent=0 // loop_pre_header
    _
  $region3: #{transformer_ocr_forward.13} parent=0 // loop_header
    %s13 = sphi 0, %s17
    %p14 = scmp.ge.s32.totalorder %s13, 4
    %s23 = sphi 0, %s25
    %s26 = sphi 0, %s23
    %s27 = sphi 0, %s26
    %s43 = sphi 0, %s27
    %s47 = sphi 0, %s47
    %s49 = sphi 0, %s47
    %s50 = sphi 0, %s49
    %s64 = sphi 0, %s50
    %s68 = sphi 0, %s68
    %s70 = sphi 0, %s68
    %s71 = sphi 0, %s70
    %s85 = sphi 0, %s71
    %s89 = sphi 0, %s89
    %s91 = sphi 0, %s89
    %s92 = sphi 0, %s91
    %s106 = sphi 0, %s92
    %s110 = sphi 0, %s110
    %s112 = sphi 0, %s110
    %s113 = sphi 0, %s112
    %s127 = sphi 0, %s113
    %s131 = sphi 0, %s131
    %s133 = sphi 0, %s131
    %s134 = sphi 0, %s133
    %s148 = sphi 0, %s134
    %s152 = sphi 0, %s152
    %s154 = sphi 0, %s152
    %s155 = sphi 0, %s154
    %s169 = sphi 0, %s155
    %s175 = sphi 0, %s177
    %s178 = sphi 0, %s175
    %s179 = sphi 0, %s178
    %s195 = sphi 0, %s179
  $region4: #{transformer_ocr_forward.13} parent=0 // loop_header_branch
    %16 = sbr.rel (%p14) target = $region8
  $region5: #{transformer_ocr_forward.13} parent=0 // loop_body
    %s18 = ssub.s32 %s13, 1
    %s19 = ssub.s32 %s13, 2
    %s20 = sadd.s32 %s13, 1
    %s21 = ssub.s32 %s13, %s20
    %p22 = scmp.eq.s32.totalorder %s21, 0
    %s24 = sadd.s32 %s23, 1
    %s25 = scalar_select %p22, %s23, %s24
    %p28 = pneg %p22
    %p29 = scmp.eq.s32.totalorder %s13, 1
    %p30 = por %p28, %p29
    %p31 = scmp.ne.s32.totalorder %s23, %s26
    %p32 = scmp.eq.s32.totalorder %s13, 0
    %p33 = por %p31, %p32
    %p34 = scmp.ne.s32.totalorder %s23, %s26
    %p35 = scmp.eq.s32.totalorder %s18, 1
    %p36 = por %p34, %p35
    %p37 = scmp.ne.s32.totalorder %s26, %s27
    %p38 = scmp.eq.s32.totalorder %s18, 0
    %p39 = por %p37, %p38
    %p40 = scmp.ne.s32.totalorder %s26, %s27
    %p41 = scmp.eq.s32.totalorder %s19, 1
    %p42 = por %p40, %p41
    %p44 = scmp.ne.s32.totalorder %s27, %s43
    %p45 = scmp.eq.s32.totalorder %s19, 0
    %p46 = por %p44, %p45
    %s48 = sadd.s32 %s47, 1
    %p51 = scmp.eq.s32.totalorder %s13, 1
    %p52 = scmp.ne.s32.totalorder %s47, %s49
    %p53 = scmp.eq.s32.totalorder %s13, 0
    %p54 = por %p52, %p53
    %p55 = scmp.ne.s32.totalorder %s47, %s49
    %p56 = scmp.eq.s32.totalorder %s18, 1
    %p57 = por %p55, %p56
    %p58 = scmp.ne.s32.totalorder %s49, %s50
    %p59 = scmp.eq.s32.totalorder %s18, 0
    %p60 = por %p58, %p59
    %p61 = scmp.ne.s32.totalorder %s49, %s50
    %p62 = scmp.eq.s32.totalorder %s19, 1
    %p63 = por %p61, %p62
    %p65 = scmp.ne.s32.totalorder %s50, %s64
    %p66 = scmp.eq.s32.totalorder %s19, 0
    %p67 = por %p65, %p66
    %s69 = sadd.s32 %s68, 1
    %p72 = scmp.eq.s32.totalorder %s13, 1
    %p73 = scmp.ne.s32.totalorder %s68, %s70
    %p74 = scmp.eq.s32.totalorder %s13, 0
    %p75 = por %p73, %p74
    %p76 = scmp.ne.s32.totalorder %s68, %s70
    %p77 = scmp.eq.s32.totalorder %s18, 1
    %p78 = por %p76, %p77
    %p79 = scmp.ne.s32.totalorder %s70, %s71
    %p80 = scmp.eq.s32.totalorder %s18, 0
    %p81 = por %p79, %p80
    %p82 = scmp.ne.s32.totalorder %s70, %s71
    %p83 = scmp.eq.s32.totalorder %s19, 1
    %p84 = por %p82, %p83
    %p86 = scmp.ne.s32.totalorder %s71, %s85
    %p87 = scmp.eq.s32.totalorder %s19, 0
    %p88 = por %p86, %p87
    %s90 = sadd.s32 %s89, 1
    %p93 = scmp.eq.s32.totalorder %s13, 1
    %p94 = scmp.ne.s32.totalorder %s89, %s91
    %p95 = scmp.eq.s32.totalorder %s13, 0
    %p96 = por %p94, %p95
    %p97 = scmp.ne.s32.totalorder %s89, %s91
    %p98 = scmp.eq.s32.totalorder %s18, 1
    %p99 = por %p97, %p98
    %p100 = scmp.ne.s32.totalorder %s91, %s92
    %p101 = scmp.eq.s32.totalorder %s18, 0
    %p102 = por %p100, %p101
    %p103 = scmp.ne.s32.totalorder %s91, %s92
    %p104 = scmp.eq.s32.totalorder %s19, 1
    %p105 = por %p103, %p104
    %p107 = scmp.ne.s32.totalorder %s92, %s106
    %p108 = scmp.eq.s32.totalorder %s19, 0
    %p109 = por %p107, %p108
    %s111 = sadd.s32 %s110, 1
    %p114 = scmp.eq.s32.totalorder %s13, 1
    %p115 = scmp.ne.s32.totalorder %s110, %s112
    %p116 = scmp.eq.s32.totalorder %s13, 0
    %p117 = por %p115, %p116
    %p118 = scmp.ne.s32.totalorder %s110, %s112
    %p119 = scmp.eq.s32.totalorder %s18, 1
    %p120 = por %p118, %p119
    %p121 = scmp.ne.s32.totalorder %s112, %s113
    %p122 = scmp.eq.s32.totalorder %s18, 0
    %p123 = por %p121, %p122
    %p124 = scmp.ne.s32.totalorder %s112, %s113
    %p125 = scmp.eq.s32.totalorder %s19, 1
    %p126 = por %p124, %p125
    %p128 = scmp.ne.s32.totalorder %s113, %s127
    %p129 = scmp.eq.s32.totalorder %s19, 0
    %p130 = por %p128, %p129
    %s132 = sadd.s32 %s131, 1
    %p135 = scmp.eq.s32.totalorder %s13, 1
    %p136 = scmp.ne.s32.totalorder %s131, %s133
    %p137 = scmp.eq.s32.totalorder %s13, 0
    %p138 = por %p136, %p137
    %p139 = scmp.ne.s32.totalorder %s131, %s133
    %p140 = scmp.eq.s32.totalorder %s18, 1
    %p141 = por %p139, %p140
    %p142 = scmp.ne.s32.totalorder %s133, %s134
    %p143 = scmp.eq.s32.totalorder %s18, 0
    %p144 = por %p142, %p143
    %p145 = scmp.ne.s32.totalorder %s133, %s134
    %p146 = scmp.eq.s32.totalorder %s19, 1
    %p147 = por %p145, %p146
    %p149 = scmp.ne.s32.totalorder %s134, %s148
    %p150 = scmp.eq.s32.totalorder %s19, 0
    %p151 = por %p149, %p150
    %s153 = sadd.s32 %s152, 1
    %p156 = scmp.eq.s32.totalorder %s13, 1
    %p157 = scmp.ne.s32.totalorder %s152, %s154
    %p158 = scmp.eq.s32.totalorder %s13, 0
    %p159 = por %p157, %p158
    %p160 = scmp.ne.s32.totalorder %s152, %s154
    %p161 = scmp.eq.s32.totalorder %s18, 1
    %p162 = por %p160, %p161
    %p163 = scmp.ne.s32.totalorder %s154, %s155
    %p164 = scmp.eq.s32.totalorder %s18, 0
    %p165 = por %p163, %p164
    %p166 = scmp.ne.s32.totalorder %s154, %s155
    %p167 = scmp.eq.s32.totalorder %s19, 1
    %p168 = por %p166, %p167
    %p170 = scmp.ne.s32.totalorder %s155, %s169
    %p171 = scmp.eq.s32.totalorder %s19, 0
    %p172 = por %p170, %p171
    %s173 = ssub.s32 %s13, %s20
    %p174 = scmp.eq.s32.totalorder %s173, 0
    %s176 = sadd.s32 %s175, 1
    %s177 = scalar_select %p174, %s175, %s176
    %p180 = pneg %p174
    %p181 = scmp.eq.s32.totalorder %s13, 1
    %p182 = por %p180, %p181
    %p183 = scmp.ne.s32.totalorder %s175, %s178
    %p184 = scmp.eq.s32.totalorder %s13, 0
    %p185 = por %p183, %p184
    %p186 = scmp.ne.s32.totalorder %s175, %s178
    %p187 = scmp.eq.s32.totalorder %s18, 1
    %p188 = por %p186, %p187
    %p189 = scmp.ne.s32.totalorder %s178, %s179
    %p190 = scmp.eq.s32.totalorder %s18, 0
    %p191 = por %p189, %p190
    %p192 = scmp.ne.s32.totalorder %s178, %s179
    %p193 = scmp.eq.s32.totalorder %s19, 1
    %p194 = por %p192, %p193
    %p196 = scmp.ne.s32.totalorder %s179, %s195
    %p197 = scmp.eq.s32.totalorder %s19, 0
    %p198 = por %p196, %p197
    %p199 = scmp.le.s32.totalorder 1, %s13
    %p200 = scmp.lt.s32.totalorder %s13, 3
    %p201 = pnand %p199, %p200
    %p202 = pneg %p201
    // Predicated region
    $region9: #{transformer_ocr_forward.13} parent=5 // pred_check
      _
    $region10: #{transformer_ocr_forward.13} parent=5 // pred_check_branch
      %204 = sbr.rel (%p201) target = $region12
    $region11: #{transformer_ocr_forward.13} parent=5 // pred_region
      %s205 = ssub.s32 %s13, 1
      // Predicated region
      $region13: #{transformer_ocr_forward.13} parent=11 // pred_check
        %p206 = pneg %p60
      $region14: #{transformer_ocr_forward.13} parent=11 // pred_check_branch
        %208 = sbr.rel (%p206) target = $region16
      $region15: #{transformer_ocr_forward.13} parent=11 // pred_region
        _
      $region16: #{transformer_ocr_forward.13} parent=11 // pred_fallthru
        _
      // Predicated region
      $region17: #{transformer_ocr_forward.13} parent=11 // pred_check
        %p209 = pneg %p81
      $region18: #{transformer_ocr_forward.13} parent=11 // pred_check_branch
        %211 = sbr.rel (%p209) target = $region20
      $region19: #{transformer_ocr_forward.13} parent=11 // pred_region
        _
      $region20: #{transformer_ocr_forward.13} parent=11 // pred_fallthru
        _
      // Predicated region
      $region21: #{transformer_ocr_forward.13} parent=11 // pred_check
        %p212 = pneg %p102
      $region22: #{transformer_ocr_forward.13} parent=11 // pred_check_branch
        %214 = sbr.rel (%p212) target = $region24
      $region23: #{transformer_ocr_forward.13} parent=11 // pred_region
        _
      $region24: #{transformer_ocr_forward.13} parent=11 // pred_fallthru
        _
      // Predicated region
      $region25: #{transformer_ocr_forward.13} parent=11 // pred_check
        %p215 = pneg %p123
      $region26: #{transformer_ocr_forward.13} parent=11 // pred_check_branch
        %217 = sbr.rel (%p215) target = $region28
      $region27: #{transformer_ocr_forward.13} parent=11 // pred_region
        _
      $region28: #{transformer_ocr_forward.13} parent=11 // pred_fallthru
        _
      // Predicated region
      $region29: #{transformer_ocr_forward.13} parent=11 // pred_check
        %p218 = pneg %p144
      $region30: #{transformer_ocr_forward.13} parent=11 // pred_check_branch
        %220 = sbr.rel (%p218) target = $region32
      $region31: #{transformer_ocr_forward.13} parent=11 // pred_region
        _
      $region32: #{transformer_ocr_forward.13} parent=11 // pred_fallthru
        _
      // Predicated region
      $region33: #{transformer_ocr_forward.13} parent=11 // pred_check
        %p221 = pneg %p165
      $region34: #{transformer_ocr_forward.13} parent=11 // pred_check_branch
        %223 = sbr.rel (%p221) target = $region36
      $region35: #{transformer_ocr_forward.13} parent=11 // pred_region
        _
      $region36: #{transformer_ocr_forward.13} parent=11 // pred_fallthru
        _
    $region12: #{transformer_ocr_forward.13} parent=5 // pred_fallthru
      _
    %p224 = scmp.lt.s32.totalorder %s13, 2
    // Predicated region
    $region37: #{transformer_ocr_forward.13} parent=5 // pred_check
      %p225 = pneg %p224
    $region38: #{transformer_ocr_forward.13} parent=5 // pred_check_branch
      %227 = sbr.rel (%p225) target = $region40
    $region39: #{transformer_ocr_forward.13} parent=5 // pred_region
      // Predicated region
      $region41: #{transformer_ocr_forward.13} parent=39 // pred_check
        %p228 = pneg %p33
      $region42: #{transformer_ocr_forward.13} parent=39 // pred_check_branch
        %230 = sbr.rel (%p228) target = $region44
      $region43: #{transformer_ocr_forward.13} parent=39 // pred_region
        %p231 = scmp.lt.s32.totalorder %s13, 1
        %s232 = scalar_select %p231, %s13, 1
        %s233 = smul.addr %s232, 2
        %s234 = smul.addr %s233, 8
        %s235 = scalar_lea.vmem %s0, %s234
      $region44: #{transformer_ocr_forward.13} parent=39 // pred_fallthru
        _
    $region40: #{transformer_ocr_forward.13} parent=5 // pred_fallthru
      _
    %p236 = scmp.le.s32.totalorder 1, %s13
    %p237 = scmp.lt.s32.totalorder %s13, 3
    %p238 = pnand %p236, %p237
    %p239 = pneg %p238
    // Predicated region
    $region45: #{transformer_ocr_forward.13} parent=5 // pred_check
      _
    $region46: #{transformer_ocr_forward.13} parent=5 // pred_check_branch
      %241 = sbr.rel (%p238) target = $region48
    $region47: #{transformer_ocr_forward.13} parent=5 // pred_region
      %s242 = ssub.s32 %s13, 1
      %p243 = scmp.lt.s32.totalorder %s18, 1
      %s244 = scalar_select %p243, %s18, 1
      %s245 = smul.addr %s244, 2
      %s246 = smul.addr %s245, 8
      %s247 = scalar_lea.vmem %s0, %s246
      %p248 = pneg %p39
      %p249 = pneg %p36
      %p250 = pneg %p60
      %p251 = pneg %p57
      %p252 = pneg %p81
      %p253 = pneg %p78
      %p254 = pneg %p102
      %p255 = pneg %p99
      %p256 = pneg %p123
      %p257 = pneg %p120
      %p258 = pneg %p144
      %p259 = pneg %p141
      %p260 = pneg %p165
      %p261 = pneg %p162
      %p262 = pneg %p191
      %p263 = pneg %p188
      %p264 = scmp.lt.s32.totalorder %s18, 1
      %s265 = scalar_select %p264, %s18, 1
      %s266 = smul.addr %s265, 2
      %s267 = smul.addr %s266, 8
      %s268 = scalar_lea.vmem %s7, %s267
      %p269 = scmp.lt.s32.totalorder %s18, 1
      %s270 = scalar_select %p269, %s18, 1
      %s271 = smul.addr %s270, 2
      %s272 = smul.addr %s271, 8
      %s273 = scalar_lea.vmem %s0, %s272
      %p274 = scmp.lt.s32.totalorder %s18, 1
      %s275 = scalar_select %p274, %s18, 1
      %s276 = smul.addr %s275, 2
      %s277 = smul.addr %s276, 8
      %s278 = scalar_lea.vmem %s7, %s277
      %v280 = vld [vmem:[%s273] sm:$0xff]
      %v281 = vld [vmem:[%s273 + $0x8] sm:$0xff]
      %v282 = vpack.c.bf16 %v281, %v280
      %v283 = vld [vmem:[%s1] sm:$0xf]
      %v284 = vld [vmem:[%s1 + $0x4] sm:$0xf]
      %v285 = vld [vmem:[%s1 + $0x8] sm:$0xf]
      %v286 = vld [vmem:[%s1 + $0xc] sm:$0xf]
      %v287 = vld [vmem:[%s2] sm:$0x1]
      %v289 = vlaneseq
      %v290 = vshrl.u32 %v289, 7
      %v291 = vsub.s32 0, %v290
      %v292 = vrot.slane %v287, %v291
      %v298 = vunpack.c.l.b16 %v283
      %v299 = vunpack.c.l.b16 %v284
      %v300 = vunpack.c.l.b16 %v285
      %v301 = vunpack.c.l.b16 %v286
      %v302 = vpack.c.b16 %v299, %v298
      %v303 = vpack.c.b16 %v301, %v300
      %vm306 = vcmask 261120
      %v308 = vsel %vm306, %v282, 0
      %310 = vmatprep.subr.bf16.mxu0 0
      %311 = vmatpush1.bf16.msra.mxu0 %v302
      %312 = vmatprep.subr.bf16.mxu0 0
      %313 = vmatpush1.bf16.msra.mxu0 %v303
      %314 = vmatprep.subr.bf16.mxu0 0
      %315 = vmatpush1.bf16.msra.mxu0 0
      %316 = vmatprep.subr.bf16.mxu0 0
      %317 = vmatpush1.bf16.msra.mxu0 0
      %318 = vmatprep.subr.bf16.mxu0 0
      %319 = vmatpush1.bf16.msra.mxu0 0
      %320 = vmatprep.subr.bf16.mxu0 0
      %321 = vmatpush1.bf16.msra.mxu0 0
      %322 = vmatprep.subr.bf16.mxu0 0
      %323 = vmatpush1.bf16.msra.mxu0 0
      %324 = vmatprep.subr.bf16.mxu0 0
      %325 = vmatpush1.bf16.msra.mxu0 0
      %326 = vmatprep.subr.bf16.mxu0 0
      %327 = vmatpush1.bf16.msra.mxu0 0
      %328 = vmatprep.subr.bf16.mxu0 0
      %329 = vmatpush1.bf16.msra.mxu0 0
      %330 = vmatprep.subr.bf16.mxu0 0
      %331 = vmatpush1.bf16.msra.mxu0 0
      %332 = vmatprep.subr.bf16.mxu0 0
      %333 = vmatpush1.bf16.msra.mxu0 0
      %334 = vmatprep.subr.bf16.mxu0 0
      %335 = vmatpush1.bf16.msra.mxu0 0
      %336 = vmatprep.subr.bf16.mxu0 0
      %337 = vmatpush1.bf16.msra.mxu0 0
      %338 = vmatprep.subr.bf16.mxu0 0
      %339 = vmatpush1.bf16.msra.mxu0 0
      %340 = vmatprep.subr.bf16.mxu0 0
      %341 = vmatpush1.bf16.msra.mxu0 0
      %342 = vmatprep.mubr.bf16.mxu0 0
      %343 = vmatmul.mubr.bf16.gmra.mrb[0].mxu0 %v308
      %v344 = vpop.f32.mrb[0].mxu0
      %v345 = vadd.f32 %v292, %v344
      %v346 = vpop.f32.mrb[0].mxu0
      %v347 = vpop.f32.mrb[0].mxu0
      %v348 = vadd.f32 %v292, %v347
      %v349 = vpop.f32.mrb[0].mxu0
      %350 = vdwg.mxu0
      %v351 = vpack.c.bf16 %v348, %v345
      %353 = vrot.lane.b32.xlu0 %v351, 96
      %v354 = vpop.permute.xlu0 %353
      %vm355 = vcmask 64512
      %v357 = vsel %vm355, %v351, 0
      %v360 = vsel %vm355, %v354, 0
      %362 = vmatprep.subr.bf16.mxu0 0
      %363 = vmatpush1.bf16.xpose.msra.mxu0 %v360
      %364 = vmatprep.subr.bf16.mxu0 0
      %365 = vmatpush1.bf16.xpose.msra.mxu0 0
      %366 = vmatprep.subr.bf16.mxu0 0
      %367 = vmatpush1.bf16.xpose.msra.mxu0 0
      %368 = vmatprep.subr.bf16.mxu0 0
      %369 = vmatpush1.bf16.xpose.msra.mxu0 0
      %370 = vmatprep.subr.bf16.mxu0 0
      %371 = vmatpush1.bf16.xpose.msra.mxu0 0
      %372 = vmatprep.subr.bf16.mxu0 0
      %373 = vmatpush1.bf16.xpose.msra.mxu0 0
      %374 = vmatprep.subr.bf16.mxu0 0
      %375 = vmatpush1.bf16.xpose.msra.mxu0 0
      %376 = vmatprep.subr.bf16.mxu0 0
      %377 = vmatpush1.bf16.xpose.msra.mxu0 0
      %378 = vmatprep.subr.bf16.mxu0 0
      %379 = vmatpush1.bf16.xpose.msra.mxu0 0
      %380 = vmatprep.subr.bf16.mxu0 0
      %381 = vmatpush1.bf16.xpose.msra.mxu0 0
      %382 = vmatprep.subr.bf16.mxu0 0
      %383 = vmatpush1.bf16.xpose.msra.mxu0 0
      %384 = vmatprep.subr.bf16.mxu0 0
      %385 = vmatpush1.bf16.xpose.msra.mxu0 0
      %386 = vmatprep.subr.bf16.mxu0 0
      %387 = vmatpush1.bf16.xpose.msra.mxu0 0
      %388 = vmatprep.subr.bf16.mxu0 0
      %389 = vmatpush1.bf16.xpose.msra.mxu0 0
      %390 = vmatprep.subr.bf16.mxu0 0
      %391 = vmatpush1.bf16.xpose.msra.mxu0 0
      %392 = vmatprep.subr.bf16.mxu0 0
      %393 = vmatpush1.bf16.xpose.msra.mxu0 0
      %394 = vmatprep.mubr.bf16.mxu0 0
      %395 = vmatmul.mubr.bf16.gmra.mrb[0].mxu0 %v357
      %v396 = vpop.f32.mrb[0].mxu0
      %v397 = vadd.f32 0.0, %v396
      %v398 = vpop.f32.mrb[0].mxu0
      %v399 = vpop.f32.mrb[0].mxu0
      %v400 = vadd.f32 0.0, %v399
      %v401 = vpop.f32.mrb[0].mxu0
      %402 = vdwg.mxu0
      %v403 = vmul.f32 %v397, 0.35355338
      %v404 = vmul.f32 %v400, 0.35355338
      %vm405 = vcmask 130048
      %v406 = vsel %vm405, %v403, -inf
      %407 = vmax.xlane.f32.xlu0 %v406
      %v408 = vpop.xlane.xlu0 %407
      %v409 = vsel %vm405, %v404, -inf
      %410 = vmax.xlane.f32.xlu0 %v409
      %v411 = vpop.xlane.xlu0 %410
      %v412 = vsub.f32 %v403, %v408
      %v413 = vsub.f32 %v404, %v411
      %v414 = vmul.f32 %v412, 1.442695
      %v415 = vpow.pop %v414
      %v416 = vmul.f32 %v413, 1.442695
      %v417 = vpow.pop %v416
      %v418 = vsel %vm405, %v415, 0.0
      %419 = vadd.xlane.f32.xlu0 %v418
      %v420 = vpop.xlane.xlu0 %419
      %v421 = vsel %vm405, %v417, 0.0
      %422 = vadd.xlane.f32.xlu0 %v421
      %v423 = vpop.xlane.xlu0 %422
      %v424 = vrcp.pop %v420
      %v425 = vrcp.pop %v423
      %v426 = vmul.f32 %v415, %v424
      %v427 = vmul.f32 %v417, %v425
      %v428 = vpack.c.bf16 %v427, %v426
      %429 = vrot.lane.b32.xlu0 %v351, 64
      %v430 = vpop.permute.xlu0 %429
      %v433 = vsel %vm405, %v428, 0
      %435 = vmatprep.subr.bf16.mxu0 0
      %436 = vmatpush1.bf16.msra.mxu0 %v430
      %437 = vmatprep.subr.bf16.mxu0 0
      %438 = vmatpush1.bf16.msra.mxu0 0
      %439 = vmatprep.subr.bf16.mxu0 0
      %440 = vmatpush1.bf16.msra.mxu0 0
      %441 = vmatprep.subr.bf16.mxu0 0
      %442 = vmatpush1.bf16.msra.mxu0 0
      %443 = vmatprep.subr.bf16.mxu0 0
      %444 = vmatpush1.bf16.msra.mxu0 0
      %445 = vmatprep.subr.bf16.mxu0 0
      %446 = vmatpush1.bf16.msra.mxu0 0
      %447 = vmatprep.subr.bf16.mxu0 0
      %448 = vmatpush1.bf16.msra.mxu0 0
      %449 = vmatprep.subr.bf16.mxu0 0
      %450 = vmatpush1.bf16.msra.mxu0 0
      %451 = vmatprep.subr.bf16.mxu0 0
      %452 = vmatpush1.bf16.msra.mxu0 0
      %453 = vmatprep.subr.bf16.mxu0 0
      %454 = vmatpush1.bf16.msra.mxu0 0
      %455 = vmatprep.subr.bf16.mxu0 0
      %456 = vmatpush1.bf16.msra.mxu0 0
      %457 = vmatprep.subr.bf16.mxu0 0
      %458 = vmatpush1.bf16.msra.mxu0 0
      %459 = vmatprep.subr.bf16.mxu0 0
      %460 = vmatpush1.bf16.msra.mxu0 0
      %461 = vmatprep.subr.bf16.mxu0 0
      %462 = vmatpush1.bf16.msra.mxu0 0
      %463 = vmatprep.subr.bf16.mxu0 0
      %464 = vmatpush1.bf16.msra.mxu0 0
      %465 = vmatprep.subr.bf16.mxu0 0
      %466 = vmatpush1.bf16.msra.mxu0 0
      %467 = vmatprep.mubr.bf16.mxu0 0
      %468 = vmatmul.mubr.bf16.gmra.mrb[0].mxu0 %v433
      %v469 = vpop.f32.mrb[0].mxu0
      %v470 = vadd.f32 0.0, %v469
      %v471 = vpop.f32.mrb[0].mxu0
      %v472 = vpop.f32.mrb[0].mxu0
      %v473 = vadd.f32 0.0, %v472
      %v474 = vpop.f32.mrb[0].mxu0
      %475 = vdwg.mxu0
      %476 = vst.msk [vmem:[#allocation2] sm:$0xff] %vm355, %v470
      %477 = vst.msk [vmem:[#allocation2 + $0x8] sm:$0xff] %vm355, %v473
      %478 = vrot.lane.b32.xlu0 %v351, 120
      %v479 = vpop.permute.xlu0 %478
      %480 = vrot.lane.b32.xlu0 %v351, 88
      %v481 = vpop.permute.xlu0 %480
      %v483 = vsel %vm355, %v479, 0
      %v486 = vsel %vm355, %v481, 0
      %488 = vmatprep.subr.bf16.mxu0 0
      %489 = vmatpush1.bf16.xpose.msra.mxu0 %v486
      %490 = vmatprep.subr.bf16.mxu0 0
      %491 = vmatpush1.bf16.xpose.msra.mxu0 0
      %492 = vmatprep.subr.bf16.mxu0 0
      %493 = vmatpush1.bf16.xpose.msra.mxu0 0
      %494 = vmatprep.subr.bf16.mxu0 0
      %495 = vmatpush1.bf16.xpose.msra.mxu0 0
      %496 = vmatprep.subr.bf16.mxu0 0
      %497 = vmatpush1.bf16.xpose.msra.mxu0 0
      %498 = vmatprep.subr.bf16.mxu0 0
      %499 = vmatpush1.bf16.xpose.msra.mxu0 0
      %500 = vmatprep.subr.bf16.mxu0 0
      %501 = vmatpush1.bf16.xpose.msra.mxu0 0
      %502 = vmatprep.subr.bf16.mxu0 0
      %503 = vmatpush1.bf16.xpose.msra.mxu0 0
      %504 = vmatprep.subr.bf16.mxu0 0
      %505 = vmatpush1.bf16.xpose.msra.mxu0 0
      %506 = vmatprep.subr.bf16.mxu0 0
      %507 = vmatpush1.bf16.xpose.msra.mxu0 0
      %508 = vmatprep.subr.bf16.mxu0 0
      %509 = vmatpush1.bf16.xpose.msra.mxu0 0
      %510 = vmatprep.subr.bf16.mxu0 0
      %511 = vmatpush1.bf16.xpose.msra.mxu0 0
      %512 = vmatprep.subr.bf16.mxu0 0
      %513 = vmatpush1.bf16.xpose.msra.mxu0 0
      %514 = vmatprep.subr.bf16.mxu0 0
      %515 = vmatpush1.bf16.xpose.msra.mxu0 0
      %516 = vmatprep.subr.bf16.mxu0 0
      %517 = vmatpush1.bf16.xpose.msra.mxu0 0
      %518 = vmatprep.subr.bf16.mxu0 0
      %519 = vmatpush1.bf16.xpose.msra.mxu0 0
      %520 = vmatprep.mubr.bf16.mxu0 0
      %521 = vmatmul.mubr.bf16.gmra.mrb[0].mxu0 %v483
      %v522 = vpop.f32.mrb[0].mxu0
      %v523 = vadd.f32 0.0, %v522
      %v524 = vpop.f32.mrb[0].mxu0
      %v525 = vpop.f32.mrb[0].mxu0
      %v526 = vadd.f32 0.0, %v525
      %v527 = vpop.f32.mrb[0].mxu0
      %528 = vdwg.mxu0
      %v529 = vmul.f32 %v523, 0.35355338
      %v530 = vmul.f32 %v526, 0.35355338
      %v531 = vsel %vm405, %v529, -inf
      %532 = vmax.xlane.f32.xlu0 %v531
      %v533 = vpop.xlane.xlu0 %532
      %v534 = vsel %vm405, %v530, -inf
      %535 = vmax.xlane.f32.xlu0 %v534
      %v536 = vpop.xlane.xlu0 %535
      %v537 = vsub.f32 %v529, %v533
      %v538 = vsub.f32 %v530, %v536
      %v539 = vmul.f32 %v537, 1.442695
      %v540 = vpow.pop %v539
      %v541 = vmul.f32 %v538, 1.442695
      %v542 = vpow.pop %v541
      %v543 = vsel %vm405, %v540, 0.0
      %544 = vadd.xlane.f32.xlu0 %v543
      %v545 = vpop.xlane.xlu0 %544
      %v546 = vsel %vm405, %v542, 0.0
      %547 = vadd.xlane.f32.xlu0 %v546
      %v548 = vpop.xlane.xlu0 %547
      %v549 = vrcp.pop %v545
      %v550 = vrcp.pop %v548
      %v551 = vmul.f32 %v540, %v549
      %v552 = vmul.f32 %v542, %v550
      %v553 = vpack.c.bf16 %v552, %v551
      %554 = vrot.lane.b32.xlu0 %v351, 56
      %v555 = vpop.permute.xlu0 %554
      %v558 = vsel %vm405, %v553, 0
      %560 = vmatprep.subr.bf16.mxu0 0
      %561 = vmatpush1.bf16.msra.mxu0 %v555
      %562 = vmatprep.subr.bf16.mxu0 0
      %563 = vmatpush1.bf16.msra.mxu0 0
      %564 = vmatprep.subr.bf16.mxu0 0
      %565 = vmatpush1.bf16.msra.mxu0 0
      %566 = vmatprep.subr.bf16.mxu0 0
      %567 = vmatpush1.bf16.msra.mxu0 0
      %568 = vmatprep.subr.bf16.mxu0 0
      %569 = vmatpush1.bf16.msra.mxu0 0
      %570 = vmatprep.subr.bf16.mxu0 0
      %571 = vmatpush1.bf16.msra.mxu0 0
      %572 = vmatprep.subr.bf16.mxu0 0
      %573 = vmatpush1.bf16.msra.mxu0 0
      %574 = vmatprep.subr.bf16.mxu0 0
      %575 = vmatpush1.bf16.msra.mxu0 0
      %576 = vmatprep.subr.bf16.mxu0 0
      %577 = vmatpush1.bf16.msra.mxu0 0
      %578 = vmatprep.subr.bf16.mxu0 0
      %579 = vmatpush1.bf16.msra.mxu0 0
      %580 = vmatprep.subr.bf16.mxu0 0
      %581 = vmatpush1.bf16.msra.mxu0 0
      %582 = vmatprep.subr.bf16.mxu0 0
      %583 = vmatpush1.bf16.msra.mxu0 0
      %584 = vmatprep.subr.bf16.mxu0 0
      %585 = vmatpush1.bf16.msra.mxu0 0
      %586 = vmatprep.subr.bf16.mxu0 0
      %587 = vmatpush1.bf16.msra.mxu0 0
      %588 = vmatprep.subr.bf16.mxu0 0
      %589 = vmatpush1.bf16.msra.mxu0 0
      %590 = vmatprep.subr.bf16.mxu0 0
      %591 = vmatpush1.bf16.msra.mxu0 0
      %592 = vmatprep.mubr.bf16.mxu0 0
      %593 = vmatmul.mubr.bf16.gmra.mrb[0].mxu0 %v558
      %v594 = vpop.f32.mrb[0].mxu0
      %v595 = vadd.f32 0.0, %v594
      %v596 = vpop.f32.mrb[0].mxu0
      %v597 = vpop.f32.mrb[0].mxu0
      %v598 = vadd.f32 0.0, %v597
      %v599 = vpop.f32.mrb[0].mxu0
      %600 = vdwg.mxu0
      %603 = vrot.lane.b32.xlu0 %v595, 8
      %v604 = vpop.permute.xlu0 %603
      %605 = vrot.lane.b32.xlu0 %v598, 8
      %v606 = vpop.permute.xlu0 %605
      %vm609 = vcmask 130112
      %610 = vst.msk [vmem:[#allocation2] sm:$0xff] %vm609, %v604
      %611 = vst.msk [vmem:[#allocation2 + $0x8] sm:$0xff] %vm609, %v606
      %612 = vrot.lane.b32.xlu0 %v351, 112
      %v613 = vpop.permute.xlu0 %612
      %614 = vrot.lane.b32.xlu0 %v351, 80
      %v615 = vpop.permute.xlu0 %614
      %v617 = vsel %vm355, %v613, 0
      %v620 = vsel %vm355, %v615, 0
      %622 = vmatprep.subr.bf16.mxu0 0
      %623 = vmatpush1.bf16.xpose.msra.mxu0 %v620
      %624 = vmatprep.subr.bf16.mxu0 0
      %625 = vmatpush1.bf16.xpose.msra.mxu0 0
      %626 = vmatprep.subr.bf16.mxu0 0
      %627 = vmatpush1.bf16.xpose.msra.mxu0 0
      %628 = vmatprep.subr.bf16.mxu0 0
      %629 = vmatpush1.bf16.xpose.msra.mxu0 0
      %630 = vmatprep.subr.bf16.mxu0 0
      %631 = vmatpush1.bf16.xpose.msra.mxu0 0
      %632 = vmatprep.subr.bf16.mxu0 0
      %633 = vmatpush1.bf16.xpose.msra.mxu0 0
      %634 = vmatprep.subr.bf16.mxu0 0
      %635 = vmatpush1.bf16.xpose.msra.mxu0 0
      %636 = vmatprep.subr.bf16.mxu0 0
      %637 = vmatpush1.bf16.xpose.msra.mxu0 0
      %638 = vmatprep.subr.bf16.mxu0 0
      %639 = vmatpush1.bf16.xpose.msra.mxu0 0
      %640 = vmatprep.subr.bf16.mxu0 0
      %641 = vmatpush1.bf16.xpose.msra.mxu0 0
      %642 = vmatprep.subr.bf16.mxu0 0
      %643 = vmatpush1.bf16.xpose.msra.mxu0 0
      %644 = vmatprep.subr.bf16.mxu0 0
      %645 = vmatpush1.bf16.xpose.msra.mxu0 0
      %646 = vmatprep.subr.bf16.mxu0 0
      %647 = vmatpush1.bf16.xpose.msra.mxu0 0
      %648 = vmatprep.subr.bf16.mxu0 0
      %649 = vmatpush1.bf16.xpose.msra.mxu0 0
      %650 = vmatprep.subr.bf16.mxu0 0
      %651 = vmatpush1.bf16.xpose.msra.mxu0 0
      %652 = vmatprep.subr.bf16.mxu0 0
      %653 = vmatpush1.bf16.xpose.msra.mxu0 0
      %654 = vmatprep.mubr.bf16.mxu0 0
      %655 = vmatmul.mubr.bf16.gmra.mrb[0].mxu0 %v617
      %v656 = vpop.f32.mrb[0].mxu0
      %v657 = vadd.f32 0.0, %v656
      %v658 = vpop.f32.mrb[0].mxu0
      %v659 = vpop.f32.mrb[0].mxu0
      %v660 = vadd.f32 0.0, %v659
      %v661 = vpop.f32.mrb[0].mxu0
      %662 = vdwg.mxu0
      %v663 = vmul.f32 %v657, 0.35355338
      %v664 = vmul.f32 %v660, 0.35355338
      %v665 = vsel %vm405, %v663, -inf
      %666 = vmax.xlane.f32.xlu0 %v665
      %v667 = vpop.xlane.xlu0 %666
      %v668 = vsel %vm405, %v664, -inf
      %669 = vmax.xlane.f32.xlu0 %v668
      %v670 = vpop.xlane.xlu0 %669
      %v671 = vsub.f32 %v663, %v667
      %v672 = vsub.f32 %v664, %v670
      %v673 = vmul.f32 %v671, 1.442695
      %v674 = vpow.pop %v673
      %v675 = vmul.f32 %v672, 1.442695
      %v676 = vpow.pop %v675
      %v677 = vsel %vm405, %v674, 0.0
      %678 = vadd.xlane.f32.xlu0 %v677
      %v679 = vpop.xlane.xlu0 %678
      %v680 = vsel %vm405, %v676, 0.0
      %681 = vadd.xlane.f32.xlu0 %v680
      %v682 = vpop.xlane.xlu0 %681
      %v683 = vrcp.pop %v679
      %v684 = vrcp.pop %v682
      %v685 = vmul.f32 %v674, %v683
      %v686 = vmul.f32 %v676, %v684
      %v687 = vpack.c.bf16 %v686, %v685
      %688 = vrot.lane.b32.xlu0 %v351, 48
      %v689 = vpop.permute.xlu0 %688
      %v692 = vsel %vm405, %v687, 0
      %694 = vmatprep.subr.bf16.mxu0 0
      %695 = vmatpush1.bf16.msra.mxu0 %v689
      %696 = vmatprep.subr.bf16.mxu0 0
      %697 = vmatpush1.bf16.msra.mxu0 0
      %698 = vmatprep.subr.bf16.mxu0 0
      %699 = vmatpush1.bf16.msra.mxu0 0
      %700 = vmatprep.subr.bf16.mxu0 0
      %701 = vmatpush1.bf16.msra.mxu0 0
      %702 = vmatprep.subr.bf16.mxu0 0
      %703 = vmatpush1.bf16.msra.mxu0 0
      %704 = vmatprep.subr.bf16.mxu0 0
      %705 = vmatpush1.bf16.msra.mxu0 0
      %706 = vmatprep.subr.bf16.mxu0 0
      %707 = vmatpush1.bf16.msra.mxu0 0
      %708 = vmatprep.subr.bf16.mxu0 0
      %709 = vmatpush1.bf16.msra.mxu0 0
      %710 = vmatprep.subr.bf16.mxu0 0
      %711 = vmatpush1.bf16.msra.mxu0 0
      %712 = vmatprep.subr.bf16.mxu0 0
      %713 = vmatpush1.bf16.msra.mxu0 0
      %714 = vmatprep.subr.bf16.mxu0 0
      %715 = vmatpush1.bf16.msra.mxu0 0
      %716 = vmatprep.subr.bf16.mxu0 0
      %717 = vmatpush1.bf16.msra.mxu0 0
      %718 = vmatprep.subr.bf16.mxu0 0
      %719 = vmatpush1.bf16.msra.mxu0 0
      %720 = vmatprep.subr.bf16.mxu0 0
      %721 = vmatpush1.bf16.msra.mxu0 0
      %722 = vmatprep.subr.bf16.mxu0 0
      %723 = vmatpush1.bf16.msra.mxu0 0
      %724 = vmatprep.subr.bf16.mxu0 0
      %725 = vmatpush1.bf16.msra.mxu0 0
      %726 = vmatprep.mubr.bf16.mxu0 0
      %727 = vmatmul.mubr.bf16.gmra.mrb[0].mxu0 %v692
      %v728 = vpop.f32.mrb[0].mxu0
      %v729 = vadd.f32 0.0, %v728
      %v730 = vpop.f32.mrb[0].mxu0
      %v731 = vpop.f32.mrb[0].mxu0
      %v732 = vadd.f32 0.0, %v731
      %v733 = vpop.f32.mrb[0].mxu0
      %734 = vdwg.mxu0
      %737 = vrot.lane.b32.xlu0 %v729, 16
      %v738 = vpop.permute.xlu0 %737
      %739 = vrot.lane.b32.xlu0 %v732, 16
      %v740 = vpop.permute.xlu0 %739
      %vm743 = vcmask 195712
      %744 = vst.msk [vmem:[#allocation2] sm:$0xff] %vm743, %v738
      %745 = vst.msk [vmem:[#allocation2 + $0x8] sm:$0xff] %vm743, %v740
      %746 = vrot.lane.b32.xlu0 %v351, 104
      %v747 = vpop.permute.xlu0 %746
      %748 = vrot.lane.b32.xlu0 %v351, 72
      %v749 = vpop.permute.xlu0 %748
      %v751 = vsel %vm355, %v747, 0
      %v754 = vsel %vm355, %v749, 0
      %756 = vmatprep.subr.bf16.mxu0 0
      %757 = vmatpush1.bf16.xpose.msra.mxu0 %v754
      %758 = vmatprep.subr.bf16.mxu0 0
      %759 = vmatpush1.bf16.xpose.msra.mxu0 0
      %760 = vmatprep.subr.bf16.mxu0 0
      %761 = vmatpush1.bf16.xpose.msra.mxu0 0
      %762 = vmatprep.subr.bf16.mxu0 0
      %763 = vmatpush1.bf16.xpose.msra.mxu0 0
      %764 = vmatprep.subr.bf16.mxu0 0
      %765 = vmatpush1.bf16.xpose.msra.mxu0 0
      %766 = vmatprep.subr.bf16.mxu0 0
      %767 = vmatpush1.bf16.xpose.msra.mxu0 0
      %768 = vmatprep.subr.bf16.mxu0 0
      %769 = vmatpush1.bf16.xpose.msra.mxu0 0
      %770 = vmatprep.subr.bf16.mxu0 0
      %771 = vmatpush1.bf16.xpose.msra.mxu0 0
      %772 = vmatprep.subr.bf16.mxu0 0
      %773 = vmatpush1.bf16.xpose.msra.mxu0 0
      %774 = vmatprep.subr.bf16.mxu0 0
      %775 = vmatpush1.bf16.xpose.msra.mxu0 0
      %776 = vmatprep.subr.bf16.mxu0 0
      %777 = vmatpush1.bf16.xpose.msra.mxu0 0
      %778 = vmatprep.subr.bf16.mxu0 0
      %779 = vmatpush1.bf16.xpose.msra.mxu0 0
      %780 = vmatprep.subr.bf16.mxu0 0
      %781 = vmatpush1.bf16.xpose.msra.mxu0 0
      %782 = vmatprep.subr.bf16.mxu0 0
      %783 = vmatpush1.bf16.xpose.msra.mxu0 0
      %784 = vmatprep.subr.bf16.mxu0 0
      %785 = vmatpush1.bf16.xpose.msra.mxu0 0
      %786 = vmatprep.subr.bf16.mxu0 0
      %787 = vmatpush1.bf16.xpose.msra.mxu0 0
      %788 = vmatprep.mubr.bf16.mxu0 0
      %789 = vmatmul.mubr.bf16.gmra.mrb[0].mxu0 %v751
      %v790 = vpop.f32.mrb[0].mxu0
      %v791 = vadd.f32 0.0, %v790
      %v792 = vpop.f32.mrb[0].mxu0
      %v793 = vpop.f32.mrb[0].mxu0
      %v794 = vadd.f32 0.0, %v793
      %v795 = vpop.f32.mrb[0].mxu0
      %796 = vdwg.mxu0
      %v797 = vmul.f32 %v791, 0.35355338
      %v798 = vmul.f32 %v794, 0.35355338
      %v799 = vsel %vm405, %v797, -inf
      %800 = vmax.xlane.f32.xlu0 %v799
      %v801 = vpop.xlane.xlu0 %800
      %v802 = vsel %vm405, %v798, -inf
      %803 = vmax.xlane.f32.xlu0 %v802
      %v804 = vpop.xlane.xlu0 %803
      %v805 = vsub.f32 %v797, %v801
      %v806 = vsub.f32 %v798, %v804
      %v807 = vmul.f32 %v805, 1.442695
      %v808 = vpow.pop %v807
      %v809 = vmul.f32 %v806, 1.442695
      %v810 = vpow.pop %v809
      %v811 = vsel %vm405, %v808, 0.0
      %812 = vadd.xlane.f32.xlu0 %v811
      %v813 = vpop.xlane.xlu0 %812
      %v814 = vsel %vm405, %v810, 0.0
      %815 = vadd.xlane.f32.xlu0 %v814
      %v816 = vpop.xlane.xlu0 %815
      %v817 = vrcp.pop %v813
      %v818 = vrcp.pop %v816
      %v819 = vmul.f32 %v808, %v817
      %v820 = vmul.f32 %v810, %v818
      %v821 = vpack.c.bf16 %v820, %v819
      %822 = vrot.lane.b32.xlu0 %v351, 40
      %v823 = vpop.permute.xlu0 %822
      %v826 = vsel %vm405, %v821, 0
      %828 = vmatprep.subr.bf16.mxu0 0
      %829 = vmatpush1.bf16.msra.mxu0 %v823
      %830 = vmatprep.subr.bf16.mxu0 0
      %831 = vmatpush1.bf16.msra.mxu0 0
      %832 = vmatprep.subr.bf16.mxu0 0
      %833 = vmatpush1.bf16.msra.mxu0 0
      %834 = vmatprep.subr.bf16.mxu0 0
      %835 = vmatpush1.bf16.msra.mxu0 0
      %836 = vmatprep.subr.bf16.mxu0 0
      %837 = vmatpush1.bf16.msra.mxu0 0
      %838 = vmatprep.subr.bf16.mxu0 0
      %839 = vmatpush1.bf16.msra.mxu0 0
      %840 = vmatprep.subr.bf16.mxu0 0
      %841 = vmatpush1.bf16.msra.mxu0 0
      %842 = vmatprep.subr.bf16.mxu0 0
      %843 = vmatpush1.bf16.msra.mxu0 0
      %844 = vmatprep.subr.bf16.mxu0 0
      %845 = vmatpush1.bf16.msra.mxu0 0
      %846 = vmatprep.subr.bf16.mxu0 0
      %847 = vmatpush1.bf16.msra.mxu0 0
      %848 = vmatprep.subr.bf16.mxu0 0
      %849 = vmatpush1.bf16.msra.mxu0 0
      %850 = vmatprep.subr.bf16.mxu0 0
      %851 = vmatpush1.bf16.msra.mxu0 0
      %852 = vmatprep.subr.bf16.mxu0 0
      %853 = vmatpush1.bf16.msra.mxu0 0
      %854 = vmatprep.subr.bf16.mxu0 0
      %855 = vmatpush1.bf16.msra.mxu0 0
      %856 = vmatprep.subr.bf16.mxu0 0
      %857 = vmatpush1.bf16.msra.mxu0 0
      %858 = vmatprep.subr.bf16.mxu0 0
      %859 = vmatpush1.bf16.msra.mxu0 0
      %860 = vmatprep.mubr.bf16.mxu0 0
      %861 = vmatmul.mubr.bf16.gmra.mrb[0].mxu0 %v826
      %v862 = vpop.f32.mrb[0].mxu0
      %v863 = vadd.f32 0.0, %v862
      %v864 = vpop.f32.mrb[0].mxu0
      %v865 = vpop.f32.mrb[0].mxu0
      %v866 = vadd.f32 0.0, %v865
      %v867 = vpop.f32.mrb[0].mxu0
      %868 = vdwg.mxu0
      %871 = vrot.lane.b32.xlu0 %v863, 24
      %v872 = vpop.permute.xlu0 %871
      %873 = vrot.lane.b32.xlu0 %v866, 24
      %v874 = vpop.permute.xlu0 %873
      %vm877 = vcmask 261312
      %878 = vst.msk [vmem:[#allocation2] sm:$0xff] %vm877, %v872
      %879 = vst.msk [vmem:[#allocation2 + $0x8] sm:$0xff] %vm877, %v874
      %v880 = vld [vmem:[#allocation2] sm:$0xff]
      %v881 = vld [vmem:[#allocation2 + $0x8] sm:$0xff]
      %v882 = vpack.c.bf16 %v881, %v880
      %v883 = vld [vmem:[%s3] sm:$0xf]
      %v884 = vld [vmem:[%s3 + $0x4] sm:$0xf]
      %v885 = vld [vmem:[%s3 + $0x8] sm:$0xf]
      %v886 = vld [vmem:[%s3 + $0xc] sm:$0xf]
      %v887 = vld [vmem:[%s4] sm:$0x1]
      %v889 = vlaneseq
      %v890 = vshrl.u32 %v889, 7
      %v891 = vsub.s32 0, %v890
      %v892 = vrot.slane %v887, %v891
      %v898 = vunpack.c.l.b16 %v883
      %v899 = vunpack.c.l.b16 %v884
      %v900 = vunpack.c.l.b16 %v885
      %v901 = vunpack.c.l.b16 %v886
      %v902 = vpack.c.b16 %v899, %v898
      %v903 = vpack.c.b16 %v901, %v900
      %v907 = vsel %vm306, %v882, 0
      %909 = vmatprep.subr.bf16.mxu0 0
      %910 = vmatpush1.bf16.msra.mxu0 %v902
      %911 = vmatprep.subr.bf16.mxu0 0
      %912 = vmatpush1.bf16.msra.mxu0 %v903
      %913 = vmatprep.subr.bf16.mxu0 0
      %914 = vmatpush1.bf16.msra.mxu0 0
      %915 = vmatprep.subr.bf16.mxu0 0
      %916 = vmatpush1.bf16.msra.mxu0 0
      %917 = vmatprep.subr.bf16.mxu0 0
      %918 = vmatpush1.bf16.msra.mxu0 0
      %919 = vmatprep.subr.bf16.mxu0 0
      %920 = vmatpush1.bf16.msra.mxu0 0
      %921 = vmatprep.subr.bf16.mxu0 0
      %922 = vmatpush1.bf16.msra.mxu0 0
      %923 = vmatprep.subr.bf16.mxu0 0
      %924 = vmatpush1.bf16.msra.mxu0 0
      %925 = vmatprep.subr.bf16.mxu0 0
      %926 = vmatpush1.bf16.msra.mxu0 0
      %927 = vmatprep.subr.bf16.mxu0 0
      %928 = vmatpush1.bf16.msra.mxu0 0
      %929 = vmatprep.subr.bf16.mxu0 0
      %930 = vmatpush1.bf16.msra.mxu0 0
      %931 = vmatprep.subr.bf16.mxu0 0
      %932 = vmatpush1.bf16.msra.mxu0 0
      %933 = vmatprep.subr.bf16.mxu0 0
      %934 = vmatpush1.bf16.msra.mxu0 0
      %935 = vmatprep.subr.bf16.mxu0 0
      %936 = vmatpush1.bf16.msra.mxu0 0
      %937 = vmatprep.subr.bf16.mxu0 0
      %938 = vmatpush1.bf16.msra.mxu0 0
      %939 = vmatprep.subr.bf16.mxu0 0
      %940 = vmatpush1.bf16.msra.mxu0 0
      %941 = vmatprep.mubr.bf16.mxu0 0
      %942 = vmatmul.mubr.bf16.gmra.mrb[0].mxu0 %v907
      %v943 = vpop.f32.mrb[0].mxu0
      %v944 = vadd.f32 %v892, %v943
      %v945 = vpop.f32.mrb[0].mxu0
      %v946 = vpop.f32.mrb[0].mxu0
      %v947 = vadd.f32 %v892, %v946
      %v948 = vpop.f32.mrb[0].mxu0
      %949 = vdwg.mxu0
      %v950 = vadd.f32 %v944, %v280
      %v951 = vadd.f32 %v947, %v281
      %v952 = vsel %vm306, %v950, 0.0
      %953 = vadd.xlane.f32.xlu0 %v952
      %v954 = vpop.xlane.xlu0 %953
      %v955 = vsel %vm306, %v951, 0.0
      %956 = vadd.xlane.f32.xlu0 %v955
      %v957 = vpop.xlane.xlu0 %956
      %v958 = vrcp.pop 32.0
      %v959 = vmul.f32 %v954, %v958
      %v960 = vmul.f32 %v957, %v958
      %v961 = vsub.f32 %v950, %v959
      %v962 = vsub.f32 %v951, %v960
      %v963 = vmul.f32 %v961, %v961
      %v964 = vmul.f32 %v962, %v962
      %v965 = vsel %vm306, %v963, 0.0
      %966 = vadd.xlane.f32.xlu0 %v965
      %v967 = vpop.xlane.xlu0 %966
      %v968 = vsel %vm306, %v964, 0.0
      %969 = vadd.xlane.f32.xlu0 %v968
      %v970 = vpop.xlane.xlu0 %969
      %v971 = vmul.f32 %v967, %v958
      %v972 = vmul.f32 %v970, %v958
      %v973 = vadd.f32 %v971, 1e-05
      %v974 = vadd.f32 %v972, 1e-05
      %v975 = vrsqrt.pop %v973
      %v976 = vrsqrt.pop %v974
      %v977 = vmul.f32 %v961, %v975
      %v978 = vmul.f32 %v962, %v976
      %v979 = vld [vmem:[%s5] sm:$0x1]
      %v981 = vlaneseq
      %v982 = vshrl.u32 %v981, 7
      %v983 = vsub.s32 0, %v982
      %v984 = vrot.slane %v979, %v983
      %v986 = vmul.f32 %v977, %v984
      %v987 = vmul.f32 %v978, %v984
      %v988 = vld [vmem:[%s6] sm:$0x1]
      %v990 = vlaneseq
      %v991 = vshrl.u32 %v990, 7
      %v992 = vsub.s32 0, %v991
      %v993 = vrot.slane %v988, %v992
      %v995 = vadd.f32 %v986, %v993
      %v996 = vadd.f32 %v987, %v993
      %997 = vst.msk [vmem:[%s278] sm:$0xff] %vm306, %v995
      %998 = vst.msk [vmem:[%s278 + $0x8] sm:$0xff] %vm306, %v996
      %p999 = scmp.lt.s32.totalorder %s18, 1
      %s1000 = scalar_select %p999, %s18, 1
      %s1001 = smul.addr %s1000, 2
      %s1002 = smul.addr %s1001, 8
      %s1003 = scalar_lea.vmem %s7, %s1002
      // Predicated region
      $region49: #{transformer_ocr_forward.13} parent=47 // pred_check
        %p1004 = pneg %p188
      $region50: #{transformer_ocr_forward.13} parent=47 // pred_check_branch
        %1006 = sbr.rel (%p1004) target = $region52
      $region51: #{transformer_ocr_forward.13} parent=47 // pred_region
        _
      $region52: #{transformer_ocr_forward.13} parent=47 // pred_fallthru
        _
    $region48: #{transformer_ocr_forward.13} parent=5 // pred_fallthru
      _
    %p1007 = scmp.le.s32.totalorder 2, %s13
    // Predicated region
    $region53: #{transformer_ocr_forward.13} parent=5 // pred_check
      %p1008 = pneg %p1007
    $region54: #{transformer_ocr_forward.13} parent=5 // pred_check_branch
      %1010 = sbr.rel (%p1008) target = $region56
    $region55: #{transformer_ocr_forward.13} parent=5 // pred_region
      %s1011 = ssub.s32 %s13, 2
      // Predicated region
      $region57: #{transformer_ocr_forward.13} parent=55 // pred_check
        %p1012 = pneg %p194
      $region58: #{transformer_ocr_forward.13} parent=55 // pred_check_branch
        %1014 = sbr.rel (%p1012) target = $region60
      $region59: #{transformer_ocr_forward.13} parent=55 // pred_region
        %p1015 = scmp.lt.s32.totalorder %s19, 1
        %s1016 = scalar_select %p1015, %s19, 1
        %s1017 = smul.addr %s1016, 2
        %s1018 = smul.addr %s1017, 8
        %s1019 = scalar_lea.vmem %s7, %s1018
      $region60: #{transformer_ocr_forward.13} parent=55 // pred_fallthru
        _
    $region56: #{transformer_ocr_forward.13} parent=5 // pred_fallthru
      _
  $region6: #{transformer_ocr_forward.13} parent=0 // loop_footer
    %s17 = sadd.s32 1, %s13
  $region7: #{transformer_ocr_forward.13} parent=0 // loop_footer_branch
    %12 = sbr.rel target = $region3
  $region8: #{transformer_ocr_forward.13} parent=0 // loop_exit
    _

// kernel: transformer_ocr_forward.14
$region0: #{transformer_ocr_forward.14}
  #allocation0 [shape = 'u32[]', space=smem, size = 0x4, offset = 0x4, fixed_abs, tag = 'smem constant byte address 0x4 - core index']
  #allocation1 [shape = 'u32[144,128]{1,0:T(1,128)}', space=vmem, size = 0x12000, scoped, tag = 'internal scratch']
  #allocation2 [shape = 'f32[32,32]{1,0:T(8,128)}', space=vmem, size = 0x4000, scoped, tag = 'scratch operand']
  %s0 = inlined_call_operand.vmem [shape: f32[32,32], index: 0, kind: input, shape index: {}]
  %s1 = inlined_call_operand.vmem [shape: bf16[32,64], index: 1, kind: input, shape index: {}]
  %s2 = inlined_call_operand.vmem [shape: f32[1,64], index: 2, kind: input, shape index: {}]
  %s3 = inlined_call_operand.vmem [shape: bf16[64,32], index: 3, kind: input, shape index: {}]
  %s4 = inlined_call_operand.vmem [shape: f32[1,32], index: 4, kind: input, shape index: {}]
  %s5 = inlined_call_operand.vmem [shape: f32[1,32], index: 5, kind: input, shape index: {}]
  %s6 = inlined_call_operand.vmem [shape: f32[1,32], index: 6, kind: input, shape index: {}]
  %s7 = inlined_call_operand.vmem [shape: f32[32,32], index: 7, kind: output, shape index: {}]
  %s8 = sld [smem:[#allocation0]]
  $region46: #{transformer_ocr_forward.14} parent=0
    _
  %s10 = ssub.s32 1, %s8
  %s11 = scalar_select 0, %s10, %s8
  // Predicated region
  $region2: #{transformer_ocr_forward.14} parent=0 // pred_check
    _
  $region3: #{transformer_ocr_forward.14} parent=0 // pred_check_branch
    %13 = sbr.rel (0) target = $region5
  $region4: #{transformer_ocr_forward.14} parent=0 // pred_region
    _
  $region5: #{transformer_ocr_forward.14} parent=0 // pred_fallthru
    _
  // Predicated region
  $region6: #{transformer_ocr_forward.14} parent=0 // pred_check
    _
  $region7: #{transformer_ocr_forward.14} parent=0 // pred_check_branch
    %15 = sbr.rel (0) target = $region9
  $region8: #{transformer_ocr_forward.14} parent=0 // pred_region
    _
  $region9: #{transformer_ocr_forward.14} parent=0 // pred_fallthru
    _
  // Predicated region
  $region10: #{transformer_ocr_forward.14} parent=0 // pred_check
    _
  $region11: #{transformer_ocr_forward.14} parent=0 // pred_check_branch
    %17 = sbr.rel (0) target = $region13
  $region12: #{transformer_ocr_forward.14} parent=0 // pred_region
    _
  $region13: #{transformer_ocr_forward.14} parent=0 // pred_fallthru
    _
  // Predicated region
  $region14: #{transformer_ocr_forward.14} parent=0 // pred_check
    _
  $region15: #{transformer_ocr_forward.14} parent=0 // pred_check_branch
    %19 = sbr.rel (0) target = $region17
  $region16: #{transformer_ocr_forward.14} parent=0 // pred_region
    _
  $region17: #{transformer_ocr_forward.14} parent=0 // pred_fallthru
    _
  // Predicated region
  $region18: #{transformer_ocr_forward.14} parent=0 // pred_check
    _
  $region19: #{transformer_ocr_forward.14} parent=0 // pred_check_branch
    %21 = sbr.rel (0) target = $region21
  $region20: #{transformer_ocr_forward.14} parent=0 // pred_region
    _
  $region21: #{transformer_ocr_forward.14} parent=0 // pred_fallthru
    _
  // Predicated region
  $region22: #{transformer_ocr_forward.14} parent=0 // pred_check
    _
  $region23: #{transformer_ocr_forward.14} parent=0 // pred_check_branch
    %23 = sbr.rel (0) target = $region25
  $region24: #{transformer_ocr_forward.14} parent=0 // pred_region
    _
  $region25: #{transformer_ocr_forward.14} parent=0 // pred_fallthru
    _
  // Predicated region
  $region26: #{transformer_ocr_forward.14} parent=0 // pred_check
    _
  $region27: #{transformer_ocr_forward.14} parent=0 // pred_check_branch
    %25 = sbr.rel (0) target = $region29
  $region28: #{transformer_ocr_forward.14} parent=0 // pred_region
    _
  $region29: #{transformer_ocr_forward.14} parent=0 // pred_fallthru
    _
  %p27 = scmp.eq.s32.totalorder 0, 0
  // Predicated region
  $region30: #{transformer_ocr_forward.14} parent=0 // pred_check
    %p28 = pneg %p27
  $region31: #{transformer_ocr_forward.14} parent=0 // pred_check_branch
    %30 = sbr.rel (%p28) target = $region33
  $region32: #{transformer_ocr_forward.14} parent=0 // pred_region
    %vm31 = vcmask 261120
    %32 = vst.msk [vmem:[#allocation2] sm:$0xff] %vm31, 0.0
    %33 = vst.msk [vmem:[#allocation2 + $0x8] sm:$0xff] %vm31, 0.0
    %34 = vst.msk [vmem:[#allocation2 + $0x10] sm:$0xff] %vm31, 0.0
    %35 = vst.msk [vmem:[#allocation2 + $0x18] sm:$0xff] %vm31, 0.0
  $region33: #{transformer_ocr_forward.14} parent=0 // pred_fallthru
    _
  %v36 = vld [vmem:[%s0] sm:$0xff]
  %v37 = vld [vmem:[%s0 + $0x8] sm:$0xff]
  %v38 = vld [vmem:[%s0 + $0x10] sm:$0xff]
  %v39 = vld [vmem:[%s0 + $0x18] sm:$0xff]
  %v40 = vpack.c.bf16 %v37, %v36
  %v41 = vpack.c.bf16 %v39, %v38
  %v42 = vld [vmem:[%s1] sm:$0xf]
  %v43 = vld [vmem:[%s1 + $0x4] sm:$0xf]
  %v44 = vld [vmem:[%s1 + $0x8] sm:$0xf]
  %v45 = vld [vmem:[%s1 + $0xc] sm:$0xf]
  %v46 = vld [vmem:[%s2] sm:$0x1]
  %v48 = vlaneseq
  %v49 = vshrl.u32 %v48, 7
  %v50 = vsub.s32 0, %v49
  %v51 = vrot.slane %v46, %v50
  %v57 = vunpack.c.l.b16 %v42
  %v58 = vunpack.c.l.b16 %v43
  %v59 = vunpack.c.l.b16 %v44
  %v60 = vunpack.c.l.b16 %v45
  %v61 = vpack.c.b16 %v58, %v57
  %v62 = vpack.c.b16 %v60, %v59
  %vm65 = vcmask 261120
  %v67 = vsel %vm65, %v40, 0
  %v70 = vsel %vm65, %v41, 0
  %72 = vmatprep.subr.bf16.mxu0 0
  %73 = vmatpush1.bf16.msra.mxu0 %v61
  %74 = vmatprep.subr.bf16.mxu0 0
  %75 = vmatpush1.bf16.msra.mxu0 %v62
  %76 = vmatprep.subr.bf16.mxu0 0
  %77 = vmatpush1.bf16.msra.mxu0 0
  %78 = vmatprep.subr.bf16.mxu0 0
  %79 = vmatpush1.bf16.msra.mxu0 0
  %80 = vmatprep.subr.bf16.mxu0 0
  %81 = vmatpush1.bf16.msra.mxu0 0
  %82 = vmatprep.subr.bf16.mxu0 0
  %83 = vmatpush1.bf16.msra.mxu0 0
  %84 = vmatprep.subr.bf16.mxu0 0
  %85 = vmatpush1.bf16.msra.mxu0 0
  %86 = vmatprep.subr.bf16.mxu0 0
  %87 = vmatpush1.bf16.msra.mxu0 0
  %88 = vmatprep.subr.bf16.mxu0 0
  %89 = vmatpush1.bf16.msra.mxu0 0
  %90 = vmatprep.subr.bf16.mxu0 0
  %91 = vmatpush1.bf16.msra.mxu0 0
  %92 = vmatprep.subr.bf16.mxu0 0
  %93 = vmatpush1.bf16.msra.mxu0 0
  %94 = vmatprep.subr.bf16.mxu0 0
  %95 = vmatpush1.bf16.msra.mxu0 0
  %96 = vmatprep.subr.bf16.mxu0 0
  %97 = vmatpush1.bf16.msra.mxu0 0
  %98 = vmatprep.subr.bf16.mxu0 0
  %99 = vmatpush1.bf16.msra.mxu0 0
  %100 = vmatprep.subr.bf16.mxu0 0
  %101 = vmatpush1.bf16.msra.mxu0 0
  %102 = vmatprep.subr.bf16.mxu0 0
  %103 = vmatpush1.bf16.msra.mxu0 0
  %104 = vmatprep.mubr.bf16.mxu0 0
  %105 = vmatmul.mubr.bf16.gmra.mrb[0].mxu0 %v67
  %v106 = vpop.f32.mrb[0].mxu0
  %v107 = vadd.f32 %v51, %v106
  %v108 = vpop.f32.mrb[0].mxu0
  %v109 = vpop.f32.mrb[0].mxu0
  %v110 = vadd.f32 %v51, %v109
  %v111 = vpop.f32.mrb[0].mxu0
  %112 = vmatprep.mubr.bf16.mxu0 0
  %113 = vmatmul.mubr.bf16.gmra.mrb[0].mxu0 %v70
  %v114 = vpop.f32.mrb[0].mxu0
  %v115 = vadd.f32 %v51, %v114
  %v116 = vpop.f32.mrb[0].mxu0
  %v117 = vpop.f32.mrb[0].mxu0
  %v118 = vadd.f32 %v51, %v117
  %v119 = vpop.f32.mrb[0].mxu0
  %120 = vdwg.mxu0
  %v121 = vmax.f32 %v107, 0.0
  %v122 = vmax.f32 %v110, 0.0
  %v123 = vmax.f32 %v115, 0.0
  %v124 = vmax.f32 %v118, 0.0
  %v125 = vld [vmem:[#allocation2] sm:$0xff]
  %v126 = vld [vmem:[#allocation2 + $0x8] sm:$0xff]
  %v127 = vld [vmem:[#allocation2 + $0x10] sm:$0xff]
  %v128 = vld [vmem:[#allocation2 + $0x18] sm:$0xff]
  %v129 = vpack.c.bf16 %v122, %v121
  %v130 = vpack.c.bf16 %v124, %v123
  %v131 = vld [vmem:[%s3] sm:$0xf]
  %v132 = vld [vmem:[%s3 + $0x4] sm:$0xf]
  %v133 = vld [vmem:[%s3 + $0x8] sm:$0xf]
  %v134 = vld [vmem:[%s3 + $0xc] sm:$0xf]
  %v135 = vld [vmem:[%s3 + $0x10] sm:$0xf]
  %v136 = vld [vmem:[%s3 + $0x14] sm:$0xf]
  %v137 = vld [vmem:[%s3 + $0x18] sm:$0xf]
  %v138 = vld [vmem:[%s3 + $0x1c] sm:$0xf]
  %v147 = vunpack.c.l.b16 %v131
  %v148 = vunpack.c.l.b16 %v132
  %v149 = vunpack.c.l.b16 %v133
  %v150 = vunpack.c.l.b16 %v134
  %v151 = vunpack.c.l.b16 %v135
  %v152 = vunpack.c.l.b16 %v136
  %v153 = vunpack.c.l.b16 %v137
  %v154 = vunpack.c.l.b16 %v138
  %v155 = vpack.c.b16 %v148, %v147
  %v156 = vpack.c.b16 %v150, %v149
  %v157 = vpack.c.b16 %v152, %v151
  %v158 = vpack.c.b16 %v154, %v153
  %vm163 = vcmask 523264
  %v165 = vsel %vm163, %v129, 0
  %v168 = vsel %vm163, %v130, 0
  %170 = vmatprep.subr.bf16.mxu0 0
  %171 = vmatpush1.bf16.msra.mxu0 %v155
  %172 = vmatprep.subr.bf16.mxu0 0
  %173 = vmatpush1.bf16.msra.mxu0 %v156
  %174 = vmatprep.subr.bf16.mxu0 0
  %175 = vmatpush1.bf16.msra.mxu0 %v157
  %176 = vmatprep.subr.bf16.mxu0 0
  %177 = vmatpush1.bf16.msra.mxu0 %v158
  %178 = vmatprep.subr.bf16.mxu0 0
  %179 = vmatpush1.bf16.msra.mxu0 0
  %180 = vmatprep.subr.bf16.mxu0 0
  %181 = vmatpush1.bf16.msra.mxu0 0
  %182 = vmatprep.subr.bf16.mxu0 0
  %183 = vmatpush1.bf16.msra.mxu0 0
  %184 = vmatprep.subr.bf16.mxu0 0
  %185 = vmatpush1.bf16.msra.mxu0 0
  %186 = vmatprep.subr.bf16.mxu0 0
  %187 = vmatpush1.bf16.msra.mxu0 0
  %188 = vmatprep.subr.bf16.mxu0 0
  %189 = vmatpush1.bf16.msra.mxu0 0
  %190 = vmatprep.subr.bf16.mxu0 0
  %191 = vmatpush1.bf16.msra.mxu0 0
  %192 = vmatprep.subr.bf16.mxu0 0
  %193 = vmatpush1.bf16.msra.mxu0 0
  %194 = vmatprep.subr.bf16.mxu0 0
  %195 = vmatpush1.bf16.msra.mxu0 0
  %196 = vmatprep.subr.bf16.mxu0 0
  %197 = vmatpush1.bf16.msra.mxu0 0
  %198 = vmatprep.subr.bf16.mxu0 0
  %199 = vmatpush1.bf16.msra.mxu0 0
  %200 = vmatprep.subr.bf16.mxu0 0
  %201 = vmatpush1.bf16.msra.mxu0 0
  %202 = vmatprep.mubr.bf16.mxu0 0
  %203 = vmatmul.mubr.bf16.gmra.mrb[0].mxu0 %v165
  %v204 = vpop.f32.mrb[0].mxu0
  %v205 = vadd.f32 0.0, %v204
  %v206 = vpop.f32.mrb[0].mxu0
  %v207 = vpop.f32.mrb[0].mxu0
  %v208 = vadd.f32 0.0, %v207
  %v209 = vpop.f32.mrb[0].mxu0
  %210 = vmatprep.mubr.bf16.mxu0 0
  %211 = vmatmul.mubr.bf16.gmra.mrb[0].mxu0 %v168
  %v212 = vpop.f32.mrb[0].mxu0
  %v213 = vadd.f32 0.0, %v212
  %v214 = vpop.f32.mrb[0].mxu0
  %v215 = vpop.f32.mrb[0].mxu0
  %v216 = vadd.f32 0.0, %v215
  %v217 = vpop.f32.mrb[0].mxu0
  %218 = vdwg.mxu0
  %v219 = vadd.f32 %v125, %v205
  %v220 = vadd.f32 %v126, %v208
  %v221 = vadd.f32 %v127, %v213
  %v222 = vadd.f32 %v128, %v216
  %223 = vst.msk [vmem:[#allocation2] sm:$0xff] %vm65, %v219
  %224 = vst.msk [vmem:[#allocation2 + $0x8] sm:$0xff] %vm65, %v220
  %225 = vst.msk [vmem:[#allocation2 + $0x10] sm:$0xff] %vm65, %v221
  %226 = vst.msk [vmem:[#allocation2 + $0x18] sm:$0xff] %vm65, %v222
  // Predicated region
  $region34: #{transformer_ocr_forward.14} parent=0 // pred_check
    %p227 = pneg %p27
  $region35: #{transformer_ocr_forward.14} parent=0 // pred_check_branch
    %229 = sbr.rel (%p227) target = $region37
  $region36: #{transformer_ocr_forward.14} parent=0 // pred_region
    %v230 = vld [vmem:[#allocation2] sm:$0xff]
    %v231 = vld [vmem:[#allocation2 + $0x8] sm:$0xff]
    %v232 = vld [vmem:[#allocation2 + $0x10] sm:$0xff]
    %v233 = vld [vmem:[#allocation2 + $0x18] sm:$0xff]
    %v234 = vld [vmem:[%s4] sm:$0x1]
    %v236 = vlaneseq
    %v237 = vshrl.u32 %v236, 7
    %v238 = vsub.s32 0, %v237
    %v239 = vrot.slane %v234, %v238
    %v241 = vadd.f32 %v230, %v239
    %v242 = vadd.f32 %v231, %v239
    %v243 = vadd.f32 %v232, %v239
    %v244 = vadd.f32 %v233, %v239
    %v245 = vadd.f32 %v241, %v36
    %v246 = vadd.f32 %v242, %v37
    %v247 = vadd.f32 %v243, %v38
    %v248 = vadd.f32 %v244, %v39
    %v249 = vsel %vm65, %v245, 0.0
    %250 = vadd.xlane.f32.xlu0 %v249
    %v251 = vpop.xlane.xlu0 %250
    %v252 = vsel %vm65, %v246, 0.0
    %253 = vadd.xlane.f32.xlu0 %v252
    %v254 = vpop.xlane.xlu0 %253
    %v255 = vsel %vm65, %v247, 0.0
    %256 = vadd.xlane.f32.xlu0 %v255
    %v257 = vpop.xlane.xlu0 %256
    %v258 = vsel %vm65, %v248, 0.0
    %259 = vadd.xlane.f32.xlu0 %v258
    %v260 = vpop.xlane.xlu0 %259
    %v261 = vrcp.pop 32.0
    %v262 = vmul.f32 %v251, %v261
    %v263 = vmul.f32 %v254, %v261
    %v264 = vmul.f32 %v257, %v261
    %v265 = vmul.f32 %v260, %v261
    %v266 = vsub.f32 %v245, %v262
    %v267 = vsub.f32 %v246, %v263
    %v268 = vsub.f32 %v247, %v264
    %v269 = vsub.f32 %v248, %v265
    %v270 = vmul.f32 %v266, %v266
    %v271 = vmul.f32 %v267, %v267
    %v272 = vmul.f32 %v268, %v268
    %v273 = vmul.f32 %v269, %v269
    %v274 = vsel %vm65, %v270, 0.0
    %275 = vadd.xlane.f32.xlu0 %v274
    %v276 = vpop.xlane.xlu0 %275
    %v277 = vsel %vm65, %v271, 0.0
    %278 = vadd.xlane.f32.xlu0 %v277
    %v279 = vpop.xlane.xlu0 %278
    %v280 = vsel %vm65, %v272, 0.0
    %281 = vadd.xlane.f32.xlu0 %v280
    %v282 = vpop.xlane.xlu0 %281
    %v283 = vsel %vm65, %v273, 0.0
    %284 = vadd.xlane.f32.xlu0 %v283
    %v285 = vpop.xlane.xlu0 %284
    %v286 = vmul.f32 %v276, %v261
    %v287 = vmul.f32 %v279, %v261
    %v288 = vmul.f32 %v282, %v261
    %v289 = vmul.f32 %v285, %v261
    %v290 = vadd.f32 %v286, 1e-05
    %v291 = vadd.f32 %v287, 1e-05
    %v292 = vadd.f32 %v288, 1e-05
    %v293 = vadd.f32 %v289, 1e-05
    %v294 = vrsqrt.pop %v290
    %v295 = vrsqrt.pop %v291
    %v296 = vrsqrt.pop %v292
    %v297 = vrsqrt.pop %v293
    %v298 = vmul.f32 %v266, %v294
    %v299 = vmul.f32 %v267, %v295
    %v300 = vmul.f32 %v268, %v296
    %v301 = vmul.f32 %v269, %v297
    %v302 = vld [vmem:[%s5] sm:$0x1]
    %v304 = vlaneseq
    %v305 = vshrl.u32 %v304, 7
    %v306 = vsub.s32 0, %v305
    %v307 = vrot.slane %v302, %v306
    %v309 = vmul.f32 %v298, %v307
    %v310 = vmul.f32 %v299, %v307
    %v311 = vmul.f32 %v300, %v307
    %v312 = vmul.f32 %v301, %v307
    %v313 = vld [vmem:[%s6] sm:$0x1]
    %v315 = vlaneseq
    %v316 = vshrl.u32 %v315, 7
    %v317 = vsub.s32 0, %v316
    %v318 = vrot.slane %v313, %v317
    %v320 = vadd.f32 %v309, %v318
    %v321 = vadd.f32 %v310, %v318
    %v322 = vadd.f32 %v311, %v318
    %v323 = vadd.f32 %v312, %v318
    %324 = vst.msk [vmem:[%s7] sm:$0xff] %vm65, %v320
    %325 = vst.msk [vmem:[%s7 + $0x8] sm:$0xff] %vm65, %v321
    %326 = vst.msk [vmem:[%s7 + $0x10] sm:$0xff] %vm65, %v322
    %327 = vst.msk [vmem:[%s7 + $0x18] sm:$0xff] %vm65, %v323
  $region37: #{transformer_ocr_forward.14} parent=0 // pred_fallthru
    _
  // Predicated region
  $region38: #{transformer_ocr_forward.14} parent=0 // pred_check
    _
  $region39: #{transformer_ocr_forward.14} parent=0 // pred_check_branch
    %329 = sbr.rel (0) target = $region41
  $region40: #{transformer_ocr_forward.14} parent=0 // pred_region
    _
  $region41: #{transformer_ocr_forward.14} parent=0 // pred_fallthru
    _
  // Predicated region
  $region42: #{transformer_ocr_forward.14} parent=0 // pred_check
    _
  $region43: #{transformer_ocr_forward.14} parent=0 // pred_check_branch
    %331 = sbr.rel (0) target = $region45
  $region44: #{transformer_ocr_forward.14} parent=0 // pred_region
    _
  $region45: #{transformer_ocr_forward.14} parent=0 // pred_fallthru
    _

// kernel: transformer_ocr_forward.23
$region0: #{transformer_ocr_forward.23}
  #allocation0 [shape = 'u32[]', space=smem, size = 0x4, offset = 0x4, fixed_abs, tag = 'smem constant byte address 0x4 - core index']
  #allocation1 [shape = 'u32[144,128]{1,0:T(1,128)}', space=vmem, size = 0x12000, scoped, tag = 'internal scratch']
  #allocation2 [shape = 'f32[16,128]{1,0:T(8,128)}', space=vmem, size = 0x2000, scoped, tag = 'scratch operand']
  %s0 = inlined_call_operand.vmem [shape: f32[16,32], index: 0, kind: input, shape index: {}]
  %s1 = inlined_call_operand.vmem [shape: bf16[32,128], index: 1, kind: input, shape index: {}]
  %s2 = inlined_call_operand.vmem [shape: f32[1,128], index: 2, kind: input, shape index: {}]
  %s3 = inlined_call_operand.vmem [shape: f32[16,128], index: 3, kind: output, shape index: {}]
  %s4 = sld [smem:[#allocation0]]
  $region30: #{transformer_ocr_forward.23} parent=0
    _
  %s6 = ssub.s32 1, %s4
  %s7 = scalar_select 0, %s6, %s4
  // Predicated region
  $region2: #{transformer_ocr_forward.23} parent=0 // pred_check
    _
  $region3: #{transformer_ocr_forward.23} parent=0 // pred_check_branch
    %9 = sbr.rel (0) target = $region5
  $region4: #{transformer_ocr_forward.23} parent=0 // pred_region
    _
  $region5: #{transformer_ocr_forward.23} parent=0 // pred_fallthru
    _
  // Predicated region
  $region6: #{transformer_ocr_forward.23} parent=0 // pred_check
    _
  $region7: #{transformer_ocr_forward.23} parent=0 // pred_check_branch
    %11 = sbr.rel (0) target = $region9
  $region8: #{transformer_ocr_forward.23} parent=0 // pred_region
    _
  $region9: #{transformer_ocr_forward.23} parent=0 // pred_fallthru
    _
  // Predicated region
  $region10: #{transformer_ocr_forward.23} parent=0 // pred_check
    _
  $region11: #{transformer_ocr_forward.23} parent=0 // pred_check_branch
    %13 = sbr.rel (0) target = $region13
  $region12: #{transformer_ocr_forward.23} parent=0 // pred_region
    _
  $region13: #{transformer_ocr_forward.23} parent=0 // pred_fallthru
    _
  %p15 = scmp.eq.s32.totalorder 0, 0
  // Predicated region
  $region14: #{transformer_ocr_forward.23} parent=0 // pred_check
    %p16 = pneg %p15
  $region15: #{transformer_ocr_forward.23} parent=0 // pred_check_branch
    %18 = sbr.rel (%p16) target = $region17
  $region16: #{transformer_ocr_forward.23} parent=0 // pred_region
    %19 = vst [vmem:[#allocation2] sm:$0xff] 0.0
    %20 = vst [vmem:[#allocation2 + $0x8] sm:$0xff] 0.0
  $region17: #{transformer_ocr_forward.23} parent=0 // pred_fallthru
    _
  %v21 = vld [vmem:[#allocation2] sm:$0xff]
  %v22 = vld [vmem:[#allocation2 + $0x8] sm:$0xff]
  %v23 = vld [vmem:[%s0] sm:$0xff]
  %v24 = vld [vmem:[%s0 + $0x8] sm:$0xff]
  %v25 = vpack.c.bf16 %v24, %v23
  %v26 = vld [vmem:[%s1] sm:$0xf]
  %v27 = vld [vmem:[%s1 + $0x4] sm:$0xf]
  %v28 = vld [vmem:[%s1 + $0x8] sm:$0xf]
  %v29 = vld [vmem:[%s1 + $0xc] sm:$0xf]
  %v34 = vunpack.c.l.b16 %v26
  %v35 = vunpack.c.l.b16 %v27
  %v36 = vunpack.c.l.b16 %v28
  %v37 = vunpack.c.l.b16 %v29
  %v38 = vpack.c.b16 %v35, %v34
  %v39 = vpack.c.b16 %v37, %v36
  %vm42 = vcmask 261120
  %v44 = vsel %vm42, %v25, 0
  %46 = vmatprep.subr.bf16.mxu0 0
  %47 = vmatpush1.bf16.msra.mxu0 %v38
  %48 = vmatprep.subr.bf16.mxu0 0
  %49 = vmatpush1.bf16.msra.mxu0 %v39
  %50 = vmatprep.subr.bf16.mxu0 0
  %51 = vmatpush1.bf16.msra.mxu0 0
  %52 = vmatprep.subr.bf16.mxu0 0
  %53 = vmatpush1.bf16.msra.mxu0 0
  %54 = vmatprep.subr.bf16.mxu0 0
  %55 = vmatpush1.bf16.msra.mxu0 0
  %56 = vmatprep.subr.bf16.mxu0 0
  %57 = vmatpush1.bf16.msra.mxu0 0
  %58 = vmatprep.subr.bf16.mxu0 0
  %59 = vmatpush1.bf16.msra.mxu0 0
  %60 = vmatprep.subr.bf16.mxu0 0
  %61 = vmatpush1.bf16.msra.mxu0 0
  %62 = vmatprep.subr.bf16.mxu0 0
  %63 = vmatpush1.bf16.msra.mxu0 0
  %64 = vmatprep.subr.bf16.mxu0 0
  %65 = vmatpush1.bf16.msra.mxu0 0
  %66 = vmatprep.subr.bf16.mxu0 0
  %67 = vmatpush1.bf16.msra.mxu0 0
  %68 = vmatprep.subr.bf16.mxu0 0
  %69 = vmatpush1.bf16.msra.mxu0 0
  %70 = vmatprep.subr.bf16.mxu0 0
  %71 = vmatpush1.bf16.msra.mxu0 0
  %72 = vmatprep.subr.bf16.mxu0 0
  %73 = vmatpush1.bf16.msra.mxu0 0
  %74 = vmatprep.subr.bf16.mxu0 0
  %75 = vmatpush1.bf16.msra.mxu0 0
  %76 = vmatprep.subr.bf16.mxu0 0
  %77 = vmatpush1.bf16.msra.mxu0 0
  %78 = vmatprep.mubr.bf16.mxu0 0
  %79 = vmatmul.mubr.bf16.gmra.mrb[0].mxu0 %v44
  %v80 = vpop.f32.mrb[0].mxu0
  %v81 = vadd.f32 0.0, %v80
  %v82 = vpop.f32.mrb[0].mxu0
  %v83 = vpop.f32.mrb[0].mxu0
  %v84 = vadd.f32 0.0, %v83
  %v85 = vpop.f32.mrb[0].mxu0
  %86 = vdwg.mxu0
  %v87 = vadd.f32 %v21, %v81
  %v88 = vadd.f32 %v22, %v84
  %89 = vst [vmem:[#allocation2] sm:$0xff] %v87
  %90 = vst [vmem:[#allocation2 + $0x8] sm:$0xff] %v88
  // Predicated region
  $region18: #{transformer_ocr_forward.23} parent=0 // pred_check
    %p91 = pneg %p15
  $region19: #{transformer_ocr_forward.23} parent=0 // pred_check_branch
    %93 = sbr.rel (%p91) target = $region21
  $region20: #{transformer_ocr_forward.23} parent=0 // pred_region
    %v94 = vld [vmem:[#allocation2] sm:$0xff]
    %v95 = vld [vmem:[#allocation2 + $0x8] sm:$0xff]
    %v96 = vld [vmem:[%s2] sm:$0x1]
    %v98 = vlaneseq
    %v99 = vshrl.u32 %v98, 7
    %v100 = vsub.s32 0, %v99
    %v101 = vrot.slane %v96, %v100
    %v103 = vadd.f32 %v94, %v101
    %v104 = vadd.f32 %v95, %v101
    %105 = vst [vmem:[%s3] sm:$0xff] %v103
    %106 = vst [vmem:[%s3 + $0x8] sm:$0xff] %v104
  $region21: #{transformer_ocr_forward.23} parent=0 // pred_fallthru
    _
  // Predicated region
  $region22: #{transformer_ocr_forward.23} parent=0 // pred_check
    _
  $region23: #{transformer_ocr_forward.23} parent=0 // pred_check_branch
    %108 = sbr.rel (0) target = $region25
  $region24: #{transformer_ocr_forward.23} parent=0 // pred_region
    _
  $region25: #{transformer_ocr_forward.23} parent=0 // pred_fallthru
    _
  // Predicated region
  $region26: #{transformer_ocr_forward.23} parent=0 // pred_check
    _
  $region27: #{transformer_ocr_forward.23} parent=0 // pred_check_branch
    %110 = sbr.rel (0) target = $region29
  $region28: #{transformer_ocr_forward.23} parent=0 // pred_region
    _
  $region29: #{transformer_ocr_forward.23} parent=0 // pred_fallthru
    _

// kernel: transformer_ocr_forward.17
$region0: #{transformer_ocr_forward.17}
  #allocation0 [shape = 'u32[]', space=smem, size = 0x4, offset = 0x4, fixed_abs, tag = 'smem constant byte address 0x4 - core index']
  #allocation1 [shape = 'u32[144,128]{1,0:T(1,128)}', space=vmem, size = 0x12000, scoped, tag = 'internal scratch']
  #allocation2 [shape = 'f32[8,32]{1,0:T(8,128)}', space=vmem, size = 0x1000, scoped, tag = 'scratch operand']
  %s0 = inlined_call_operand.vmem [shape: f32[2,8,32], index: 0, kind: input, shape index: {}]
  %s1 = inlined_call_operand.vmem [shape: bf16[32,96], index: 1, kind: input, shape index: {}]
  %s2 = inlined_call_operand.vmem [shape: f32[1,96], index: 2, kind: input, shape index: {}]
  %s3 = inlined_call_operand.vmem [shape: bf16[32,32], index: 3, kind: input, shape index: {}]
  %s4 = inlined_call_operand.vmem [shape: f32[1,32], index: 4, kind: input, shape index: {}]
  %s5 = inlined_call_operand.vmem [shape: f32[1,32], index: 5, kind: input, shape index: {}]
  %s6 = inlined_call_operand.vmem [shape: f32[1,32], index: 6, kind: input, shape index: {}]
  %s7 = inlined_call_operand.vmem [shape: f32[2,8,32], index: 7, kind: output, shape index: {}]
  %s8 = sld [smem:[#allocation0]]
  $region61: #{transformer_ocr_forward.17} parent=0
    _
  %s10 = ssub.s32 1, %s8
  %s11 = scalar_select 0, %s10, %s8
  loop: start=0, step=1, limit=4
  $region2: #{transformer_ocr_forward.17} parent=0 // loop_pre_header
    _
  $region3: #{transformer_ocr_forward.17} parent=0 // loop_header
    %s13 = sphi 0, %s17
    %p14 = scmp.ge.s32.totalorder %s13, 4
    %s23 = sphi 0, %s25
    %s26 = sphi 0, %s23
    %s27 = sphi 0, %s26
    %s43 = sphi 0, %s27
    %s47 = sphi 0, %s47
    %s49 = sphi 0, %s47
    %s50 = sphi 0, %s49
    %s64 = sphi 0, %s50
    %s68 = sphi 0, %s68
    %s70 = sphi 0, %s68
    %s71 = sphi 0, %s70
    %s85 = sphi 0, %s71
    %s89 = sphi 0, %s89
    %s91 = sphi 0, %s89
    %s92 = sphi 0, %s91
    %s106 = sphi 0, %s92
    %s110 = sphi 0, %s110
    %s112 = sphi 0, %s110
    %s113 = sphi 0, %s112
    %s127 = sphi 0, %s113
    %s131 = sphi 0, %s131
    %s133 = sphi 0, %s131
    %s134 = sphi 0, %s133
    %s148 = sphi 0, %s134
    %s152 = sphi 0, %s152
    %s154 = sphi 0, %s152
    %s155 = sphi 0, %s154
    %s169 = sphi 0, %s155
    %s175 = sphi 0, %s177
    %s178 = sphi 0, %s175
    %s179 = sphi 0, %s178
    %s195 = sphi 0, %s179
  $region4: #{transformer_ocr_forward.17} parent=0 // loop_header_branch
    %16 = sbr.rel (%p14) target = $region8
  $region5: #{transformer_ocr_forward.17} parent=0 // loop_body
    %s18 = ssub.s32 %s13, 1
    %s19 = ssub.s32 %s13, 2
    %s20 = sadd.s32 %s13, 1
    %s21 = ssub.s32 %s13, %s20
    %p22 = scmp.eq.s32.totalorder %s21, 0
    %s24 = sadd.s32 %s23, 1
    %s25 = scalar_select %p22, %s23, %s24
    %p28 = pneg %p22
    %p29 = scmp.eq.s32.totalorder %s13, 1
    %p30 = por %p28, %p29
    %p31 = scmp.ne.s32.totalorder %s23, %s26
    %p32 = scmp.eq.s32.totalorder %s13, 0
    %p33 = por %p31, %p32
    %p34 = scmp.ne.s32.totalorder %s23, %s26
    %p35 = scmp.eq.s32.totalorder %s18, 1
    %p36 = por %p34, %p35
    %p37 = scmp.ne.s32.totalorder %s26, %s27
    %p38 = scmp.eq.s32.totalorder %s18, 0
    %p39 = por %p37, %p38
    %p40 = scmp.ne.s32.totalorder %s26, %s27
    %p41 = scmp.eq.s32.totalorder %s19, 1
    %p42 = por %p40, %p41
    %p44 = scmp.ne.s32.totalorder %s27, %s43
    %p45 = scmp.eq.s32.totalorder %s19, 0
    %p46 = por %p44, %p45
    %s48 = sadd.s32 %s47, 1
    %p51 = scmp.eq.s32.totalorder %s13, 1
    %p52 = scmp.ne.s32.totalorder %s47, %s49
    %p53 = scmp.eq.s32.totalorder %s13, 0
    %p54 = por %p52, %p53
    %p55 = scmp.ne.s32.totalorder %s47, %s49
    %p56 = scmp.eq.s32.totalorder %s18, 1
    %p57 = por %p55, %p56
    %p58 = scmp.ne.s32.totalorder %s49, %s50
    %p59 = scmp.eq.s32.totalorder %s18, 0
    %p60 = por %p58, %p59
    %p61 = scmp.ne.s32.totalorder %s49, %s50
    %p62 = scmp.eq.s32.totalorder %s19, 1
    %p63 = por %p61, %p62
    %p65 = scmp.ne.s32.totalorder %s50, %s64
    %p66 = scmp.eq.s32.totalorder %s19, 0
    %p67 = por %p65, %p66
    %s69 = sadd.s32 %s68, 1
    %p72 = scmp.eq.s32.totalorder %s13, 1
    %p73 = scmp.ne.s32.totalorder %s68, %s70
    %p74 = scmp.eq.s32.totalorder %s13, 0
    %p75 = por %p73, %p74
    %p76 = scmp.ne.s32.totalorder %s68, %s70
    %p77 = scmp.eq.s32.totalorder %s18, 1
    %p78 = por %p76, %p77
    %p79 = scmp.ne.s32.totalorder %s70, %s71
    %p80 = scmp.eq.s32.totalorder %s18, 0
    %p81 = por %p79, %p80
    %p82 = scmp.ne.s32.totalorder %s70, %s71
    %p83 = scmp.eq.s32.totalorder %s19, 1
    %p84 = por %p82, %p83
    %p86 = scmp.ne.s32.totalorder %s71, %s85
    %p87 = scmp.eq.s32.totalorder %s19, 0
    %p88 = por %p86, %p87
    %s90 = sadd.s32 %s89, 1
    %p93 = scmp.eq.s32.totalorder %s13, 1
    %p94 = scmp.ne.s32.totalorder %s89, %s91
    %p95 = scmp.eq.s32.totalorder %s13, 0
    %p96 = por %p94, %p95
    %p97 = scmp.ne.s32.totalorder %s89, %s91
    %p98 = scmp.eq.s32.totalorder %s18, 1
    %p99 = por %p97, %p98
    %p100 = scmp.ne.s32.totalorder %s91, %s92
    %p101 = scmp.eq.s32.totalorder %s18, 0
    %p102 = por %p100, %p101
    %p103 = scmp.ne.s32.totalorder %s91, %s92
    %p104 = scmp.eq.s32.totalorder %s19, 1
    %p105 = por %p103, %p104
    %p107 = scmp.ne.s32.totalorder %s92, %s106
    %p108 = scmp.eq.s32.totalorder %s19, 0
    %p109 = por %p107, %p108
    %s111 = sadd.s32 %s110, 1
    %p114 = scmp.eq.s32.totalorder %s13, 1
    %p115 = scmp.ne.s32.totalorder %s110, %s112
    %p116 = scmp.eq.s32.totalorder %s13, 0
    %p117 = por %p115, %p116
    %p118 = scmp.ne.s32.totalorder %s110, %s112
    %p119 = scmp.eq.s32.totalorder %s18, 1
    %p120 = por %p118, %p119
    %p121 = scmp.ne.s32.totalorder %s112, %s113
    %p122 = scmp.eq.s32.totalorder %s18, 0
    %p123 = por %p121, %p122
    %p124 = scmp.ne.s32.totalorder %s112, %s113
    %p125 = scmp.eq.s32.totalorder %s19, 1
    %p126 = por %p124, %p125
    %p128 = scmp.ne.s32.totalorder %s113, %s127
    %p129 = scmp.eq.s32.totalorder %s19, 0
    %p130 = por %p128, %p129
    %s132 = sadd.s32 %s131, 1
    %p135 = scmp.eq.s32.totalorder %s13, 1
    %p136 = scmp.ne.s32.totalorder %s131, %s133
    %p137 = scmp.eq.s32.totalorder %s13, 0
    %p138 = por %p136, %p137
    %p139 = scmp.ne.s32.totalorder %s131, %s133
    %p140 = scmp.eq.s32.totalorder %s18, 1
    %p141 = por %p139, %p140
    %p142 = scmp.ne.s32.totalorder %s133, %s134
    %p143 = scmp.eq.s32.totalorder %s18, 0
    %p144 = por %p142, %p143
    %p145 = scmp.ne.s32.totalorder %s133, %s134
    %p146 = scmp.eq.s32.totalorder %s19, 1
    %p147 = por %p145, %p146
    %p149 = scmp.ne.s32.totalorder %s134, %s148
    %p150 = scmp.eq.s32.totalorder %s19, 0
    %p151 = por %p149, %p150
    %s153 = sadd.s32 %s152, 1
    %p156 = scmp.eq.s32.totalorder %s13, 1
    %p157 = scmp.ne.s32.totalorder %s152, %s154
    %p158 = scmp.eq.s32.totalorder %s13, 0
    %p159 = por %p157, %p158
    %p160 = scmp.ne.s32.totalorder %s152, %s154
    %p161 = scmp.eq.s32.totalorder %s18, 1
    %p162 = por %p160, %p161
    %p163 = scmp.ne.s32.totalorder %s154, %s155
    %p164 = scmp.eq.s32.totalorder %s18, 0
    %p165 = por %p163, %p164
    %p166 = scmp.ne.s32.totalorder %s154, %s155
    %p167 = scmp.eq.s32.totalorder %s19, 1
    %p168 = por %p166, %p167
    %p170 = scmp.ne.s32.totalorder %s155, %s169
    %p171 = scmp.eq.s32.totalorder %s19, 0
    %p172 = por %p170, %p171
    %s173 = ssub.s32 %s13, %s20
    %p174 = scmp.eq.s32.totalorder %s173, 0
    %s176 = sadd.s32 %s175, 1
    %s177 = scalar_select %p174, %s175, %s176
    %p180 = pneg %p174
    %p181 = scmp.eq.s32.totalorder %s13, 1
    %p182 = por %p180, %p181
    %p183 = scmp.ne.s32.totalorder %s175, %s178
    %p184 = scmp.eq.s32.totalorder %s13, 0
    %p185 = por %p183, %p184
    %p186 = scmp.ne.s32.totalorder %s175, %s178
    %p187 = scmp.eq.s32.totalorder %s18, 1
    %p188 = por %p186, %p187
    %p189 = scmp.ne.s32.totalorder %s178, %s179
    %p190 = scmp.eq.s32.totalorder %s18, 0
    %p191 = por %p189, %p190
    %p192 = scmp.ne.s32.totalorder %s178, %s179
    %p193 = scmp.eq.s32.totalorder %s19, 1
    %p194 = por %p192, %p193
    %p196 = scmp.ne.s32.totalorder %s179, %s195
    %p197 = scmp.eq.s32.totalorder %s19, 0
    %p198 = por %p196, %p197
    %p199 = scmp.le.s32.totalorder 1, %s13
    %p200 = scmp.lt.s32.totalorder %s13, 3
    %p201 = pnand %p199, %p200
    %p202 = pneg %p201
    // Predicated region
    $region9: #{transformer_ocr_forward.17} parent=5 // pred_check
      _
    $region10: #{transformer_ocr_forward.17} parent=5 // pred_check_branch
      %204 = sbr.rel (%p201) target = $region12
    $region11: #{transformer_ocr_forward.17} parent=5 // pred_region
      %s205 = ssub.s32 %s13, 1
      // Predicated region
      $region13: #{transformer_ocr_forward.17} parent=11 // pred_check
        %p206 = pneg %p60
      $region14: #{transformer_ocr_forward.17} parent=11 // pred_check_branch
        %208 = sbr.rel (%p206) target = $region16
      $region15: #{transformer_ocr_forward.17} parent=11 // pred_region
        _
      $region16: #{transformer_ocr_forward.17} parent=11 // pred_fallthru
        _
      // Predicated region
      $region17: #{transformer_ocr_forward.17} parent=11 // pred_check
        %p209 = pneg %p81
      $region18: #{transformer_ocr_forward.17} parent=11 // pred_check_branch
        %211 = sbr.rel (%p209) target = $region20
      $region19: #{transformer_ocr_forward.17} parent=11 // pred_region
        _
      $region20: #{transformer_ocr_forward.17} parent=11 // pred_fallthru
        _
      // Predicated region
      $region21: #{transformer_ocr_forward.17} parent=11 // pred_check
        %p212 = pneg %p102
      $region22: #{transformer_ocr_forward.17} parent=11 // pred_check_branch
        %214 = sbr.rel (%p212) target = $region24
      $region23: #{transformer_ocr_forward.17} parent=11 // pred_region
        _
      $region24: #{transformer_ocr_forward.17} parent=11 // pred_fallthru
        _
      // Predicated region
      $region25: #{transformer_ocr_forward.17} parent=11 // pred_check
        %p215 = pneg %p123
      $region26: #{transformer_ocr_forward.17} parent=11 // pred_check_branch
        %217 = sbr.rel (%p215) target = $region28
      $region27: #{transformer_ocr_forward.17} parent=11 // pred_region
        _
      $region28: #{transformer_ocr_forward.17} parent=11 // pred_fallthru
        _
      // Predicated region
      $region29: #{transformer_ocr_forward.17} parent=11 // pred_check
        %p218 = pneg %p144
      $region30: #{transformer_ocr_forward.17} parent=11 // pred_check_branch
        %220 = sbr.rel (%p218) target = $region32
      $region31: #{transformer_ocr_forward.17} parent=11 // pred_region
        _
      $region32: #{transformer_ocr_forward.17} parent=11 // pred_fallthru
        _
      // Predicated region
      $region33: #{transformer_ocr_forward.17} parent=11 // pred_check
        %p221 = pneg %p165
      $region34: #{transformer_ocr_forward.17} parent=11 // pred_check_branch
        %223 = sbr.rel (%p221) target = $region36
      $region35: #{transformer_ocr_forward.17} parent=11 // pred_region
        _
      $region36: #{transformer_ocr_forward.17} parent=11 // pred_fallthru
        _
    $region12: #{transformer_ocr_forward.17} parent=5 // pred_fallthru
      _
    %p224 = scmp.lt.s32.totalorder %s13, 2
    // Predicated region
    $region37: #{transformer_ocr_forward.17} parent=5 // pred_check
      %p225 = pneg %p224
    $region38: #{transformer_ocr_forward.17} parent=5 // pred_check_branch
      %227 = sbr.rel (%p225) target = $region40
    $region39: #{transformer_ocr_forward.17} parent=5 // pred_region
      // Predicated region
      $region41: #{transformer_ocr_forward.17} parent=39 // pred_check
        %p228 = pneg %p33
      $region42: #{transformer_ocr_forward.17} parent=39 // pred_check_branch
        %230 = sbr.rel (%p228) target = $region44
      $region43: #{transformer_ocr_forward.17} parent=39 // pred_region
        %p231 = scmp.lt.s32.totalorder %s13, 1
        %s232 = scalar_select %p231, %s13, 1
        %s233 = smul.addr %s232, 8
        %s234 = scalar_lea.vmem %s0, %s233
      $region44: #{transformer_ocr_forward.17} parent=39 // pred_fallthru
        _
    $region40: #{transformer_ocr_forward.17} parent=5 // pred_fallthru
      _
    %p235 = scmp.le.s32.totalorder 1, %s13
    %p236 = scmp.lt.s32.totalorder %s13, 3
    %p237 = pnand %p235, %p236
    %p238 = pneg %p237
    // Predicated region
    $region45: #{transformer_ocr_forward.17} parent=5 // pred_check
      _
    $region46: #{transformer_ocr_forward.17} parent=5 // pred_check_branch
      %240 = sbr.rel (%p237) target = $region48
    $region47: #{transformer_ocr_forward.17} parent=5 // pred_region
      %s241 = ssub.s32 %s13, 1
      %p242 = scmp.lt.s32.totalorder %s18, 1
      %s243 = scalar_select %p242, %s18, 1
      %s244 = smul.addr %s243, 8
      %s245 = scalar_lea.vmem %s0, %s244
      %p246 = pneg %p39
      %p247 = pneg %p36
      %p248 = pneg %p60
      %p249 = pneg %p57
      %p250 = pneg %p81
      %p251 = pneg %p78
      %p252 = pneg %p102
      %p253 = pneg %p99
      %p254 = pneg %p123
      %p255 = pneg %p120
      %p256 = pneg %p144
      %p257 = pneg %p141
      %p258 = pneg %p165
      %p259 = pneg %p162
      %p260 = pneg %p191
      %p261 = pneg %p188
      %p262 = scmp.lt.s32.totalorder %s18, 1
      %s263 = scalar_select %p262, %s18, 1
      %s264 = smul.addr %s263, 8
      %s265 = scalar_lea.vmem %s7, %s264
      %p266 = scmp.lt.s32.totalorder %s18, 1
      %s267 = scalar_select %p266, %s18, 1
      %s268 = smul.addr %s267, 8
      %s269 = scalar_lea.vmem %s0, %s268
      %p270 = scmp.lt.s32.totalorder %s18, 1
      %s271 = scalar_select %p270, %s18, 1
      %s272 = smul.addr %s271, 8
      %s273 = scalar_lea.vmem %s7, %s272
      %v275 = vld [vmem:[%s269] sm:$0xff]
      %v276 = vpack.c.bf16 %v275, %v275
      %v277 = vld [vmem:[%s1] sm:$0xf]
      %v278 = vld [vmem:[%s1 + $0x4] sm:$0xf]
      %v279 = vld [vmem:[%s1 + $0x8] sm:$0xf]
      %v280 = vld [vmem:[%s1 + $0xc] sm:$0xf]
      %v281 = vld [vmem:[%s2] sm:$0x1]
      %v283 = vlaneseq
      %v284 = vshrl.u32 %v283, 7
      %v285 = vsub.s32 0, %v284
      %v286 = vrot.slane %v281, %v285
      %v292 = vunpack.c.l.b16 %v277
      %v293 = vunpack.c.l.b16 %v278
      %v294 = vunpack.c.l.b16 %v279
      %v295 = vunpack.c.l.b16 %v280
      %v296 = vpack.c.b16 %v293, %v292
      %v297 = vpack.c.b16 %v295, %v294
      %vm300 = vcmask 261120
      %v302 = vsel %vm300, %v276, 0
      %304 = vmatprep.subr.bf16.mxu0 0
      %305 = vmatpush1.bf16.msra.mxu0 %v296
      %306 = vmatprep.subr.bf16.mxu0 0
      %307 = vmatpush1.bf16.msra.mxu0 %v297
      %308 = vmatprep.subr.bf16.mxu0 0
      %309 = vmatpush1.bf16.msra.mxu0 0
      %310 = vmatprep.subr.bf16.mxu0 0
      %311 = vmatpush1.bf16.msra.mxu0 0
      %312 = vmatprep.subr.bf16.mxu0 0
      %313 = vmatpush1.bf16.msra.mxu0 0
      %314 = vmatprep.subr.bf16.mxu0 0
      %315 = vmatpush1.bf16.msra.mxu0 0
      %316 = vmatprep.subr.bf16.mxu0 0
      %317 = vmatpush1.bf16.msra.mxu0 0
      %318 = vmatprep.subr.bf16.mxu0 0
      %319 = vmatpush1.bf16.msra.mxu0 0
      %320 = vmatprep.subr.bf16.mxu0 0
      %321 = vmatpush1.bf16.msra.mxu0 0
      %322 = vmatprep.subr.bf16.mxu0 0
      %323 = vmatpush1.bf16.msra.mxu0 0
      %324 = vmatprep.subr.bf16.mxu0 0
      %325 = vmatpush1.bf16.msra.mxu0 0
      %326 = vmatprep.subr.bf16.mxu0 0
      %327 = vmatpush1.bf16.msra.mxu0 0
      %328 = vmatprep.subr.bf16.mxu0 0
      %329 = vmatpush1.bf16.msra.mxu0 0
      %330 = vmatprep.subr.bf16.mxu0 0
      %331 = vmatpush1.bf16.msra.mxu0 0
      %332 = vmatprep.subr.bf16.mxu0 0
      %333 = vmatpush1.bf16.msra.mxu0 0
      %334 = vmatprep.subr.bf16.mxu0 0
      %335 = vmatpush1.bf16.msra.mxu0 0
      %336 = vmatprep.mubr.bf16.mxu0 0
      %337 = vmatmul.mubr.bf16.gmra.mrb[0].mxu0 %v302
      %v338 = vpop.f32.mrb[0].mxu0
      %v339 = vadd.f32 %v286, %v338
      %v340 = vpop.f32.mrb[0].mxu0
      %v341 = vpop.f32.mrb[0].mxu0
      %v342 = vpop.f32.mrb[0].mxu0
      %343 = vdwg.mxu0
      %v344 = vlaneseq
      %v345 = vshrl.u32 %v344, 7
      %v346 = vlaneseq
      %v347 = vand.u32 %v346, 127
      %vm348 = vcmp.le.s32.totalorder %v347, %v345
      %v349 = vsel %vm348, 0.0, -inf
      %v350 = vpack.c.bf16 %v339, %v339
      %352 = vrot.lane.b32.xlu0 %v350, 96
      %v353 = vpop.permute.xlu0 %352
      %vm354 = vcmask 64512
      %v356 = vsel %vm354, %v350, 0
      %v359 = vsel %vm354, %v353, 0
      %361 = vmatprep.subr.bf16.mxu0 0
      %362 = vmatpush1.bf16.xpose.msra.mxu0 %v359
      %363 = vmatprep.subr.bf16.mxu0 0
      %364 = vmatpush1.bf16.xpose.msra.mxu0 0
      %365 = vmatprep.subr.bf16.mxu0 0
      %366 = vmatpush1.bf16.xpose.msra.mxu0 0
      %367 = vmatprep.subr.bf16.mxu0 0
      %368 = vmatpush1.bf16.xpose.msra.mxu0 0
      %369 = vmatprep.subr.bf16.mxu0 0
      %370 = vmatpush1.bf16.xpose.msra.mxu0 0
      %371 = vmatprep.subr.bf16.mxu0 0
      %372 = vmatpush1.bf16.xpose.msra.mxu0 0
      %373 = vmatprep.subr.bf16.mxu0 0
      %374 = vmatpush1.bf16.xpose.msra.mxu0 0
      %375 = vmatprep.subr.bf16.mxu0 0
      %376 = vmatpush1.bf16.xpose.msra.mxu0 0
      %377 = vmatprep.subr.bf16.mxu0 0
      %378 = vmatpush1.bf16.xpose.msra.mxu0 0
      %379 = vmatprep.subr.bf16.mxu0 0
      %380 = vmatpush1.bf16.xpose.msra.mxu0 0
      %381 = vmatprep.subr.bf16.mxu0 0
      %382 = vmatpush1.bf16.xpose.msra.mxu0 0
      %383 = vmatprep.subr.bf16.mxu0 0
      %384 = vmatpush1.bf16.xpose.msra.mxu0 0
      %385 = vmatprep.subr.bf16.mxu0 0
      %386 = vmatpush1.bf16.xpose.msra.mxu0 0
      %387 = vmatprep.subr.bf16.mxu0 0
      %388 = vmatpush1.bf16.xpose.msra.mxu0 0
      %389 = vmatprep.subr.bf16.mxu0 0
      %390 = vmatpush1.bf16.xpose.msra.mxu0 0
      %391 = vmatprep.subr.bf16.mxu0 0
      %392 = vmatpush1.bf16.xpose.msra.mxu0 0
      %393 = vmatprep.mubr.bf16.mxu0 0
      %394 = vmatmul.mubr.bf16.gmra.mrb[0].mxu0 %v356
      %v395 = vpop.f32.mrb[0].mxu0
      %v396 = vadd.f32 0.0, %v395
      %v397 = vpop.f32.mrb[0].mxu0
      %v398 = vpop.f32.mrb[0].mxu0
      %v399 = vpop.f32.mrb[0].mxu0
      %400 = vdwg.mxu0
      %v401 = vmul.f32 %v396, 0.35355338
      %v402 = vadd.f32 %v401, %v349
      %v403 = vsel %vm354, %v402, -inf
      %404 = vmax.xlane.f32.xlu0 %v403
      %v405 = vpop.xlane.xlu0 %404
      %v406 = vsub.f32 %v402, %v405
      %v407 = vmul.f32 %v406, 1.442695
      %v408 = vpow.pop %v407
      %v409 = vsel %vm354, %v408, 0.0
      %410 = vadd.xlane.f32.xlu0 %v409
      %v411 = vpop.xlane.xlu0 %410
      %v412 = vrcp.pop %v411
      %v413 = vmul.f32 %v408, %v412
      %v414 = vpack.c.bf16 %v413, %v413
      %415 = vrot.lane.b32.xlu0 %v350, 64
      %v416 = vpop.permute.xlu0 %415
      %v418 = vsel %vm354, %v414, 0
      %vm420 = vcmask 1043456
      %v422 = vsel %vm420, %v416, 0
      %424 = vmatprep.subr.bf16.mxu0 0
      %425 = vmatpush1.bf16.msra.mxu0 %v422
      %426 = vmatprep.subr.bf16.mxu0 0
      %427 = vmatpush1.bf16.msra.mxu0 0
      %428 = vmatprep.subr.bf16.mxu0 0
      %429 = vmatpush1.bf16.msra.mxu0 0
      %430 = vmatprep.subr.bf16.mxu0 0
      %431 = vmatpush1.bf16.msra.mxu0 0
      %432 = vmatprep.subr.bf16.mxu0 0
      %433 = vmatpush1.bf16.msra.mxu0 0
      %434 = vmatprep.subr.bf16.mxu0 0
      %435 = vmatpush1.bf16.msra.mxu0 0
      %436 = vmatprep.subr.bf16.mxu0 0
      %437 = vmatpush1.bf16.msra.mxu0 0
      %438 = vmatprep.subr.bf16.mxu0 0
      %439 = vmatpush1.bf16.msra.mxu0 0
      %440 = vmatprep.subr.bf16.mxu0 0
      %441 = vmatpush1.bf16.msra.mxu0 0
      %442 = vmatprep.subr.bf16.mxu0 0
      %443 = vmatpush1.bf16.msra.mxu0 0
      %444 = vmatprep.subr.bf16.mxu0 0
      %445 = vmatpush1.bf16.msra.mxu0 0
      %446 = vmatprep.subr.bf16.mxu0 0
      %447 = vmatpush1.bf16.msra.mxu0 0
      %448 = vmatprep.subr.bf16.mxu0 0
      %449 = vmatpush1.bf16.msra.mxu0 0
      %450 = vmatprep.subr.bf16.mxu0 0
      %451 = vmatpush1.bf16.msra.mxu0 0
      %452 = vmatprep.subr.bf16.mxu0 0
      %453 = vmatpush1.bf16.msra.mxu0 0
      %454 = vmatprep.subr.bf16.mxu0 0
      %455 = vmatpush1.bf16.msra.mxu0 0
      %456 = vmatprep.mubr.bf16.mxu0 0
      %457 = vmatmul.mubr.bf16.gmra.mrb[0].mxu0 %v418
      %v458 = vpop.f32.mrb[0].mxu0
      %v459 = vadd.f32 0.0, %v458
      %v460 = vpop.f32.mrb[0].mxu0
      %v461 = vpop.f32.mrb[0].mxu0
      %v462 = vpop.f32.mrb[0].mxu0
      %463 = vdwg.mxu0
      %464 = vst.msk [vmem:[#allocation2] sm:$0xff] %vm354, %v459
      %465 = vrot.lane.b32.xlu0 %v350, 120
      %v466 = vpop.permute.xlu0 %465
      %467 = vrot.lane.b32.xlu0 %v350, 88
      %v468 = vpop.permute.xlu0 %467
      %v470 = vsel %vm354, %v466, 0
      %v473 = vsel %vm354, %v468, 0
      %475 = vmatprep.subr.bf16.mxu0 0
      %476 = vmatpush1.bf16.xpose.msra.mxu0 %v473
      %477 = vmatprep.subr.bf16.mxu0 0
      %478 = vmatpush1.bf16.xpose.msra.mxu0 0
      %479 = vmatprep.subr.bf16.mxu0 0
      %480 = vmatpush1.bf16.xpose.msra.mxu0 0
      %481 = vmatprep.subr.bf16.mxu0 0
      %482 = vmatpush1.bf16.xpose.msra.mxu0 0
      %483 = vmatprep.subr.bf16.mxu0 0
      %484 = vmatpush1.bf16.xpose.msra.mxu0 0
      %485 = vmatprep.subr.bf16.mxu0 0
      %486 = vmatpush1.bf16.xpose.msra.mxu0 0
      %487 = vmatprep.subr.bf16.mxu0 0
      %488 = vmatpush1.bf16.xpose.msra.mxu0 0
      %489 = vmatprep.subr.bf16.mxu0 0
      %490 = vmatpush1.bf16.xpose.msra.mxu0 0
      %491 = vmatprep.subr.bf16.mxu0 0
      %492 = vmatpush1.bf16.xpose.msra.mxu0 0
      %493 = vmatprep.subr.bf16.mxu0 0
      %494 = vmatpush1.bf16.xpose.msra.mxu0 0
      %495 = vmatprep.subr.bf16.mxu0 0
      %496 = vmatpush1.bf16.xpose.msra.mxu0 0
      %497 = vmatprep.subr.bf16.mxu0 0
      %498 = vmatpush1.bf16.xpose.msra.mxu0 0
      %499 = vmatprep.subr.bf16.mxu0 0
      %500 = vmatpush1.bf16.xpose.msra.mxu0 0
      %501 = vmatprep.subr.bf16.mxu0 0
      %502 = vmatpush1.bf16.xpose.msra.mxu0 0
      %503 = vmatprep.subr.bf16.mxu0 0
      %504 = vmatpush1.bf16.xpose.msra.mxu0 0
      %505 = vmatprep.subr.bf16.mxu0 0
      %506 = vmatpush1.bf16.xpose.msra.mxu0 0
      %507 = vmatprep.mubr.bf16.mxu0 0
      %508 = vmatmul.mubr.bf16.gmra.mrb[0].mxu0 %v470
      %v509 = vpop.f32.mrb[0].mxu0
      %v510 = vadd.f32 0.0, %v509
      %v511 = vpop.f32.mrb[0].mxu0
      %v512 = vpop.f32.mrb[0].mxu0
      %v513 = vpop.f32.mrb[0].mxu0
      %514 = vdwg.mxu0
      %v515 = vmul.f32 %v510, 0.35355338
      %v516 = vadd.f32 %v515, %v349
      %v517 = vsel %vm354, %v516, -inf
      %518 = vmax.xlane.f32.xlu0 %v517
      %v519 = vpop.xlane.xlu0 %518
      %v520 = vsub.f32 %v516, %v519
      %v521 = vmul.f32 %v520, 1.442695
      %v522 = vpow.pop %v521
      %v523 = vsel %vm354, %v522, 0.0
      %524 = vadd.xlane.f32.xlu0 %v523
      %v525 = vpop.xlane.xlu0 %524
      %v526 = vrcp.pop %v525
      %v527 = vmul.f32 %v522, %v526
      %v528 = vpack.c.bf16 %v527, %v527
      %529 = vrot.lane.b32.xlu0 %v350, 56
      %v530 = vpop.permute.xlu0 %529
      %v532 = vsel %vm354, %v528, 0
      %v535 = vsel %vm420, %v530, 0
      %537 = vmatprep.subr.bf16.mxu0 0
      %538 = vmatpush1.bf16.msra.mxu0 %v535
      %539 = vmatprep.subr.bf16.mxu0 0
      %540 = vmatpush1.bf16.msra.mxu0 0
      %541 = vmatprep.subr.bf16.mxu0 0
      %542 = vmatpush1.bf16.msra.mxu0 0
      %543 = vmatprep.subr.bf16.mxu0 0
      %544 = vmatpush1.bf16.msra.mxu0 0
      %545 = vmatprep.subr.bf16.mxu0 0
      %546 = vmatpush1.bf16.msra.mxu0 0
      %547 = vmatprep.subr.bf16.mxu0 0
      %548 = vmatpush1.bf16.msra.mxu0 0
      %549 = vmatprep.subr.bf16.mxu0 0
      %550 = vmatpush1.bf16.msra.mxu0 0
      %551 = vmatprep.subr.bf16.mxu0 0
      %552 = vmatpush1.bf16.msra.mxu0 0
      %553 = vmatprep.subr.bf16.mxu0 0
      %554 = vmatpush1.bf16.msra.mxu0 0
      %555 = vmatprep.subr.bf16.mxu0 0
      %556 = vmatpush1.bf16.msra.mxu0 0
      %557 = vmatprep.subr.bf16.mxu0 0
      %558 = vmatpush1.bf16.msra.mxu0 0
      %559 = vmatprep.subr.bf16.mxu0 0
      %560 = vmatpush1.bf16.msra.mxu0 0
      %561 = vmatprep.subr.bf16.mxu0 0
      %562 = vmatpush1.bf16.msra.mxu0 0
      %563 = vmatprep.subr.bf16.mxu0 0
      %564 = vmatpush1.bf16.msra.mxu0 0
      %565 = vmatprep.subr.bf16.mxu0 0
      %566 = vmatpush1.bf16.msra.mxu0 0
      %567 = vmatprep.subr.bf16.mxu0 0
      %568 = vmatpush1.bf16.msra.mxu0 0
      %569 = vmatprep.mubr.bf16.mxu0 0
      %570 = vmatmul.mubr.bf16.gmra.mrb[0].mxu0 %v532
      %v571 = vpop.f32.mrb[0].mxu0
      %v572 = vadd.f32 0.0, %v571
      %v573 = vpop.f32.mrb[0].mxu0
      %v574 = vpop.f32.mrb[0].mxu0
      %v575 = vpop.f32.mrb[0].mxu0
      %576 = vdwg.mxu0
      %578 = vrot.lane.b32.xlu0 %v572, 8
      %v579 = vpop.permute.xlu0 %578
      %vm581 = vcmask 130112
      %582 = vst.msk [vmem:[#allocation2] sm:$0xff] %vm581, %v579
      %583 = vrot.lane.b32.xlu0 %v350, 112
      %v584 = vpop.permute.xlu0 %583
      %585 = vrot.lane.b32.xlu0 %v350, 80
      %v586 = vpop.permute.xlu0 %585
      %v588 = vsel %vm354, %v584, 0
      %v591 = vsel %vm354, %v586, 0
      %593 = vmatprep.subr.bf16.mxu0 0
      %594 = vmatpush1.bf16.xpose.msra.mxu0 %v591
      %595 = vmatprep.subr.bf16.mxu0 0
      %596 = vmatpush1.bf16.xpose.msra.mxu0 0
      %597 = vmatprep.subr.bf16.mxu0 0
      %598 = vmatpush1.bf16.xpose.msra.mxu0 0
      %599 = vmatprep.subr.bf16.mxu0 0
      %600 = vmatpush1.bf16.xpose.msra.mxu0 0
      %601 = vmatprep.subr.bf16.mxu0 0
      %602 = vmatpush1.bf16.xpose.msra.mxu0 0
      %603 = vmatprep.subr.bf16.mxu0 0
      %604 = vmatpush1.bf16.xpose.msra.mxu0 0
      %605 = vmatprep.subr.bf16.mxu0 0
      %606 = vmatpush1.bf16.xpose.msra.mxu0 0
      %607 = vmatprep.subr.bf16.mxu0 0
      %608 = vmatpush1.bf16.xpose.msra.mxu0 0
      %609 = vmatprep.subr.bf16.mxu0 0
      %610 = vmatpush1.bf16.xpose.msra.mxu0 0
      %611 = vmatprep.subr.bf16.mxu0 0
      %612 = vmatpush1.bf16.xpose.msra.mxu0 0
      %613 = vmatprep.subr.bf16.mxu0 0
      %614 = vmatpush1.bf16.xpose.msra.mxu0 0
      %615 = vmatprep.subr.bf16.mxu0 0
      %616 = vmatpush1.bf16.xpose.msra.mxu0 0
      %617 = vmatprep.subr.bf16.mxu0 0
      %618 = vmatpush1.bf16.xpose.msra.mxu0 0
      %619 = vmatprep.subr.bf16.mxu0 0
      %620 = vmatpush1.bf16.xpose.msra.mxu0 0
      %621 = vmatprep.subr.bf16.mxu0 0
      %622 = vmatpush1.bf16.xpose.msra.mxu0 0
      %623 = vmatprep.subr.bf16.mxu0 0
      %624 = vmatpush1.bf16.xpose.msra.mxu0 0
      %625 = vmatprep.mubr.bf16.mxu0 0
      %626 = vmatmul.mubr.bf16.gmra.mrb[0].mxu0 %v588
      %v627 = vpop.f32.mrb[0].mxu0
      %v628 = vadd.f32 0.0, %v627
      %v629 = vpop.f32.mrb[0].mxu0
      %v630 = vpop.f32.mrb[0].mxu0
      %v631 = vpop.f32.mrb[0].mxu0
      %632 = vdwg.mxu0
      %v633 = vmul.f32 %v628, 0.35355338
      %v634 = vadd.f32 %v633, %v349
      %v635 = vsel %vm354, %v634, -inf
      %636 = vmax.xlane.f32.xlu0 %v635
      %v637 = vpop.xlane.xlu0 %636
      %v638 = vsub.f32 %v634, %v637
      %v639 = vmul.f32 %v638, 1.442695
      %v640 = vpow.pop %v639
      %v641 = vsel %vm354, %v640, 0.0
      %642 = vadd.xlane.f32.xlu0 %v641
      %v643 = vpop.xlane.xlu0 %642
      %v644 = vrcp.pop %v643
      %v645 = vmul.f32 %v640, %v644
      %v646 = vpack.c.bf16 %v645, %v645
      %647 = vrot.lane.b32.xlu0 %v350, 48
      %v648 = vpop.permute.xlu0 %647
      %v650 = vsel %vm354, %v646, 0
      %v653 = vsel %vm420, %v648, 0
      %655 = vmatprep.subr.bf16.mxu0 0
      %656 = vmatpush1.bf16.msra.mxu0 %v653
      %657 = vmatprep.subr.bf16.mxu0 0
      %658 = vmatpush1.bf16.msra.mxu0 0
      %659 = vmatprep.subr.bf16.mxu0 0
      %660 = vmatpush1.bf16.msra.mxu0 0
      %661 = vmatprep.subr.bf16.mxu0 0
      %662 = vmatpush1.bf16.msra.mxu0 0
      %663 = vmatprep.subr.bf16.mxu0 0
      %664 = vmatpush1.bf16.msra.mxu0 0
      %665 = vmatprep.subr.bf16.mxu0 0
      %666 = vmatpush1.bf16.msra.mxu0 0
      %667 = vmatprep.subr.bf16.mxu0 0
      %668 = vmatpush1.bf16.msra.mxu0 0
      %669 = vmatprep.subr.bf16.mxu0 0
      %670 = vmatpush1.bf16.msra.mxu0 0
      %671 = vmatprep.subr.bf16.mxu0 0
      %672 = vmatpush1.bf16.msra.mxu0 0
      %673 = vmatprep.subr.bf16.mxu0 0
      %674 = vmatpush1.bf16.msra.mxu0 0
      %675 = vmatprep.subr.bf16.mxu0 0
      %676 = vmatpush1.bf16.msra.mxu0 0
      %677 = vmatprep.subr.bf16.mxu0 0
      %678 = vmatpush1.bf16.msra.mxu0 0
      %679 = vmatprep.subr.bf16.mxu0 0
      %680 = vmatpush1.bf16.msra.mxu0 0
      %681 = vmatprep.subr.bf16.mxu0 0
      %682 = vmatpush1.bf16.msra.mxu0 0
      %683 = vmatprep.subr.bf16.mxu0 0
      %684 = vmatpush1.bf16.msra.mxu0 0
      %685 = vmatprep.subr.bf16.mxu0 0
      %686 = vmatpush1.bf16.msra.mxu0 0
      %687 = vmatprep.mubr.bf16.mxu0 0
      %688 = vmatmul.mubr.bf16.gmra.mrb[0].mxu0 %v650
      %v689 = vpop.f32.mrb[0].mxu0
      %v690 = vadd.f32 0.0, %v689
      %v691 = vpop.f32.mrb[0].mxu0
      %v692 = vpop.f32.mrb[0].mxu0
      %v693 = vpop.f32.mrb[0].mxu0
      %694 = vdwg.mxu0
      %696 = vrot.lane.b32.xlu0 %v690, 16
      %v697 = vpop.permute.xlu0 %696
      %vm699 = vcmask 195712
      %700 = vst.msk [vmem:[#allocation2] sm:$0xff] %vm699, %v697
      %701 = vrot.lane.b32.xlu0 %v350, 104
      %v702 = vpop.permute.xlu0 %701
      %703 = vrot.lane.b32.xlu0 %v350, 72
      %v704 = vpop.permute.xlu0 %703
      %v706 = vsel %vm354, %v702, 0
      %v709 = vsel %vm354, %v704, 0
      %711 = vmatprep.subr.bf16.mxu0 0
      %712 = vmatpush1.bf16.xpose.msra.mxu0 %v709
      %713 = vmatprep.subr.bf16.mxu0 0
      %714 = vmatpush1.bf16.xpose.msra.mxu0 0
      %715 = vmatprep.subr.bf16.mxu0 0
      %716 = vmatpush1.bf16.xpose.msra.mxu0 0
      %717 = vmatprep.subr.bf16.mxu0 0
      %718 = vmatpush1.bf16.xpose.msra.mxu0 0
      %719 = vmatprep.subr.bf16.mxu0 0
      %720 = vmatpush1.bf16.xpose.msra.mxu0 0
      %721 = vmatprep.subr.bf16.mxu0 0
      %722 = vmatpush1.bf16.xpose.msra.mxu0 0
      %723 = vmatprep.subr.bf16.mxu0 0
      %724 = vmatpush1.bf16.xpose.msra.mxu0 0
      %725 = vmatprep.subr.bf16.mxu0 0
      %726 = vmatpush1.bf16.xpose.msra.mxu0 0
      %727 = vmatprep.subr.bf16.mxu0 0
      %728 = vmatpush1.bf16.xpose.msra.mxu0 0
      %729 = vmatprep.subr.bf16.mxu0 0
      %730 = vmatpush1.bf16.xpose.msra.mxu0 0
      %731 = vmatprep.subr.bf16.mxu0 0
      %732 = vmatpush1.bf16.xpose.msra.mxu0 0
      %733 = vmatprep.subr.bf16.mxu0 0
      %734 = vmatpush1.bf16.xpose.msra.mxu0 0
      %735 = vmatprep.subr.bf16.mxu0 0
      %736 = vmatpush1.bf16.xpose.msra.mxu0 0
      %737 = vmatprep.subr.bf16.mxu0 0
      %738 = vmatpush1.bf16.xpose.msra.mxu0 0
      %739 = vmatprep.subr.bf16.mxu0 0
      %740 = vmatpush1.bf16.xpose.msra.mxu0 0
      %741 = vmatprep.subr.bf16.mxu0 0
      %742 = vmatpush1.bf16.xpose.msra.mxu0 0
      %743 = vmatprep.mubr.bf16.mxu0 0
      %744 = vmatmul.mubr.bf16.gmra.mrb[0].mxu0 %v706
      %v745 = vpop.f32.mrb[0].mxu0
      %v746 = vadd.f32 0.0, %v745
      %v747 = vpop.f32.mrb[0].mxu0
      %v748 = vpop.f32.mrb[0].mxu0
      %v749 = vpop.f32.mrb[0].mxu0
      %750 = vdwg.mxu0
      %v751 = vmul.f32 %v746, 0.35355338
      %v752 = vadd.f32 %v751, %v349
      %v753 = vsel %vm354, %v752, -inf
      %754 = vmax.xlane.f32.xlu0 %v753
      %v755 = vpop.xlane.xlu0 %754
      %v756 = vsub.f32 %v752, %v755
      %v757 = vmul.f32 %v756, 1.442695
      %v758 = vpow.pop %v757
      %v759 = vsel %vm354, %v758, 0.0
      %760 = vadd.xlane.f32.xlu0 %v759
      %v761 = vpop.xlane.xlu0 %760
      %v762 = vrcp.pop %v761
      %v763 = vmul.f32 %v758, %v762
      %v764 = vpack.c.bf16 %v763, %v763
      %765 = vrot.lane.b32.xlu0 %v350, 40
      %v766 = vpop.permute.xlu0 %765
      %v768 = vsel %vm354, %v764, 0
      %v771 = vsel %vm420, %v766, 0
      %773 = vmatprep.subr.bf16.mxu0 0
      %774 = vmatpush1.bf16.msra.mxu0 %v771
      %775 = vmatprep.subr.bf16.mxu0 0
      %776 = vmatpush1.bf16.msra.mxu0 0
      %777 = vmatprep.subr.bf16.mxu0 0
      %778 = vmatpush1.bf16.msra.mxu0 0
      %779 = vmatprep.subr.bf16.mxu0 0
      %780 = vmatpush1.bf16.msra.mxu0 0
      %781 = vmatprep.subr.bf16.mxu0 0
      %782 = vmatpush1.bf16.msra.mxu0 0
      %783 = vmatprep.subr.bf16.mxu0 0
      %784 = vmatpush1.bf16.msra.mxu0 0
      %785 = vmatprep.subr.bf16.mxu0 0
      %786 = vmatpush1.bf16.msra.mxu0 0
      %787 = vmatprep.subr.bf16.mxu0 0
      %788 = vmatpush1.bf16.msra.mxu0 0
      %789 = vmatprep.subr.bf16.mxu0 0
      %790 = vmatpush1.bf16.msra.mxu0 0
      %791 = vmatprep.subr.bf16.mxu0 0
      %792 = vmatpush1.bf16.msra.mxu0 0
      %793 = vmatprep.subr.bf16.mxu0 0
      %794 = vmatpush1.bf16.msra.mxu0 0
      %795 = vmatprep.subr.bf16.mxu0 0
      %796 = vmatpush1.bf16.msra.mxu0 0
      %797 = vmatprep.subr.bf16.mxu0 0
      %798 = vmatpush1.bf16.msra.mxu0 0
      %799 = vmatprep.subr.bf16.mxu0 0
      %800 = vmatpush1.bf16.msra.mxu0 0
      %801 = vmatprep.subr.bf16.mxu0 0
      %802 = vmatpush1.bf16.msra.mxu0 0
      %803 = vmatprep.subr.bf16.mxu0 0
      %804 = vmatpush1.bf16.msra.mxu0 0
      %805 = vmatprep.mubr.bf16.mxu0 0
      %806 = vmatmul.mubr.bf16.gmra.mrb[0].mxu0 %v768
      %v807 = vpop.f32.mrb[0].mxu0
      %v808 = vadd.f32 0.0, %v807
      %v809 = vpop.f32.mrb[0].mxu0
      %v810 = vpop.f32.mrb[0].mxu0
      %v811 = vpop.f32.mrb[0].mxu0
      %812 = vdwg.mxu0
      %814 = vrot.lane.b32.xlu0 %v808, 24
      %v815 = vpop.permute.xlu0 %814
      %vm817 = vcmask 261312
      %818 = vst.msk [vmem:[#allocation2] sm:$0xff] %vm817, %v815
      %v819 = vld [vmem:[#allocation2] sm:$0xff]
      %v820 = vpack.c.bf16 %v819, %v819
      %v821 = vld [vmem:[%s3] sm:$0xf]
      %v822 = vld [vmem:[%s3 + $0x4] sm:$0xf]
      %v823 = vld [vmem:[%s3 + $0x8] sm:$0xf]
      %v824 = vld [vmem:[%s3 + $0xc] sm:$0xf]
      %v825 = vld [vmem:[%s4] sm:$0x1]
      %v827 = vlaneseq
      %v828 = vshrl.u32 %v827, 7
      %v829 = vsub.s32 0, %v828
      %v830 = vrot.slane %v825, %v829
      %v836 = vunpack.c.l.b16 %v821
      %v837 = vunpack.c.l.b16 %v822
      %v838 = vunpack.c.l.b16 %v823
      %v839 = vunpack.c.l.b16 %v824
      %v840 = vpack.c.b16 %v837, %v836
      %v841 = vpack.c.b16 %v839, %v838
      %v845 = vsel %vm300, %v820, 0
      %847 = vmatprep.subr.bf16.mxu0 0
      %848 = vmatpush1.bf16.msra.mxu0 %v840
      %849 = vmatprep.subr.bf16.mxu0 0
      %850 = vmatpush1.bf16.msra.mxu0 %v841
      %851 = vmatprep.subr.bf16.mxu0 0
      %852 = vmatpush1.bf16.msra.mxu0 0
      %853 = vmatprep.subr.bf16.mxu0 0
      %854 = vmatpush1.bf16.msra.mxu0 0
      %855 = vmatprep.subr.bf16.mxu0 0
      %856 = vmatpush1.bf16.msra.mxu0 0
      %857 = vmatprep.subr.bf16.mxu0 0
      %858 = vmatpush1.bf16.msra.mxu0 0
      %859 = vmatprep.subr.bf16.mxu0 0
      %860 = vmatpush1.bf16.msra.mxu0 0
      %861 = vmatprep.subr.bf16.mxu0 0
      %862 = vmatpush1.bf16.msra.mxu0 0
      %863 = vmatprep.subr.bf16.mxu0 0
      %864 = vmatpush1.bf16.msra.mxu0 0
      %865 = vmatprep.subr.bf16.mxu0 0
      %866 = vmatpush1.bf16.msra.mxu0 0
      %867 = vmatprep.subr.bf16.mxu0 0
      %868 = vmatpush1.bf16.msra.mxu0 0
      %869 = vmatprep.subr.bf16.mxu0 0
      %870 = vmatpush1.bf16.msra.mxu0 0
      %871 = vmatprep.subr.bf16.mxu0 0
      %872 = vmatpush1.bf16.msra.mxu0 0
      %873 = vmatprep.subr.bf16.mxu0 0
      %874 = vmatpush1.bf16.msra.mxu0 0
      %875 = vmatprep.subr.bf16.mxu0 0
      %876 = vmatpush1.bf16.msra.mxu0 0
      %877 = vmatprep.subr.bf16.mxu0 0
      %878 = vmatpush1.bf16.msra.mxu0 0
      %879 = vmatprep.mubr.bf16.mxu0 0
      %880 = vmatmul.mubr.bf16.gmra.mrb[0].mxu0 %v845
      %v881 = vpop.f32.mrb[0].mxu0
      %v882 = vadd.f32 %v830, %v881
      %v883 = vpop.f32.mrb[0].mxu0
      %v884 = vpop.f32.mrb[0].mxu0
      %v885 = vpop.f32.mrb[0].mxu0
      %886 = vdwg.mxu0
      %v887 = vadd.f32 %v882, %v275
      %v888 = vsel %vm300, %v887, 0.0
      %889 = vadd.xlane.f32.xlu0 %v888
      %v890 = vpop.xlane.xlu0 %889
      %v891 = vrcp.pop 32.0
      %v892 = vmul.f32 %v890, %v891
      %v893 = vsub.f32 %v887, %v892
      %v894 = vmul.f32 %v893, %v893
      %v895 = vsel %vm300, %v894, 0.0
      %896 = vadd.xlane.f32.xlu0 %v895
      %v897 = vpop.xlane.xlu0 %896
      %v898 = vmul.f32 %v897, %v891
      %v899 = vadd.f32 %v898, 1e-05
      %v900 = vrsqrt.pop %v899
      %v901 = vmul.f32 %v893, %v900
      %v902 = vld [vmem:[%s5] sm:$0x1]
      %v904 = vlaneseq
      %v905 = vshrl.u32 %v904, 7
      %v906 = vsub.s32 0, %v905
      %v907 = vrot.slane %v902, %v906
      %v909 = vmul.f32 %v901, %v907
      %v910 = vld [vmem:[%s6] sm:$0x1]
      %v912 = vlaneseq
      %v913 = vshrl.u32 %v912, 7
      %v914 = vsub.s32 0, %v913
      %v915 = vrot.slane %v910, %v914
      %v917 = vadd.f32 %v909, %v915
      %918 = vst.msk [vmem:[%s273] sm:$0xff] %vm300, %v917
      %p919 = scmp.lt.s32.totalorder %s18, 1
      %s920 = scalar_select %p919, %s18, 1
      %s921 = smul.addr %s920, 8
      %s922 = scalar_lea.vmem %s7, %s921
      // Predicated region
      $region49: #{transformer_ocr_forward.17} parent=47 // pred_check
        %p923 = pneg %p188
      $region50: #{transformer_ocr_forward.17} parent=47 // pred_check_branch
        %925 = sbr.rel (%p923) target = $region52
      $region51: #{transformer_ocr_forward.17} parent=47 // pred_region
        _
      $region52: #{transformer_ocr_forward.17} parent=47 // pred_fallthru
        _
    $region48: #{transformer_ocr_forward.17} parent=5 // pred_fallthru
      _
    %p926 = scmp.le.s32.totalorder 2, %s13
    // Predicated region
    $region53: #{transformer_ocr_forward.17} parent=5 // pred_check
      %p927 = pneg %p926
    $region54: #{transformer_ocr_forward.17} parent=5 // pred_check_branch
      %929 = sbr.rel (%p927) target = $region56
    $region55: #{transformer_ocr_forward.17} parent=5 // pred_region
      %s930 = ssub.s32 %s13, 2
      // Predicated region
      $region57: #{transformer_ocr_forward.17} parent=55 // pred_check
        %p931 = pneg %p194
      $region58: #{transformer_ocr_forward.17} parent=55 // pred_check_branch
        %933 = sbr.rel (%p931) target = $region60
      $region59: #{transformer_ocr_forward.17} parent=55 // pred_region
        %p934 = scmp.lt.s32.totalorder %s19, 1
        %s935 = scalar_select %p934, %s19, 1
        %s936 = smul.addr %s935, 8
        %s937 = scalar_lea.vmem %s7, %s936
      $region60: #{transformer_ocr_forward.17} parent=55 // pred_fallthru
        _
    $region56: #{transformer_ocr_forward.17} parent=5 // pred_fallthru
      _
  $region6: #{transformer_ocr_forward.17} parent=0 // loop_footer
    %s17 = sadd.s32 1, %s13
  $region7: #{transformer_ocr_forward.17} parent=0 // loop_footer_branch
    %12 = sbr.rel target = $region3
  $region8: #{transformer_ocr_forward.17} parent=0 // loop_exit
    _

// kernel: transformer_ocr_forward.18
$region0: #{transformer_ocr_forward.18}
  #allocation0 [shape = 'u32[]', space=smem, size = 0x4, offset = 0x4, fixed_abs, tag = 'smem constant byte address 0x4 - core index']
  #allocation1 [shape = 'u32[144,128]{1,0:T(1,128)}', space=vmem, size = 0x12000, scoped, tag = 'internal scratch']
  #allocation2 [shape = 'f32[8,32]{1,0:T(8,128)}', space=vmem, size = 0x1000, scoped, tag = 'scratch operand']
  %s0 = inlined_call_operand.vmem [shape: f32[2,8,32], index: 0, kind: input, shape index: {}]
  %s1 = inlined_call_operand.vmem [shape: f32[2,16,32], index: 1, kind: input, shape index: {}]
  %s2 = inlined_call_operand.vmem [shape: bf16[32,32], index: 2, kind: input, shape index: {}]
  %s3 = inlined_call_operand.vmem [shape: f32[1,32], index: 3, kind: input, shape index: {}]
  %s4 = inlined_call_operand.vmem [shape: bf16[32,64], index: 4, kind: input, shape index: {}]
  %s5 = inlined_call_operand.vmem [shape: f32[1,64], index: 5, kind: input, shape index: {}]
  %s6 = inlined_call_operand.vmem [shape: bf16[32,32], index: 6, kind: input, shape index: {}]
  %s7 = inlined_call_operand.vmem [shape: f32[1,32], index: 7, kind: input, shape index: {}]
  %s8 = inlined_call_operand.vmem [shape: f32[1,32], index: 8, kind: input, shape index: {}]
  %s9 = inlined_call_operand.vmem [shape: f32[1,32], index: 9, kind: input, shape index: {}]
  %s10 = inlined_call_operand.vmem [shape: f32[2,8,32], index: 10, kind: output, shape index: {}]
  %s11 = sld [smem:[#allocation0]]
  $region73: #{transformer_ocr_forward.18} parent=0
    _
  %s13 = ssub.s32 1, %s11
  %s14 = scalar_select 0, %s13, %s11
  loop: start=0, step=1, limit=4
  $region2: #{transformer_ocr_forward.18} parent=0 // loop_pre_header
    _
  $region3: #{transformer_ocr_forward.18} parent=0 // loop_header
    %s16 = sphi 0, %s20
    %p17 = scmp.ge.s32.totalorder %s16, 4
    %s26 = sphi 0, %s28
    %s29 = sphi 0, %s26
    %s30 = sphi 0, %s29
    %s46 = sphi 0, %s30
    %s52 = sphi 0, %s54
    %s55 = sphi 0, %s52
    %s56 = sphi 0, %s55
    %s72 = sphi 0, %s56
    %s76 = sphi 0, %s76
    %s78 = sphi 0, %s76
    %s79 = sphi 0, %s78
    %s93 = sphi 0, %s79
    %s97 = sphi 0, %s97
    %s99 = sphi 0, %s97
    %s100 = sphi 0, %s99
    %s114 = sphi 0, %s100
    %s118 = sphi 0, %s118
    %s120 = sphi 0, %s118
    %s121 = sphi 0, %s120
    %s135 = sphi 0, %s121
    %s139 = sphi 0, %s139
    %s141 = sphi 0, %s139
    %s142 = sphi 0, %s141
    %s156 = sphi 0, %s142
    %s160 = sphi 0, %s160
    %s162 = sphi 0, %s160
    %s163 = sphi 0, %s162
    %s177 = sphi 0, %s163
    %s181 = sphi 0, %s181
    %s183 = sphi 0, %s181
    %s184 = sphi 0, %s183
    %s198 = sphi 0, %s184
    %s202 = sphi 0, %s202
    %s204 = sphi 0, %s202
    %s205 = sphi 0, %s204
    %s219 = sphi 0, %s205
    %s223 = sphi 0, %s223
    %s225 = sphi 0, %s223
    %s226 = sphi 0, %s225
    %s240 = sphi 0, %s226
    %s246 = sphi 0, %s248
    %s249 = sphi 0, %s246
    %s250 = sphi 0, %s249
    %s266 = sphi 0, %s250
  $region4: #{transformer_ocr_forward.18} parent=0 // loop_header_branch
    %19 = sbr.rel (%p17) target = $region8
  $region5: #{transformer_ocr_forward.18} parent=0 // loop_body
    %s21 = ssub.s32 %s16, 1
    %s22 = ssub.s32 %s16, 2
    %s23 = sadd.s32 %s16, 1
    %s24 = ssub.s32 %s16, %s23
    %p25 = scmp.eq.s32.totalorder %s24, 0
    %s27 = sadd.s32 %s26, 1
    %s28 = scalar_select %p25, %s26, %s27
    %p31 = pneg %p25
    %p32 = scmp.eq.s32.totalorder %s16, 1
    %p33 = por %p31, %p32
    %p34 = scmp.ne.s32.totalorder %s26, %s29
    %p35 = scmp.eq.s32.totalorder %s16, 0
    %p36 = por %p34, %p35
    %p37 = scmp.ne.s32.totalorder %s26, %s29
    %p38 = scmp.eq.s32.totalorder %s21, 1
    %p39 = por %p37, %p38
    %p40 = scmp.ne.s32.totalorder %s29, %s30
    %p41 = scmp.eq.s32.totalorder %s21, 0
    %p42 = por %p40, %p41
    %p43 = scmp.ne.s32.totalorder %s29, %s30
    %p44 = scmp.eq.s32.totalorder %s22, 1
    %p45 = por %p43, %p44
    %p47 = scmp.ne.s32.totalorder %s30, %s46
    %p48 = scmp.eq.s32.totalorder %s22, 0
    %p49 = por %p47, %p48
    %s50 = ssub.s32 %s16, %s23
    %p51 = scmp.eq.s32.totalorder %s50, 0
    %s53 = sadd.s32 %s52, 1
    %s54 = scalar_select %p51, %s52, %s53
    %p57 = pneg %p51
    %p58 = scmp.eq.s32.totalorder %s16, 1
    %p59 = por %p57, %p58
    %p60 = scmp.ne.s32.totalorder %s52, %s55
    %p61 = scmp.eq.s32.totalorder %s16, 0
    %p62 = por %p60, %p61
    %p63 = scmp.ne.s32.totalorder %s52, %s55
    %p64 = scmp.eq.s32.totalorder %s21, 1
    %p65 = por %p63, %p64
    %p66 = scmp.ne.s32.totalorder %s55, %s56
    %p67 = scmp.eq.s32.totalorder %s21, 0
    %p68 = por %p66, %p67
    %p69 = scmp.ne.s32.totalorder %s55, %s56
    %p70 = scmp.eq.s32.totalorder %s22, 1
    %p71 = por %p69, %p70
    %p73 = scmp.ne.s32.totalorder %s56, %s72
    %p74 = scmp.eq.s32.totalorder %s22, 0
    %p75 = por %p73, %p74
    %s77 = sadd.s32 %s76, 1
    %p80 = scmp.eq.s32.totalorder %s16, 1
    %p81 = scmp.ne.s32.totalorder %s76, %s78
    %p82 = scmp.eq.s32.totalorder %s16, 0
    %p83 = por %p81, %p82
    %p84 = scmp.ne.s32.totalorder %s76, %s78
    %p85 = scmp.eq.s32.totalorder %s21, 1
    %p86 = por %p84, %p85
    %p87 = scmp.ne.s32.totalorder %s78, %s79
    %p88 = scmp.eq.s32.totalorder %s21, 0
    %p89 = por %p87, %p88
    %p90 = scmp.ne.s32.totalorder %s78, %s79
    %p91 = scmp.eq.s32.totalorder %s22, 1
    %p92 = por %p90, %p91
    %p94 = scmp.ne.s32.totalorder %s79, %s93
    %p95 = scmp.eq.s32.totalorder %s22, 0
    %p96 = por %p94, %p95
    %s98 = sadd.s32 %s97, 1
    %p101 = scmp.eq.s32.totalorder %s16, 1
    %p102 = scmp.ne.s32.totalorder %s97, %s99
    %p103 = scmp.eq.s32.totalorder %s16, 0
    %p104 = por %p102, %p103
    %p105 = scmp.ne.s32.totalorder %s97, %s99
    %p106 = scmp.eq.s32.totalorder %s21, 1
    %p107 = por %p105, %p106
    %p108 = scmp.ne.s32.totalorder %s99, %s100
    %p109 = scmp.eq.s32.totalorder %s21, 0
    %p110 = por %p108, %p109
    %p111 = scmp.ne.s32.totalorder %s99, %s100
    %p112 = scmp.eq.s32.totalorder %s22, 1
    %p113 = por %p111, %p112
    %p115 = scmp.ne.s32.totalorder %s100, %s114
    %p116 = scmp.eq.s32.totalorder %s22, 0
    %p117 = por %p115, %p116
    %s119 = sadd.s32 %s118, 1
    %p122 = scmp.eq.s32.totalorder %s16, 1
    %p123 = scmp.ne.s32.totalorder %s118, %s120
    %p124 = scmp.eq.s32.totalorder %s16, 0
    %p125 = por %p123, %p124
    %p126 = scmp.ne.s32.totalorder %s118, %s120
    %p127 = scmp.eq.s32.totalorder %s21, 1
    %p128 = por %p126, %p127
    %p129 = scmp.ne.s32.totalorder %s120, %s121
    %p130 = scmp.eq.s32.totalorder %s21, 0
    %p131 = por %p129, %p130
    %p132 = scmp.ne.s32.totalorder %s120, %s121
    %p133 = scmp.eq.s32.totalorder %s22, 1
    %p134 = por %p132, %p133
    %p136 = scmp.ne.s32.totalorder %s121, %s135
    %p137 = scmp.eq.s32.totalorder %s22, 0
    %p138 = por %p136, %p137
    %s140 = sadd.s32 %s139, 1
    %p143 = scmp.eq.s32.totalorder %s16, 1
    %p144 = scmp.ne.s32.totalorder %s139, %s141
    %p145 = scmp.eq.s32.totalorder %s16, 0
    %p146 = por %p144, %p145
    %p147 = scmp.ne.s32.totalorder %s139, %s141
    %p148 = scmp.eq.s32.totalorder %s21, 1
    %p149 = por %p147, %p148
    %p150 = scmp.ne.s32.totalorder %s141, %s142
    %p151 = scmp.eq.s32.totalorder %s21, 0
    %p152 = por %p150, %p151
    %p153 = scmp.ne.s32.totalorder %s141, %s142
    %p154 = scmp.eq.s32.totalorder %s22, 1
    %p155 = por %p153, %p154
    %p157 = scmp.ne.s32.totalorder %s142, %s156
    %p158 = scmp.eq.s32.totalorder %s22, 0
    %p159 = por %p157, %p158
    %s161 = sadd.s32 %s160, 1
    %p164 = scmp.eq.s32.totalorder %s16, 1
    %p165 = scmp.ne.s32.totalorder %s160, %s162
    %p166 = scmp.eq.s32.totalorder %s16, 0
    %p167 = por %p165, %p166
    %p168 = scmp.ne.s32.totalorder %s160, %s162
    %p169 = scmp.eq.s32.totalorder %s21, 1
    %p170 = por %p168, %p169
    %p171 = scmp.ne.s32.totalorder %s162, %s163
    %p172 = scmp.eq.s32.totalorder %s21, 0
    %p173 = por %p171, %p172
    %p174 = scmp.ne.s32.totalorder %s162, %s163
    %p175 = scmp.eq.s32.totalorder %s22, 1
    %p176 = por %p174, %p175
    %p178 = scmp.ne.s32.totalorder %s163, %s177
    %p179 = scmp.eq.s32.totalorder %s22, 0
    %p180 = por %p178, %p179
    %s182 = sadd.s32 %s181, 1
    %p185 = scmp.eq.s32.totalorder %s16, 1
    %p186 = scmp.ne.s32.totalorder %s181, %s183
    %p187 = scmp.eq.s32.totalorder %s16, 0
    %p188 = por %p186, %p187
    %p189 = scmp.ne.s32.totalorder %s181, %s183
    %p190 = scmp.eq.s32.totalorder %s21, 1
    %p191 = por %p189, %p190
    %p192 = scmp.ne.s32.totalorder %s183, %s184
    %p193 = scmp.eq.s32.totalorder %s21, 0
    %p194 = por %p192, %p193
    %p195 = scmp.ne.s32.totalorder %s183, %s184
    %p196 = scmp.eq.s32.totalorder %s22, 1
    %p197 = por %p195, %p196
    %p199 = scmp.ne.s32.totalorder %s184, %s198
    %p200 = scmp.eq.s32.totalorder %s22, 0
    %p201 = por %p199, %p200
    %s203 = sadd.s32 %s202, 1
    %p206 = scmp.eq.s32.totalorder %s16, 1
    %p207 = scmp.ne.s32.totalorder %s202, %s204
    %p208 = scmp.eq.s32.totalorder %s16, 0
    %p209 = por %p207, %p208
    %p210 = scmp.ne.s32.totalorder %s202, %s204
    %p211 = scmp.eq.s32.totalorder %s21, 1
    %p212 = por %p210, %p211
    %p213 = scmp.ne.s32.totalorder %s204, %s205
    %p214 = scmp.eq.s32.totalorder %s21, 0
    %p215 = por %p213, %p214
    %p216 = scmp.ne.s32.totalorder %s204, %s205
    %p217 = scmp.eq.s32.totalorder %s22, 1
    %p218 = por %p216, %p217
    %p220 = scmp.ne.s32.totalorder %s205, %s219
    %p221 = scmp.eq.s32.totalorder %s22, 0
    %p222 = por %p220, %p221
    %s224 = sadd.s32 %s223, 1
    %p227 = scmp.eq.s32.totalorder %s16, 1
    %p228 = scmp.ne.s32.totalorder %s223, %s225
    %p229 = scmp.eq.s32.totalorder %s16, 0
    %p230 = por %p228, %p229
    %p231 = scmp.ne.s32.totalorder %s223, %s225
    %p232 = scmp.eq.s32.totalorder %s21, 1
    %p233 = por %p231, %p232
    %p234 = scmp.ne.s32.totalorder %s225, %s226
    %p235 = scmp.eq.s32.totalorder %s21, 0
    %p236 = por %p234, %p235
    %p237 = scmp.ne.s32.totalorder %s225, %s226
    %p238 = scmp.eq.s32.totalorder %s22, 1
    %p239 = por %p237, %p238
    %p241 = scmp.ne.s32.totalorder %s226, %s240
    %p242 = scmp.eq.s32.totalorder %s22, 0
    %p243 = por %p241, %p242
    %s244 = ssub.s32 %s16, %s23
    %p245 = scmp.eq.s32.totalorder %s244, 0
    %s247 = sadd.s32 %s246, 1
    %s248 = scalar_select %p245, %s246, %s247
    %p251 = pneg %p245
    %p252 = scmp.eq.s32.totalorder %s16, 1
    %p253 = por %p251, %p252
    %p254 = scmp.ne.s32.totalorder %s246, %s249
    %p255 = scmp.eq.s32.totalorder %s16, 0
    %p256 = por %p254, %p255
    %p257 = scmp.ne.s32.totalorder %s246, %s249
    %p258 = scmp.eq.s32.totalorder %s21, 1
    %p259 = por %p257, %p258
    %p260 = scmp.ne.s32.totalorder %s249, %s250
    %p261 = scmp.eq.s32.totalorder %s21, 0
    %p262 = por %p260, %p261
    %p263 = scmp.ne.s32.totalorder %s249, %s250
    %p264 = scmp.eq.s32.totalorder %s22, 1
    %p265 = por %p263, %p264
    %p267 = scmp.ne.s32.totalorder %s250, %s266
    %p268 = scmp.eq.s32.totalorder %s22, 0
    %p269 = por %p267, %p268
    %p270 = scmp.le.s32.totalorder 1, %s16
    %p271 = scmp.lt.s32.totalorder %s16, 3
    %p272 = pnand %p270, %p271
    %p273 = pneg %p272
    // Predicated region
    $region9: #{transformer_ocr_forward.18} parent=5 // pred_check
      _
    $region10: #{transformer_ocr_forward.18} parent=5 // pred_check_branch
      %275 = sbr.rel (%p272) target = $region12
    $region11: #{transformer_ocr_forward.18} parent=5 // pred_region
      %s276 = ssub.s32 %s16, 1
      // Predicated region
      $region13: #{transformer_ocr_forward.18} parent=11 // pred_check
        %p277 = pneg %p89
      $region14: #{transformer_ocr_forward.18} parent=11 // pred_check_branch
        %279 = sbr.rel (%p277) target = $region16
      $region15: #{transformer_ocr_forward.18} parent=11 // pred_region
        _
      $region16: #{transformer_ocr_forward.18} parent=11 // pred_fallthru
        _
      // Predicated region
      $region17: #{transformer_ocr_forward.18} parent=11 // pred_check
        %p280 = pneg %p110
      $region18: #{transformer_ocr_forward.18} parent=11 // pred_check_branch
        %282 = sbr.rel (%p280) target = $region20
      $region19: #{transformer_ocr_forward.18} parent=11 // pred_region
        _
      $region20: #{transformer_ocr_forward.18} parent=11 // pred_fallthru
        _
      // Predicated region
      $region21: #{transformer_ocr_forward.18} parent=11 // pred_check
        %p283 = pneg %p131
      $region22: #{transformer_ocr_forward.18} parent=11 // pred_check_branch
        %285 = sbr.rel (%p283) target = $region24
      $region23: #{transformer_ocr_forward.18} parent=11 // pred_region
        _
      $region24: #{transformer_ocr_forward.18} parent=11 // pred_fallthru
        _
      // Predicated region
      $region25: #{transformer_ocr_forward.18} parent=11 // pred_check
        %p286 = pneg %p152
      $region26: #{transformer_ocr_forward.18} parent=11 // pred_check_branch
        %288 = sbr.rel (%p286) target = $region28
      $region27: #{transformer_ocr_forward.18} parent=11 // pred_region
        _
      $region28: #{transformer_ocr_forward.18} parent=11 // pred_fallthru
        _
      // Predicated region
      $region29: #{transformer_ocr_forward.18} parent=11 // pred_check
        %p289 = pneg %p173
      $region30: #{transformer_ocr_forward.18} parent=11 // pred_check_branch
        %291 = sbr.rel (%p289) target = $region32
      $region31: #{transformer_ocr_forward.18} parent=11 // pred_region
        _
      $region32: #{transformer_ocr_forward.18} parent=11 // pred_fallthru
        _
      // Predicated region
      $region33: #{transformer_ocr_forward.18} parent=11 // pred_check
        %p292 = pneg %p194
      $region34: #{transformer_ocr_forward.18} parent=11 // pred_check_branch
        %294 = sbr.rel (%p292) target = $region36
      $region35: #{transformer_ocr_forward.18} parent=11 // pred_region
        _
      $region36: #{transformer_ocr_forward.18} parent=11 // pred_fallthru
        _
      // Predicated region
      $region37: #{transformer_ocr_forward.18} parent=11 // pred_check
        %p295 = pneg %p215
      $region38: #{transformer_ocr_forward.18} parent=11 // pred_check_branch
        %297 = sbr.rel (%p295) target = $region40
      $region39: #{transformer_ocr_forward.18} parent=11 // pred_region
        _
      $region40: #{transformer_ocr_forward.18} parent=11 // pred_fallthru
        _
      // Predicated region
      $region41: #{transformer_ocr_forward.18} parent=11 // pred_check
        %p298 = pneg %p236
      $region42: #{transformer_ocr_forward.18} parent=11 // pred_check_branch
        %300 = sbr.rel (%p298) target = $region44
      $region43: #{transformer_ocr_forward.18} parent=11 // pred_region
        _
      $region44: #{transformer_ocr_forward.18} parent=11 // pred_fallthru
        _
    $region12: #{transformer_ocr_forward.18} parent=5 // pred_fallthru
      _
    %p301 = scmp.lt.s32.totalorder %s16, 2
    // Predicated region
    $region45: #{transformer_ocr_forward.18} parent=5 // pred_check
      %p302 = pneg %p301
    $region46: #{transformer_ocr_forward.18} parent=5 // pred_check_branch
      %304 = sbr.rel (%p302) target = $region48
    $region47: #{transformer_ocr_forward.18} parent=5 // pred_region
      // Predicated region
      $region49: #{transformer_ocr_forward.18} parent=47 // pred_check
        %p305 = pneg %p36
      $region50: #{transformer_ocr_forward.18} parent=47 // pred_check_branch
        %307 = sbr.rel (%p305) target = $region52
      $region51: #{transformer_ocr_forward.18} parent=47 // pred_region
        %p308 = scmp.lt.s32.totalorder %s16, 1
        %s309 = scalar_select %p308, %s16, 1
        %s310 = smul.addr %s309, 8
        %s311 = scalar_lea.vmem %s0, %s310
      $region52: #{transformer_ocr_forward.18} parent=47 // pred_fallthru
        _
      // Predicated region
      $region53: #{transformer_ocr_forward.18} parent=47 // pred_check
        %p312 = pneg %p62
      $region54: #{transformer_ocr_forward.18} parent=47 // pred_check_branch
        %314 = sbr.rel (%p312) target = $region56
      $region55: #{transformer_ocr_forward.18} parent=47 // pred_region
        %p315 = scmp.lt.s32.totalorder %s16, 1
        %s316 = scalar_select %p315, %s16, 1
        %s317 = smul.addr %s316, 2
        %s318 = smul.addr %s317, 8
        %s319 = scalar_lea.vmem %s1, %s318
      $region56: #{transformer_ocr_forward.18} parent=47 // pred_fallthru
        _
    $region48: #{transformer_ocr_forward.18} parent=5 // pred_fallthru
      _
    %p320 = scmp.le.s32.totalorder 1, %s16
    %p321 = scmp.lt.s32.totalorder %s16, 3
    %p322 = pnand %p320, %p321
    %p323 = pneg %p322
    // Predicated region
    $region57: #{transformer_ocr_forward.18} parent=5 // pred_check
      _
    $region58: #{transformer_ocr_forward.18} parent=5 // pred_check_branch
      %325 = sbr.rel (%p322) target = $region60
    $region59: #{transformer_ocr_forward.18} parent=5 // pred_region
      %s326 = ssub.s32 %s16, 1
      %p327 = scmp.lt.s32.totalorder %s21, 1
      %s328 = scalar_select %p327, %s21, 1
      %s329 = smul.addr %s328, 8
      %s330 = scalar_lea.vmem %s0, %s329
      %p331 = pneg %p42
      %p332 = pneg %p39
      %p333 = scmp.lt.s32.totalorder %s21, 1
      %s334 = scalar_select %p333, %s21, 1
      %s335 = smul.addr %s334, 2
      %s336 = smul.addr %s335, 8
      %s337 = scalar_lea.vmem %s1, %s336
      %p338 = pneg %p68
      %p339 = pneg %p65
      %p340 = pneg %p89
      %p341 = pneg %p86
      %p342 = pneg %p110
      %p343 = pneg %p107
      %p344 = pneg %p131
      %p345 = pneg %p128
      %p346 = pneg %p152
      %p347 = pneg %p149
      %p348 = pneg %p173
      %p349 = pneg %p170
      %p350 = pneg %p194
      %p351 = pneg %p191
      %p352 = pneg %p215
      %p353 = pneg %p212
      %p354 = pneg %p236
      %p355 = pneg %p233
      %p356 = pneg %p262
      %p357 = pneg %p259
      %p358 = scmp.lt.s32.totalorder %s21, 1
      %s359 = scalar_select %p358, %s21, 1
      %s360 = smul.addr %s359, 8
      %s361 = scalar_lea.vmem %s10, %s360
      %p362 = scmp.lt.s32.totalorder %s21, 1
      %s363 = scalar_select %p362, %s21, 1
      %s364 = smul.addr %s363, 8
      %s365 = scalar_lea.vmem %s0, %s364
      %p366 = scmp.lt.s32.totalorder %s21, 1
      %s367 = scalar_select %p366, %s21, 1
      %s368 = smul.addr %s367, 2
      %s369 = smul.addr %s368, 8
      %s370 = scalar_lea.vmem %s1, %s369
      %p371 = scmp.lt.s32.totalorder %s21, 1
      %s372 = scalar_select %p371, %s21, 1
      %s373 = smul.addr %s372, 8
      %s374 = scalar_lea.vmem %s10, %s373
      %v376 = vld [vmem:[%s365] sm:$0xff]
      %v377 = vld [vmem:[%s370] sm:$0xff]
      %v378 = vld [vmem:[%s370 + $0x8] sm:$0xff]
      %v379 = vpack.c.bf16 %v376, %v376
      %v380 = vld [vmem:[%s2] sm:$0xf]
      %v381 = vld [vmem:[%s2 + $0x4] sm:$0xf]
      %v382 = vld [vmem:[%s2 + $0x8] sm:$0xf]
      %v383 = vld [vmem:[%s2 + $0xc] sm:$0xf]
      %v384 = vld [vmem:[%s3] sm:$0x1]
      %v386 = vlaneseq
      %v387 = vshrl.u32 %v386, 7
      %v388 = vsub.s32 0, %v387
      %v389 = vrot.slane %v384, %v388
      %v395 = vunpack.c.l.b16 %v380
      %v396 = vunpack.c.l.b16 %v381
      %v397 = vunpack.c.l.b16 %v382
      %v398 = vunpack.c.l.b16 %v383
      %v399 = vpack.c.b16 %v396, %v395
      %v400 = vpack.c.b16 %v398, %v397
      %vm403 = vcmask 261120
      %v405 = vsel %vm403, %v379, 0
      %407 = vmatprep.subr.bf16.mxu0 0
      %408 = vmatpush1.bf16.msra.mxu0 %v399
      %409 = vmatprep.subr.bf16.mxu0 0
      %410 = vmatpush1.bf16.msra.mxu0 %v400
      %411 = vmatprep.subr.bf16.mxu0 0
      %412 = vmatpush1.bf16.msra.mxu0 0
      %413 = vmatprep.subr.bf16.mxu0 0
      %414 = vmatpush1.bf16.msra.mxu0 0
      %415 = vmatprep.subr.bf16.mxu0 0
      %416 = vmatpush1.bf16.msra.mxu0 0
      %417 = vmatprep.subr.bf16.mxu0 0
      %418 = vmatpush1.bf16.msra.mxu0 0
      %419 = vmatprep.subr.bf16.mxu0 0
      %420 = vmatpush1.bf16.msra.mxu0 0
      %421 = vmatprep.subr.bf16.mxu0 0
      %422 = vmatpush1.bf16.msra.mxu0 0
      %423 = vmatprep.subr.bf16.mxu0 0
      %424 = vmatpush1.bf16.msra.mxu0 0
      %425 = vmatprep.subr.bf16.mxu0 0
      %426 = vmatpush1.bf16.msra.mxu0 0
      %427 = vmatprep.subr.bf16.mxu0 0
      %428 = vmatpush1.bf16.msra.mxu0 0
      %429 = vmatprep.subr.bf16.mxu0 0
      %430 = vmatpush1.bf16.msra.mxu0 0
      %431 = vmatprep.subr.bf16.mxu0 0
      %432 = vmatpush1.bf16.msra.mxu0 0
      %433 = vmatprep.subr.bf16.mxu0 0
      %434 = vmatpush1.bf16.msra.mxu0 0
      %435 = vmatprep.subr.bf16.mxu0 0
      %436 = vmatpush1.bf16.msra.mxu0 0
      %437 = vmatprep.subr.bf16.mxu0 0
      %438 = vmatpush1.bf16.msra.mxu0 0
      %439 = vmatprep.mubr.bf16.mxu0 0
      %440 = vmatmul.mubr.bf16.gmra.mrb[0].mxu0 %v405
      %v441 = vpop.f32.mrb[0].mxu0
      %v442 = vadd.f32 %v389, %v441
      %v443 = vpop.f32.mrb[0].mxu0
      %v444 = vpop.f32.mrb[0].mxu0
      %v445 = vpop.f32.mrb[0].mxu0
      %446 = vdwg.mxu0
      %v447 = vpack.c.bf16 %v378, %v377
      %v448 = vld [vmem:[%s4] sm:$0xf]
      %v449 = vld [vmem:[%s4 + $0x4] sm:$0xf]
      %v450 = vld [vmem:[%s4 + $0x8] sm:$0xf]
      %v451 = vld [vmem:[%s4 + $0xc] sm:$0xf]
      %v452 = vld [vmem:[%s5] sm:$0x1]
      %v454 = vlaneseq
      %v455 = vshrl.u32 %v454, 7
      %v456 = vsub.s32 0, %v455
      %v457 = vrot.slane %v452, %v456
      %v463 = vunpack.c.l.b16 %v448
      %v464 = vunpack.c.l.b16 %v449
      %v465 = vunpack.c.l.b16 %v450
      %v466 = vunpack.c.l.b16 %v451
      %v467 = vpack.c.b16 %v464, %v463
      %v468 = vpack.c.b16 %v466, %v465
      %v472 = vsel %vm403, %v447, 0
      %474 = vmatprep.subr.bf16.mxu0 0
      %475 = vmatpush1.bf16.msra.mxu0 %v467
      %476 = vmatprep.subr.bf16.mxu0 0
      %477 = vmatpush1.bf16.msra.mxu0 %v468
      %478 = vmatprep.subr.bf16.mxu0 0
      %479 = vmatpush1.bf16.msra.mxu0 0
      %480 = vmatprep.subr.bf16.mxu0 0
      %481 = vmatpush1.bf16.msra.mxu0 0
      %482 = vmatprep.subr.bf16.mxu0 0
      %483 = vmatpush1.bf16.msra.mxu0 0
      %484 = vmatprep.subr.bf16.mxu0 0
      %485 = vmatpush1.bf16.msra.mxu0 0
      %486 = vmatprep.subr.bf16.mxu0 0
      %487 = vmatpush1.bf16.msra.mxu0 0
      %488 = vmatprep.subr.bf16.mxu0 0
      %489 = vmatpush1.bf16.msra.mxu0 0
      %490 = vmatprep.subr.bf16.mxu0 0
      %491 = vmatpush1.bf16.msra.mxu0 0
      %492 = vmatprep.subr.bf16.mxu0 0
      %493 = vmatpush1.bf16.msra.mxu0 0
      %494 = vmatprep.subr.bf16.mxu0 0
      %495 = vmatpush1.bf16.msra.mxu0 0
      %496 = vmatprep.subr.bf16.mxu0 0
      %497 = vmatpush1.bf16.msra.mxu0 0
      %498 = vmatprep.subr.bf16.mxu0 0
      %499 = vmatpush1.bf16.msra.mxu0 0
      %500 = vmatprep.subr.bf16.mxu0 0
      %501 = vmatpush1.bf16.msra.mxu0 0
      %502 = vmatprep.subr.bf16.mxu0 0
      %503 = vmatpush1.bf16.msra.mxu0 0
      %504 = vmatprep.subr.bf16.mxu0 0
      %505 = vmatpush1.bf16.msra.mxu0 0
      %506 = vmatprep.mubr.bf16.mxu0 0
      %507 = vmatmul.mubr.bf16.gmra.mrb[0].mxu0 %v472
      %v508 = vpop.f32.mrb[0].mxu0
      %v509 = vadd.f32 %v457, %v508
      %v510 = vpop.f32.mrb[0].mxu0
      %v511 = vpop.f32.mrb[0].mxu0
      %v512 = vadd.f32 %v457, %v511
      %v513 = vpop.f32.mrb[0].mxu0
      %514 = vdwg.mxu0
      %v515 = vpack.c.bf16 %v442, %v442
      %v516 = vpack.c.bf16 %v512, %v509
      %vm517 = vcmask 64512
      %v519 = vsel %vm517, %v515, 0
      %v522 = vsel %vm517, %v516, 0
      %524 = vmatprep.subr.bf16.mxu0 0
      %525 = vmatpush1.bf16.xpose.msra.mxu0 %v522
      %526 = vmatprep.subr.bf16.mxu0 0
      %527 = vmatpush1.bf16.xpose.msra.mxu0 0
      %528 = vmatprep.subr.bf16.mxu0 0
      %529 = vmatpush1.bf16.xpose.msra.mxu0 0
      %530 = vmatprep.subr.bf16.mxu0 0
      %531 = vmatpush1.bf16.xpose.msra.mxu0 0
      %532 = vmatprep.subr.bf16.mxu0 0
      %533 = vmatpush1.bf16.xpose.msra.mxu0 0
      %534 = vmatprep.subr.bf16.mxu0 0
      %535 = vmatpush1.bf16.xpose.msra.mxu0 0
      %536 = vmatprep.subr.bf16.mxu0 0
      %537 = vmatpush1.bf16.xpose.msra.mxu0 0
      %538 = vmatprep.subr.bf16.mxu0 0
      %539 = vmatpush1.bf16.xpose.msra.mxu0 0
      %540 = vmatprep.subr.bf16.mxu0 0
      %541 = vmatpush1.bf16.xpose.msra.mxu0 0
      %542 = vmatprep.subr.bf16.mxu0 0
      %543 = vmatpush1.bf16.xpose.msra.mxu0 0
      %544 = vmatprep.subr.bf16.mxu0 0
      %545 = vmatpush1.bf16.xpose.msra.mxu0 0
      %546 = vmatprep.subr.bf16.mxu0 0
      %547 = vmatpush1.bf16.xpose.msra.mxu0 0
      %548 = vmatprep.subr.bf16.mxu0 0
      %549 = vmatpush1.bf16.xpose.msra.mxu0 0
      %550 = vmatprep.subr.bf16.mxu0 0
      %551 = vmatpush1.bf16.xpose.msra.mxu0 0
      %552 = vmatprep.subr.bf16.mxu0 0
      %553 = vmatpush1.bf16.xpose.msra.mxu0 0
      %554 = vmatprep.subr.bf16.mxu0 0
      %555 = vmatpush1.bf16.xpose.msra.mxu0 0
      %556 = vmatprep.mubr.bf16.mxu0 0
      %557 = vmatmul.mubr.bf16.gmra.mrb[0].mxu0 %v519
      %v558 = vpop.f32.mrb[0].mxu0
      %v559 = vadd.f32 0.0, %v558
      %v560 = vpop.f32.mrb[0].mxu0
      %v561 = vpop.f32.mrb[0].mxu0
      %v562 = vpop.f32.mrb[0].mxu0
      %563 = vdwg.mxu0
      %v564 = vmul.f32 %v559, 0.35355338
      %vm565 = vcmask 130048
      %v566 = vsel %vm565, %v564, -inf
      %567 = vmax.xlane.f32.xlu0 %v566
      %v568 = vpop.xlane.xlu0 %567
      %v569 = vsub.f32 %v564, %v568
      %v570 = vmul.f32 %v569, 1.442695
      %v571 = vpow.pop %v570
      %v572 = vsel %vm565, %v571, 0.0
      %573 = vadd.xlane.f32.xlu0 %v572
      %v574 = vpop.xlane.xlu0 %573
      %v575 = vrcp.pop %v574
      %v576 = vmul.f32 %v571, %v575
      %v577 = vpack.c.bf16 %v576, %v576
      %579 = vrot.lane.b32.xlu0 %v516, 96
      %v580 = vpop.permute.xlu0 %579
      %v583 = vsel %vm565, %v577, 0
      %585 = vmatprep.subr.bf16.mxu0 0
      %586 = vmatpush1.bf16.msra.mxu0 %v580
      %587 = vmatprep.subr.bf16.mxu0 0
      %588 = vmatpush1.bf16.msra.mxu0 0
      %589 = vmatprep.subr.bf16.mxu0 0
      %590 = vmatpush1.bf16.msra.mxu0 0
      %591 = vmatprep.subr.bf16.mxu0 0
      %592 = vmatpush1.bf16.msra.mxu0 0
      %593 = vmatprep.subr.bf16.mxu0 0
      %594 = vmatpush1.bf16.msra.mxu0 0
      %595 = vmatprep.subr.bf16.mxu0 0
      %596 = vmatpush1.bf16.msra.mxu0 0
      %597 = vmatprep.subr.bf16.mxu0 0
      %598 = vmatpush1.bf16.msra.mxu0 0
      %599 = vmatprep.subr.bf16.mxu0 0
      %600 = vmatpush1.bf16.msra.mxu0 0
      %601 = vmatprep.subr.bf16.mxu0 0
      %602 = vmatpush1.bf16.msra.mxu0 0
      %603 = vmatprep.subr.bf16.mxu0 0
      %604 = vmatpush1.bf16.msra.mxu0 0
      %605 = vmatprep.subr.bf16.mxu0 0
      %606 = vmatpush1.bf16.msra.mxu0 0
      %607 = vmatprep.subr.bf16.mxu0 0
      %608 = vmatpush1.bf16.msra.mxu0 0
      %609 = vmatprep.subr.bf16.mxu0 0
      %610 = vmatpush1.bf16.msra.mxu0 0
      %611 = vmatprep.subr.bf16.mxu0 0
      %612 = vmatpush1.bf16.msra.mxu0 0
      %613 = vmatprep.subr.bf16.mxu0 0
      %614 = vmatpush1.bf16.msra.mxu0 0
      %615 = vmatprep.subr.bf16.mxu0 0
      %616 = vmatpush1.bf16.msra.mxu0 0
      %617 = vmatprep.mubr.bf16.mxu0 0
      %618 = vmatmul.mubr.bf16.gmra.mrb[0].mxu0 %v583
      %v619 = vpop.f32.mrb[0].mxu0
      %v620 = vadd.f32 0.0, %v619
      %v621 = vpop.f32.mrb[0].mxu0
      %v622 = vpop.f32.mrb[0].mxu0
      %v623 = vpop.f32.mrb[0].mxu0
      %624 = vdwg.mxu0
      %625 = vst.msk [vmem:[#allocation2] sm:$0xff] %vm517, %v620
      %627 = vrot.lane.b32.xlu0 %v515, 120
      %v628 = vpop.permute.xlu0 %627
      %629 = vrot.lane.b32.xlu0 %v516, 120
      %v630 = vpop.permute.xlu0 %629
      %v632 = vsel %vm517, %v628, 0
      %v635 = vsel %vm517, %v630, 0
      %637 = vmatprep.subr.bf16.mxu0 0
      %638 = vmatpush1.bf16.xpose.msra.mxu0 %v635
      %639 = vmatprep.subr.bf16.mxu0 0
      %640 = vmatpush1.bf16.xpose.msra.mxu0 0
      %641 = vmatprep.subr.bf16.mxu0 0
      %642 = vmatpush1.bf16.xpose.msra.mxu0 0
      %643 = vmatprep.subr.bf16.mxu0 0
      %644 = vmatpush1.bf16.xpose.msra.mxu0 0
      %645 = vmatprep.subr.bf16.mxu0 0
      %646 = vmatpush1.bf16.xpose.msra.mxu0 0
      %647 = vmatprep.subr.bf16.mxu0 0
      %648 = vmatpush1.bf16.xpose.msra.mxu0 0
      %649 = vmatprep.subr.bf16.mxu0 0
      %650 = vmatpush1.bf16.xpose.msra.mxu0 0
      %651 = vmatprep.subr.bf16.mxu0 0
      %652 = vmatpush1.bf16.xpose.msra.mxu0 0
      %653 = vmatprep.subr.bf16.mxu0 0
      %654 = vmatpush1.bf16.xpose.msra.mxu0 0
      %655 = vmatprep.subr.bf16.mxu0 0
      %656 = vmatpush1.bf16.xpose.msra.mxu0 0
      %657 = vmatprep.subr.bf16.mxu0 0
      %658 = vmatpush1.bf16.xpose.msra.mxu0 0
      %659 = vmatprep.subr.bf16.mxu0 0
      %660 = vmatpush1.bf16.xpose.msra.mxu0 0
      %661 = vmatprep.subr.bf16.mxu0 0
      %662 = vmatpush1.bf16.xpose.msra.mxu0 0
      %663 = vmatprep.subr.bf16.mxu0 0
      %664 = vmatpush1.bf16.xpose.msra.mxu0 0
      %665 = vmatprep.subr.bf16.mxu0 0
      %666 = vmatpush1.bf16.xpose.msra.mxu0 0
      %667 = vmatprep.subr.bf16.mxu0 0
      %668 = vmatpush1.bf16.xpose.msra.mxu0 0
      %669 = vmatprep.mubr.bf16.mxu0 0
      %670 = vmatmul.mubr.bf16.gmra.mrb[0].mxu0 %v632
      %v671 = vpop.f32.mrb[0].mxu0
      %v672 = vadd.f32 0.0, %v671
      %v673 = vpop.f32.mrb[0].mxu0
      %v674 = vpop.f32.mrb[0].mxu0
      %v675 = vpop.f32.mrb[0].mxu0
      %676 = vdwg.mxu0
      %v677 = vmul.f32 %v672, 0.35355338
      %v678 = vsel %vm565, %v677, -inf
      %679 = vmax.xlane.f32.xlu0 %v678
      %v680 = vpop.xlane.xlu0 %679
      %v681 = vsub.f32 %v677, %v680
      %v682 = vmul.f32 %v681, 1.442695
      %v683 = vpow.pop %v682
      %v684 = vsel %vm565, %v683, 0.0
      %685 = vadd.xlane.f32.xlu0 %v684
      %v686 = vpop.xlane.xlu0 %685
      %v687 = vrcp.pop %v686
      %v688 = vmul.f32 %v683, %v687
      %v689 = vpack.c.bf16 %v688, %v688
      %690 = vrot.lane.b32.xlu0 %v516, 88
      %v691 = vpop.permute.xlu0 %690
      %v694 = vsel %vm565, %v689, 0
      %696 = vmatprep.subr.bf16.mxu0 0
      %697 = vmatpush1.bf16.msra.mxu0 %v691
      %698 = vmatprep.subr.bf16.mxu0 0
      %699 = vmatpush1.bf16.msra.mxu0 0
      %700 = vmatprep.subr.bf16.mxu0 0
      %701 = vmatpush1.bf16.msra.mxu0 0
      %702 = vmatprep.subr.bf16.mxu0 0
      %703 = vmatpush1.bf16.msra.mxu0 0
      %704 = vmatprep.subr.bf16.mxu0 0
      %705 = vmatpush1.bf16.msra.mxu0 0
      %706 = vmatprep.subr.bf16.mxu0 0
      %707 = vmatpush1.bf16.msra.mxu0 0
      %708 = vmatprep.subr.bf16.mxu0 0
      %709 = vmatpush1.bf16.msra.mxu0 0
      %710 = vmatprep.subr.bf16.mxu0 0
      %711 = vmatpush1.bf16.msra.mxu0 0
      %712 = vmatprep.subr.bf16.mxu0 0
      %713 = vmatpush1.bf16.msra.mxu0 0
      %714 = vmatprep.subr.bf16.mxu0 0
      %715 = vmatpush1.bf16.msra.mxu0 0
      %716 = vmatprep.subr.bf16.mxu0 0
      %717 = vmatpush1.bf16.msra.mxu0 0
      %718 = vmatprep.subr.bf16.mxu0 0
      %719 = vmatpush1.bf16.msra.mxu0 0
      %720 = vmatprep.subr.bf16.mxu0 0
      %721 = vmatpush1.bf16.msra.mxu0 0
      %722 = vmatprep.subr.bf16.mxu0 0
      %723 = vmatpush1.bf16.msra.mxu0 0
      %724 = vmatprep.subr.bf16.mxu0 0
      %725 = vmatpush1.bf16.msra.mxu0 0
      %726 = vmatprep.subr.bf16.mxu0 0
      %727 = vmatpush1.bf16.msra.mxu0 0
      %728 = vmatprep.mubr.bf16.mxu0 0
      %729 = vmatmul.mubr.bf16.gmra.mrb[0].mxu0 %v694
      %v730 = vpop.f32.mrb[0].mxu0
      %v731 = vadd.f32 0.0, %v730
      %v732 = vpop.f32.mrb[0].mxu0
      %v733 = vpop.f32.mrb[0].mxu0
      %v734 = vpop.f32.mrb[0].mxu0
      %735 = vdwg.mxu0
      %737 = vrot.lane.b32.xlu0 %v731, 8
      %v738 = vpop.permute.xlu0 %737
      %vm740 = vcmask 130112
      %741 = vst.msk [vmem:[#allocation2] sm:$0xff] %vm740, %v738
      %742 = vrot.lane.b32.xlu0 %v515, 112
      %v743 = vpop.permute.xlu0 %742
      %744 = vrot.lane.b32.xlu0 %v516, 112
      %v745 = vpop.permute.xlu0 %744
      %v747 = vsel %vm517, %v743, 0
      %v750 = vsel %vm517, %v745, 0
      %752 = vmatprep.subr.bf16.mxu0 0
      %753 = vmatpush1.bf16.xpose.msra.mxu0 %v750
      %754 = vmatprep.subr.bf16.mxu0 0
      %755 = vmatpush1.bf16.xpose.msra.mxu0 0
      %756 = vmatprep.subr.bf16.mxu0 0
      %757 = vmatpush1.bf16.xpose.msra.mxu0 0
      %758 = vmatprep.subr.bf16.mxu0 0
      %759 = vmatpush1.bf16.xpose.msra.mxu0 0
      %760 = vmatprep.subr.bf16.mxu0 0
      %761 = vmatpush1.bf16.xpose.msra.mxu0 0
      %762 = vmatprep.subr.bf16.mxu0 0
      %763 = vmatpush1.bf16.xpose.msra.mxu0 0
      %764 = vmatprep.subr.bf16.mxu0 0
      %765 = vmatpush1.bf16.xpose.msra.mxu0 0
      %766 = vmatprep.subr.bf16.mxu0 0
      %767 = vmatpush1.bf16.xpose.msra.mxu0 0
      %768 = vmatprep.subr.bf16.mxu0 0
      %769 = vmatpush1.bf16.xpose.msra.mxu0 0
      %770 = vmatprep.subr.bf16.mxu0 0
      %771 = vmatpush1.bf16.xpose.msra.mxu0 0
      %772 = vmatprep.subr.bf16.mxu0 0
      %773 = vmatpush1.bf16.xpose.msra.mxu0 0
      %774 = vmatprep.subr.bf16.mxu0 0
      %775 = vmatpush1.bf16.xpose.msra.mxu0 0
      %776 = vmatprep.subr.bf16.mxu0 0
      %777 = vmatpush1.bf16.xpose.msra.mxu0 0
      %778 = vmatprep.subr.bf16.mxu0 0
      %779 = vmatpush1.bf16.xpose.msra.mxu0 0
      %780 = vmatprep.subr.bf16.mxu0 0
      %781 = vmatpush1.bf16.xpose.msra.mxu0 0
      %782 = vmatprep.subr.bf16.mxu0 0
      %783 = vmatpush1.bf16.xpose.msra.mxu0 0
      %784 = vmatprep.mubr.bf16.mxu0 0
      %785 = vmatmul.mubr.bf16.gmra.mrb[0].mxu0 %v747
      %v786 = vpop.f32.mrb[0].mxu0
      %v787 = vadd.f32 0.0, %v786
      %v788 = vpop.f32.mrb[0].mxu0
      %v789 = vpop.f32.mrb[0].mxu0
      %v790 = vpop.f32.mrb[0].mxu0
      %791 = vdwg.mxu0
      %v792 = vmul.f32 %v787, 0.35355338
      %v793 = vsel %vm565, %v792, -inf
      %794 = vmax.xlane.f32.xlu0 %v793
      %v795 = vpop.xlane.xlu0 %794
      %v796 = vsub.f32 %v792, %v795
      %v797 = vmul.f32 %v796, 1.442695
      %v798 = vpow.pop %v797
      %v799 = vsel %vm565, %v798, 0.0
      %800 = vadd.xlane.f32.xlu0 %v799
      %v801 = vpop.xlane.xlu0 %800
      %v802 = vrcp.pop %v801
      %v803 = vmul.f32 %v798, %v802
      %v804 = vpack.c.bf16 %v803, %v803
      %805 = vrot.lane.b32.xlu0 %v516, 80
      %v806 = vpop.permute.xlu0 %805
      %v809 = vsel %vm565, %v804, 0
      %811 = vmatprep.subr.bf16.mxu0 0
      %812 = vmatpush1.bf16.msra.mxu0 %v806
      %813 = vmatprep.subr.bf16.mxu0 0
      %814 = vmatpush1.bf16.msra.mxu0 0
      %815 = vmatprep.subr.bf16.mxu0 0
      %816 = vmatpush1.bf16.msra.mxu0 0
      %817 = vmatprep.subr.bf16.mxu0 0
      %818 = vmatpush1.bf16.msra.mxu0 0
      %819 = vmatprep.subr.bf16.mxu0 0
      %820 = vmatpush1.bf16.msra.mxu0 0
      %821 = vmatprep.subr.bf16.mxu0 0
      %822 = vmatpush1.bf16.msra.mxu0 0
      %823 = vmatprep.subr.bf16.mxu0 0
      %824 = vmatpush1.bf16.msra.mxu0 0
      %825 = vmatprep.subr.bf16.mxu0 0
      %826 = vmatpush1.bf16.msra.mxu0 0
      %827 = vmatprep.subr.bf16.mxu0 0
      %828 = vmatpush1.bf16.msra.mxu0 0
      %829 = vmatprep.subr.bf16.mxu0 0
      %830 = vmatpush1.bf16.msra.mxu0 0
      %831 = vmatprep.subr.bf16.mxu0 0
      %832 = vmatpush1.bf16.msra.mxu0 0
      %833 = vmatprep.subr.bf16.mxu0 0
      %834 = vmatpush1.bf16.msra.mxu0 0
      %835 = vmatprep.subr.bf16.mxu0 0
      %836 = vmatpush1.bf16.msra.mxu0 0
      %837 = vmatprep.subr.bf16.mxu0 0
      %838 = vmatpush1.bf16.msra.mxu0 0
      %839 = vmatprep.subr.bf16.mxu0 0
      %840 = vmatpush1.bf16.msra.mxu0 0
      %841 = vmatprep.subr.bf16.mxu0 0
      %842 = vmatpush1.bf16.msra.mxu0 0
      %843 = vmatprep.mubr.bf16.mxu0 0
      %844 = vmatmul.mubr.bf16.gmra.mrb[0].mxu0 %v809
      %v845 = vpop.f32.mrb[0].mxu0
      %v846 = vadd.f32 0.0, %v845
      %v847 = vpop.f32.mrb[0].mxu0
      %v848 = vpop.f32.mrb[0].mxu0
      %v849 = vpop.f32.mrb[0].mxu0
      %850 = vdwg.mxu0
      %852 = vrot.lane.b32.xlu0 %v846, 16
      %v853 = vpop.permute.xlu0 %852
      %vm855 = vcmask 195712
      %856 = vst.msk [vmem:[#allocation2] sm:$0xff] %vm855, %v853
      %857 = vrot.lane.b32.xlu0 %v515, 104
      %v858 = vpop.permute.xlu0 %857
      %859 = vrot.lane.b32.xlu0 %v516, 104
      %v860 = vpop.permute.xlu0 %859
      %v862 = vsel %vm517, %v858, 0
      %v865 = vsel %vm517, %v860, 0
      %867 = vmatprep.subr.bf16.mxu0 0
      %868 = vmatpush1.bf16.xpose.msra.mxu0 %v865
      %869 = vmatprep.subr.bf16.mxu0 0
      %870 = vmatpush1.bf16.xpose.msra.mxu0 0
      %871 = vmatprep.subr.bf16.mxu0 0
      %872 = vmatpush1.bf16.xpose.msra.mxu0 0
      %873 = vmatprep.subr.bf16.mxu0 0
      %874 = vmatpush1.bf16.xpose.msra.mxu0 0
      %875 = vmatprep.subr.bf16.mxu0 0
      %876 = vmatpush1.bf16.xpose.msra.mxu0 0
      %877 = vmatprep.subr.bf16.mxu0 0
      %878 = vmatpush1.bf16.xpose.msra.mxu0 0
      %879 = vmatprep.subr.bf16.mxu0 0
      %880 = vmatpush1.bf16.xpose.msra.mxu0 0
      %881 = vmatprep.subr.bf16.mxu0 0
      %882 = vmatpush1.bf16.xpose.msra.mxu0 0
      %883 = vmatprep.subr.bf16.mxu0 0
      %884 = vmatpush1.bf16.xpose.msra.mxu0 0
      %885 = vmatprep.subr.bf16.mxu0 0
      %886 = vmatpush1.bf16.xpose.msra.mxu0 0
      %887 = vmatprep.subr.bf16.mxu0 0
      %888 = vmatpush1.bf16.xpose.msra.mxu0 0
      %889 = vmatprep.subr.bf16.mxu0 0
      %890 = vmatpush1.bf16.xpose.msra.mxu0 0
      %891 = vmatprep.subr.bf16.mxu0 0
      %892 = vmatpush1.bf16.xpose.msra.mxu0 0
      %893 = vmatprep.subr.bf16.mxu0 0
      %894 = vmatpush1.bf16.xpose.msra.mxu0 0
      %895 = vmatprep.subr.bf16.mxu0 0
      %896 = vmatpush1.bf16.xpose.msra.mxu0 0
      %897 = vmatprep.subr.bf16.mxu0 0
      %898 = vmatpush1.bf16.xpose.msra.mxu0 0
      %899 = vmatprep.mubr.bf16.mxu0 0
      %900 = vmatmul.mubr.bf16.gmra.mrb[0].mxu0 %v862
      %v901 = vpop.f32.mrb[0].mxu0
      %v902 = vadd.f32 0.0, %v901
      %v903 = vpop.f32.mrb[0].mxu0
      %v904 = vpop.f32.mrb[0].mxu0
      %v905 = vpop.f32.mrb[0].mxu0
      %906 = vdwg.mxu0
      %v907 = vmul.f32 %v902, 0.35355338
      %v908 = vsel %vm565, %v907, -inf
      %909 = vmax.xlane.f32.xlu0 %v908
      %v910 = vpop.xlane.xlu0 %909
      %v911 = vsub.f32 %v907, %v910
      %v912 = vmul.f32 %v911, 1.442695
      %v913 = vpow.pop %v912
      %v914 = vsel %vm565, %v913, 0.0
      %915 = vadd.xlane.f32.xlu0 %v914
      %v916 = vpop.xlane.xlu0 %915
      %v917 = vrcp.pop %v916
      %v918 = vmul.f32 %v913, %v917
      %v919 = vpack.c.bf16 %v918, %v918
      %920 = vrot.lane.b32.xlu0 %v516, 72
      %v921 = vpop.permute.xlu0 %920
      %v924 = vsel %vm565, %v919, 0
      %926 = vmatprep.subr.bf16.mxu0 0
      %927 = vmatpush1.bf16.msra.mxu0 %v921
      %928 = vmatprep.subr.bf16.mxu0 0
      %929 = vmatpush1.bf16.msra.mxu0 0
      %930 = vmatprep.subr.bf16.mxu0 0
      %931 = vmatpush1.bf16.msra.mxu0 0
      %932 = vmatprep.subr.bf16.mxu0 0
      %933 = vmatpush1.bf16.msra.mxu0 0
      %934 = vmatprep.subr.bf16.mxu0 0
      %935 = vmatpush1.bf16.msra.mxu0 0
      %936 = vmatprep.subr.bf16.mxu0 0
      %937 = vmatpush1.bf16.msra.mxu0 0
      %938 = vmatprep.subr.bf16.mxu0 0
      %939 = vmatpush1.bf16.msra.mxu0 0
      %940 = vmatprep.subr.bf16.mxu0 0
      %941 = vmatpush1.bf16.msra.mxu0 0
      %942 = vmatprep.subr.bf16.mxu0 0
      %943 = vmatpush1.bf16.msra.mxu0 0
      %944 = vmatprep.subr.bf16.mxu0 0
      %945 = vmatpush1.bf16.msra.mxu0 0
      %946 = vmatprep.subr.bf16.mxu0 0
      %947 = vmatpush1.bf16.msra.mxu0 0
      %948 = vmatprep.subr.bf16.mxu0 0
      %949 = vmatpush1.bf16.msra.mxu0 0
      %950 = vmatprep.subr.bf16.mxu0 0
      %951 = vmatpush1.bf16.msra.mxu0 0
      %952 = vmatprep.subr.bf16.mxu0 0
      %953 = vmatpush1.bf16.msra.mxu0 0
      %954 = vmatprep.subr.bf16.mxu0 0
      %955 = vmatpush1.bf16.msra.mxu0 0
      %956 = vmatprep.subr.bf16.mxu0 0
      %957 = vmatpush1.bf16.msra.mxu0 0
      %958 = vmatprep.mubr.bf16.mxu0 0
      %959 = vmatmul.mubr.bf16.gmra.mrb[0].mxu0 %v924
      %v960 = vpop.f32.mrb[0].mxu0
      %v961 = vadd.f32 0.0, %v960
      %v962 = vpop.f32.mrb[0].mxu0
      %v963 = vpop.f32.mrb[0].mxu0
      %v964 = vpop.f32.mrb[0].mxu0
      %965 = vdwg.mxu0
      %967 = vrot.lane.b32.xlu0 %v961, 24
      %v968 = vpop.permute.xlu0 %967
      %vm970 = vcmask 261312
      %971 = vst.msk [vmem:[#allocation2] sm:$0xff] %vm970, %v968
      %v972 = vld [vmem:[#allocation2] sm:$0xff]
      %v973 = vpack.c.bf16 %v972, %v972
      %v974 = vld [vmem:[%s6] sm:$0xf]
      %v975 = vld [vmem:[%s6 + $0x4] sm:$0xf]
      %v976 = vld [vmem:[%s6 + $0x8] sm:$0xf]
      %v977 = vld [vmem:[%s6 + $0xc] sm:$0xf]
      %v978 = vld [vmem:[%s7] sm:$0x1]
      %v980 = vlaneseq
      %v981 = vshrl.u32 %v980, 7
      %v982 = vsub.s32 0, %v981
      %v983 = vrot.slane %v978, %v982
      %v989 = vunpack.c.l.b16 %v974
      %v990 = vunpack.c.l.b16 %v975
      %v991 = vunpack.c.l.b16 %v976
      %v992 = vunpack.c.l.b16 %v977
      %v993 = vpack.c.b16 %v990, %v989
      %v994 = vpack.c.b16 %v992, %v991
      %v998 = vsel %vm403, %v973, 0
      %1000 = vmatprep.subr.bf16.mxu0 0
      %1001 = vmatpush1.bf16.msra.mxu0 %v993
      %1002 = vmatprep.subr.bf16.mxu0 0
      %1003 = vmatpush1.bf16.msra.mxu0 %v994
      %1004 = vmatprep.subr.bf16.mxu0 0
      %1005 = vmatpush1.bf16.msra.mxu0 0
      %1006 = vmatprep.subr.bf16.mxu0 0
      %1007 = vmatpush1.bf16.msra.mxu0 0
      %1008 = vmatprep.subr.bf16.mxu0 0
      %1009 = vmatpush1.bf16.msra.mxu0 0
      %1010 = vmatprep.subr.bf16.mxu0 0
      %1011 = vmatpush1.bf16.msra.mxu0 0
      %1012 = vmatprep.subr.bf16.mxu0 0
      %1013 = vmatpush1.bf16.msra.mxu0 0
      %1014 = vmatprep.subr.bf16.mxu0 0
      %1015 = vmatpush1.bf16.msra.mxu0 0
      %1016 = vmatprep.subr.bf16.mxu0 0
      %1017 = vmatpush1.bf16.msra.mxu0 0
      %1018 = vmatprep.subr.bf16.mxu0 0
      %1019 = vmatpush1.bf16.msra.mxu0 0
      %1020 = vmatprep.subr.bf16.mxu0 0
      %1021 = vmatpush1.bf16.msra.mxu0 0
      %1022 = vmatprep.subr.bf16.mxu0 0
      %1023 = vmatpush1.bf16.msra.mxu0 0
      %1024 = vmatprep.subr.bf16.mxu0 0
      %1025 = vmatpush1.bf16.msra.mxu0 0
      %1026 = vmatprep.subr.bf16.mxu0 0
      %1027 = vmatpush1.bf16.msra.mxu0 0
      %1028 = vmatprep.subr.bf16.mxu0 0
      %1029 = vmatpush1.bf16.msra.mxu0 0
      %1030 = vmatprep.subr.bf16.mxu0 0
      %1031 = vmatpush1.bf16.msra.mxu0 0
      %1032 = vmatprep.mubr.bf16.mxu0 0
      %1033 = vmatmul.mubr.bf16.gmra.mrb[0].mxu0 %v998
      %v1034 = vpop.f32.mrb[0].mxu0
      %v1035 = vadd.f32 %v983, %v1034
      %v1036 = vpop.f32.mrb[0].mxu0
      %v1037 = vpop.f32.mrb[0].mxu0
      %v1038 = vpop.f32.mrb[0].mxu0
      %1039 = vdwg.mxu0
      %v1040 = vadd.f32 %v1035, %v376
      %v1041 = vsel %vm403, %v1040, 0.0
      %1042 = vadd.xlane.f32.xlu0 %v1041
      %v1043 = vpop.xlane.xlu0 %1042
      %v1044 = vrcp.pop 32.0
      %v1045 = vmul.f32 %v1043, %v1044
      %v1046 = vsub.f32 %v1040, %v1045
      %v1047 = vmul.f32 %v1046, %v1046
      %v1048 = vsel %vm403, %v1047, 0.0
      %1049 = vadd.xlane.f32.xlu0 %v1048
      %v1050 = vpop.xlane.xlu0 %1049
      %v1051 = vmul.f32 %v1050, %v1044
      %v1052 = vadd.f32 %v1051, 1e-05
      %v1053 = vrsqrt.pop %v1052
      %v1054 = vmul.f32 %v1046, %v1053
      %v1055 = vld [vmem:[%s8] sm:$0x1]
      %v1057 = vlaneseq
      %v1058 = vshrl.u32 %v1057, 7
      %v1059 = vsub.s32 0, %v1058
      %v1060 = vrot.slane %v1055, %v1059
      %v1062 = vmul.f32 %v1054, %v1060
      %v1063 = vld [vmem:[%s9] sm:$0x1]
      %v1065 = vlaneseq
      %v1066 = vshrl.u32 %v1065, 7
      %v1067 = vsub.s32 0, %v1066
      %v1068 = vrot.slane %v1063, %v1067
      %v1070 = vadd.f32 %v1062, %v1068
      %1071 = vst.msk [vmem:[%s374] sm:$0xff] %vm403, %v1070
      %p1072 = scmp.lt.s32.totalorder %s21, 1
      %s1073 = scalar_select %p1072, %s21, 1
      %s1074 = smul.addr %s1073, 8
      %s1075 = scalar_lea.vmem %s10, %s1074
      // Predicated region
      $region61: #{transformer_ocr_forward.18} parent=59 // pred_check
        %p1076 = pneg %p259
      $region62: #{transformer_ocr_forward.18} parent=59 // pred_check_branch
        %1078 = sbr.rel (%p1076) target = $region64
      $region63: #{transformer_ocr_forward.18} parent=59 // pred_region
        _
      $region64: #{transformer_ocr_forward.18} parent=59 // pred_fallthru
        _
    $region60: #{transformer_ocr_forward.18} parent=5 // pred_fallthru
      _
    %p1079 = scmp.le.s32.totalorder 2, %s16
    // Predicated region
    $region65: #{transformer_ocr_forward.18} parent=5 // pred_check
      %p1080 = pneg %p1079
    $region66: #{transformer_ocr_forward.18} parent=5 // pred_check_branch
      %1082 = sbr.rel (%p1080) target = $region68
    $region67: #{transformer_ocr_forward.18} parent=5 // pred_region
      %s1083 = ssub.s32 %s16, 2
      // Predicated region
      $region69: #{transformer_ocr_forward.18} parent=67 // pred_check
        %p1084 = pneg %p265
      $region70: #{transformer_ocr_forward.18} parent=67 // pred_check_branch
        %1086 = sbr.rel (%p1084) target = $region72
      $region71: #{transformer_ocr_forward.18} parent=67 // pred_region
        %p1087 = scmp.lt.s32.totalorder %s22, 1
        %s1088 = scalar_select %p1087, %s22, 1
        %s1089 = smul.addr %s1088, 8
        %s1090 = scalar_lea.vmem %s10, %s1089
      $region72: #{transformer_ocr_forward.18} parent=67 // pred_fallthru
        _
    $region68: #{transformer_ocr_forward.18} parent=5 // pred_fallthru
      _
  $region6: #{transformer_ocr_forward.18} parent=0 // loop_footer
    %s20 = sadd.s32 1, %s16
  $region7: #{transformer_ocr_forward.18} parent=0 // loop_footer_branch
    %15 = sbr.rel target = $region3
  $region8: #{transformer_ocr_forward.18} parent=0 // loop_exit
    _

// kernel: transformer_ocr_forward.19
$region0: #{transformer_ocr_forward.19}
  #allocation0 [shape = 'u32[]', space=smem, size = 0x4, offset = 0x4, fixed_abs, tag = 'smem constant byte address 0x4 - core index']
  #allocation1 [shape = 'u32[144,128]{1,0:T(1,128)}', space=vmem, size = 0x12000, scoped, tag = 'internal scratch']
  #allocation2 [shape = 'f32[16,32]{1,0:T(8,128)}', space=vmem, size = 0x2000, scoped, tag = 'scratch operand']
  %s0 = inlined_call_operand.vmem [shape: f32[16,32], index: 0, kind: input, shape index: {}]
  %s1 = inlined_call_operand.vmem [shape: bf16[32,64], index: 1, kind: input, shape index: {}]
  %s2 = inlined_call_operand.vmem [shape: f32[1,64], index: 2, kind: input, shape index: {}]
  %s3 = inlined_call_operand.vmem [shape: bf16[64,32], index: 3, kind: input, shape index: {}]
  %s4 = inlined_call_operand.vmem [shape: f32[1,32], index: 4, kind: input, shape index: {}]
  %s5 = inlined_call_operand.vmem [shape: f32[1,32], index: 5, kind: input, shape index: {}]
  %s6 = inlined_call_operand.vmem [shape: f32[1,32], index: 6, kind: input, shape index: {}]
  %s7 = inlined_call_operand.vmem [shape: f32[16,32], index: 7, kind: output, shape index: {}]
  %s8 = sld [smem:[#allocation0]]
  $region46: #{transformer_ocr_forward.19} parent=0
    _
  %s10 = ssub.s32 1, %s8
  %s11 = scalar_select 0, %s10, %s8
  // Predicated region
  $region2: #{transformer_ocr_forward.19} parent=0 // pred_check
    _
  $region3: #{transformer_ocr_forward.19} parent=0 // pred_check_branch
    %13 = sbr.rel (0) target = $region5
  $region4: #{transformer_ocr_forward.19} parent=0 // pred_region
    _
  $region5: #{transformer_ocr_forward.19} parent=0 // pred_fallthru
    _
  // Predicated region
  $region6: #{transformer_ocr_forward.19} parent=0 // pred_check
    _
  $region7: #{transformer_ocr_forward.19} parent=0 // pred_check_branch
    %15 = sbr.rel (0) target = $region9
  $region8: #{transformer_ocr_forward.19} parent=0 // pred_region
    _
  $region9: #{transformer_ocr_forward.19} parent=0 // pred_fallthru
    _
  // Predicated region
  $region10: #{transformer_ocr_forward.19} parent=0 // pred_check
    _
  $region11: #{transformer_ocr_forward.19} parent=0 // pred_check_branch
    %17 = sbr.rel (0) target = $region13
  $region12: #{transformer_ocr_forward.19} parent=0 // pred_region
    _
  $region13: #{transformer_ocr_forward.19} parent=0 // pred_fallthru
    _
  // Predicated region
  $region14: #{transformer_ocr_forward.19} parent=0 // pred_check
    _
  $region15: #{transformer_ocr_forward.19} parent=0 // pred_check_branch
    %19 = sbr.rel (0) target = $region17
  $region16: #{transformer_ocr_forward.19} parent=0 // pred_region
    _
  $region17: #{transformer_ocr_forward.19} parent=0 // pred_fallthru
    _
  // Predicated region
  $region18: #{transformer_ocr_forward.19} parent=0 // pred_check
    _
  $region19: #{transformer_ocr_forward.19} parent=0 // pred_check_branch
    %21 = sbr.rel (0) target = $region21
  $region20: #{transformer_ocr_forward.19} parent=0 // pred_region
    _
  $region21: #{transformer_ocr_forward.19} parent=0 // pred_fallthru
    _
  // Predicated region
  $region22: #{transformer_ocr_forward.19} parent=0 // pred_check
    _
  $region23: #{transformer_ocr_forward.19} parent=0 // pred_check_branch
    %23 = sbr.rel (0) target = $region25
  $region24: #{transformer_ocr_forward.19} parent=0 // pred_region
    _
  $region25: #{transformer_ocr_forward.19} parent=0 // pred_fallthru
    _
  // Predicated region
  $region26: #{transformer_ocr_forward.19} parent=0 // pred_check
    _
  $region27: #{transformer_ocr_forward.19} parent=0 // pred_check_branch
    %25 = sbr.rel (0) target = $region29
  $region28: #{transformer_ocr_forward.19} parent=0 // pred_region
    _
  $region29: #{transformer_ocr_forward.19} parent=0 // pred_fallthru
    _
  %p27 = scmp.eq.s32.totalorder 0, 0
  // Predicated region
  $region30: #{transformer_ocr_forward.19} parent=0 // pred_check
    %p28 = pneg %p27
  $region31: #{transformer_ocr_forward.19} parent=0 // pred_check_branch
    %30 = sbr.rel (%p28) target = $region33
  $region32: #{transformer_ocr_forward.19} parent=0 // pred_region
    %vm31 = vcmask 261120
    %32 = vst.msk [vmem:[#allocation2] sm:$0xff] %vm31, 0.0
    %33 = vst.msk [vmem:[#allocation2 + $0x8] sm:$0xff] %vm31, 0.0
  $region33: #{transformer_ocr_forward.19} parent=0 // pred_fallthru
    _
  %v34 = vld [vmem:[%s0] sm:$0xff]
  %v35 = vld [vmem:[%s0 + $0x8] sm:$0xff]
  %v36 = vpack.c.bf16 %v35, %v34
  %v37 = vld [vmem:[%s1] sm:$0xf]
  %v38 = vld [vmem:[%s1 + $0x4] sm:$0xf]
  %v39 = vld [vmem:[%s1 + $0x8] sm:$0xf]
  %v40 = vld [vmem:[%s1 + $0xc] sm:$0xf]
  %v41 = vld [vmem:[%s2] sm:$0x1]
  %v43 = vlaneseq
  %v44 = vshrl.u32 %v43, 7
  %v45 = vsub.s32 0, %v44
  %v46 = vrot.slane %v41, %v45
  %v52 = vunpack.c.l.b16 %v37
  %v53 = vunpack.c.l.b16 %v38
  %v54 = vunpack.c.l.b16 %v39
  %v55 = vunpack.c.l.b16 %v40
  %v56 = vpack.c.b16 %v53, %v52
  %v57 = vpack.c.b16 %v55, %v54
  %vm60 = vcmask 261120
  %v62 = vsel %vm60, %v36, 0
  %64 = vmatprep.subr.bf16.mxu0 0
  %65 = vmatpush1.bf16.msra.mxu0 %v56
  %66 = vmatprep.subr.bf16.mxu0 0
  %67 = vmatpush1.bf16.msra.mxu0 %v57
  %68 = vmatprep.subr.bf16.mxu0 0
  %69 = vmatpush1.bf16.msra.mxu0 0
  %70 = vmatprep.subr.bf16.mxu0 0
  %71 = vmatpush1.bf16.msra.mxu0 0
  %72 = vmatprep.subr.bf16.mxu0 0
  %73 = vmatpush1.bf16.msra.mxu0 0
  %74 = vmatprep.subr.bf16.mxu0 0
  %75 = vmatpush1.bf16.msra.mxu0 0
  %76 = vmatprep.subr.bf16.mxu0 0
  %77 = vmatpush1.bf16.msra.mxu0 0
  %78 = vmatprep.subr.bf16.mxu0 0
  %79 = vmatpush1.bf16.msra.mxu0 0
  %80 = vmatprep.subr.bf16.mxu0 0
  %81 = vmatpush1.bf16.msra.mxu0 0
  %82 = vmatprep.subr.bf16.mxu0 0
  %83 = vmatpush1.bf16.msra.mxu0 0
  %84 = vmatprep.subr.bf16.mxu0 0
  %85 = vmatpush1.bf16.msra.mxu0 0
  %86 = vmatprep.subr.bf16.mxu0 0
  %87 = vmatpush1.bf16.msra.mxu0 0
  %88 = vmatprep.subr.bf16.mxu0 0
  %89 = vmatpush1.bf16.msra.mxu0 0
  %90 = vmatprep.subr.bf16.mxu0 0
  %91 = vmatpush1.bf16.msra.mxu0 0
  %92 = vmatprep.subr.bf16.mxu0 0
  %93 = vmatpush1.bf16.msra.mxu0 0
  %94 = vmatprep.subr.bf16.mxu0 0
  %95 = vmatpush1.bf16.msra.mxu0 0
  %96 = vmatprep.mubr.bf16.mxu0 0
  %97 = vmatmul.mubr.bf16.gmra.mrb[0].mxu0 %v62
  %v98 = vpop.f32.mrb[0].mxu0
  %v99 = vadd.f32 %v46, %v98
  %v100 = vpop.f32.mrb[0].mxu0
  %v101 = vpop.f32.mrb[0].mxu0
  %v102 = vadd.f32 %v46, %v101
  %v103 = vpop.f32.mrb[0].mxu0
  %104 = vdwg.mxu0
  %v105 = vmax.f32 %v99, 0.0
  %v106 = vmax.f32 %v102, 0.0
  %v107 = vld [vmem:[#allocation2] sm:$0xff]
  %v108 = vld [vmem:[#allocation2 + $0x8] sm:$0xff]
  %v109 = vpack.c.bf16 %v106, %v105
  %v110 = vld [vmem:[%s3] sm:$0xf]
  %v111 = vld [vmem:[%s3 + $0x4] sm:$0xf]
  %v112 = vld [vmem:[%s3 + $0x8] sm:$0xf]
  %v113 = vld [vmem:[%s3 + $0xc] sm:$0xf]
  %v114 = vld [vmem:[%s3 + $0x10] sm:$0xf]
  %v115 = vld [vmem:[%s3 + $0x14] sm:$0xf]
  %v116 = vld [vmem:[%s3 + $0x18] sm:$0xf]
  %v117 = vld [vmem:[%s3 + $0x1c] sm:$0xf]
  %v126 = vunpack.c.l.b16 %v110
  %v127 = vunpack.c.l.b16 %v111
  %v128 = vunpack.c.l.b16 %v112
  %v129 = vunpack.c.l.b16 %v113
  %v130 = vunpack.c.l.b16 %v114
  %v131 = vunpack.c.l.b16 %v115
  %v132 = vunpack.c.l.b16 %v116
  %v133 = vunpack.c.l.b16 %v117
  %v134 = vpack.c.b16 %v127, %v126
  %v135 = vpack.c.b16 %v129, %v128
  %v136 = vpack.c.b16 %v131, %v130
  %v137 = vpack.c.b16 %v133, %v132
  %vm142 = vcmask 523264
  %v144 = vsel %vm142, %v109, 0
  %146 = vmatprep.subr.bf16.mxu0 0
  %147 = vmatpush1.bf16.msra.mxu0 %v134
  %148 = vmatprep.subr.bf16.mxu0 0
  %149 = vmatpush1.bf16.msra.mxu0 %v135
  %150 = vmatprep.subr.bf16.mxu0 0
  %151 = vmatpush1.bf16.msra.mxu0 %v136
  %152 = vmatprep.subr.bf16.mxu0 0
  %153 = vmatpush1.bf16.msra.mxu0 %v137
  %154 = vmatprep.subr.bf16.mxu0 0
  %155 = vmatpush1.bf16.msra.mxu0 0
  %156 = vmatprep.subr.bf16.mxu0 0
  %157 = vmatpush1.bf16.msra.mxu0 0
  %158 = vmatprep.subr.bf16.mxu0 0
  %159 = vmatpush1.bf16.msra.mxu0 0
  %160 = vmatprep.subr.bf16.mxu0 0
  %161 = vmatpush1.bf16.msra.mxu0 0
  %162 = vmatprep.subr.bf16.mxu0 0
  %163 = vmatpush1.bf16.msra.mxu0 0
  %164 = vmatprep.subr.bf16.mxu0 0
  %165 = vmatpush1.bf16.msra.mxu0 0
  %166 = vmatprep.subr.bf16.mxu0 0
  %167 = vmatpush1.bf16.msra.mxu0 0
  %168 = vmatprep.subr.bf16.mxu0 0
  %169 = vmatpush1.bf16.msra.mxu0 0
  %170 = vmatprep.subr.bf16.mxu0 0
  %171 = vmatpush1.bf16.msra.mxu0 0
  %172 = vmatprep.subr.bf16.mxu0 0
  %173 = vmatpush1.bf16.msra.mxu0 0
  %174 = vmatprep.subr.bf16.mxu0 0
  %175 = vmatpush1.bf16.msra.mxu0 0
  %176 = vmatprep.subr.bf16.mxu0 0
  %177 = vmatpush1.bf16.msra.mxu0 0
  %178 = vmatprep.mubr.bf16.mxu0 0
  %179 = vmatmul.mubr.bf16.gmra.mrb[0].mxu0 %v144
  %v180 = vpop.f32.mrb[0].mxu0
  %v181 = vadd.f32 0.0, %v180
  %v182 = vpop.f32.mrb[0].mxu0
  %v183 = vpop.f32.mrb[0].mxu0
  %v184 = vadd.f32 0.0, %v183
  %v185 = vpop.f32.mrb[0].mxu0
  %186 = vdwg.mxu0
  %v187 = vadd.f32 %v107, %v181
  %v188 = vadd.f32 %v108, %v184
  %189 = vst.msk [vmem:[#allocation2] sm:$0xff] %vm60, %v187
  %190 = vst.msk [vmem:[#allocation2 + $0x8] sm:$0xff] %vm60, %v188
  // Predicated region
  $region34: #{transformer_ocr_forward.19} parent=0 // pred_check
    %p191 = pneg %p27
  $region35: #{transformer_ocr_forward.19} parent=0 // pred_check_branch
    %193 = sbr.rel (%p191) target = $region37
  $region36: #{transformer_ocr_forward.19} parent=0 // pred_region
    %v194 = vld [vmem:[#allocation2] sm:$0xff]
    %v195 = vld [vmem:[#allocation2 + $0x8] sm:$0xff]
    %v196 = vld [vmem:[%s4] sm:$0x1]
    %v198 = vlaneseq
    %v199 = vshrl.u32 %v198, 7
    %v200 = vsub.s32 0, %v199
    %v201 = vrot.slane %v196, %v200
    %v203 = vadd.f32 %v194, %v201
    %v204 = vadd.f32 %v195, %v201
    %v205 = vadd.f32 %v203, %v34
    %v206 = vadd.f32 %v204, %v35
    %v207 = vsel %vm60, %v205, 0.0
    %208 = vadd.xlane.f32.xlu0 %v207
    %v209 = vpop.xlane.xlu0 %208
    %v210 = vsel %vm60, %v206, 0.0
    %211 = vadd.xlane.f32.xlu0 %v210
    %v212 = vpop.xlane.xlu0 %211
    %v213 = vrcp.pop 32.0
    %v214 = vmul.f32 %v209, %v213
    %v215 = vmul.f32 %v212, %v213
    %v216 = vsub.f32 %v205, %v214
    %v217 = vsub.f32 %v206, %v215
    %v218 = vmul.f32 %v216, %v216
    %v219 = vmul.f32 %v217, %v217
    %v220 = vsel %vm60, %v218, 0.0
    %221 = vadd.xlane.f32.xlu0 %v220
    %v222 = vpop.xlane.xlu0 %221
    %v223 = vsel %vm60, %v219, 0.0
    %224 = vadd.xlane.f32.xlu0 %v223
    %v225 = vpop.xlane.xlu0 %224
    %v226 = vmul.f32 %v222, %v213
    %v227 = vmul.f32 %v225, %v213
    %v228 = vadd.f32 %v226, 1e-05
    %v229 = vadd.f32 %v227, 1e-05
    %v230 = vrsqrt.pop %v228
    %v231 = vrsqrt.pop %v229
    %v232 = vmul.f32 %v216, %v230
    %v233 = vmul.f32 %v217, %v231
    %v234 = vld [vmem:[%s5] sm:$0x1]
    %v236 = vlaneseq
    %v237 = vshrl.u32 %v236, 7
    %v238 = vsub.s32 0, %v237
    %v239 = vrot.slane %v234, %v238
    %v241 = vmul.f32 %v232, %v239
    %v242 = vmul.f32 %v233, %v239
    %v243 = vld [vmem:[%s6] sm:$0x1]
    %v245 = vlaneseq
    %v246 = vshrl.u32 %v245, 7
    %v247 = vsub.s32 0, %v246
    %v248 = vrot.slane %v243, %v247
    %v250 = vadd.f32 %v241, %v248
    %v251 = vadd.f32 %v242, %v248
    %252 = vst.msk [vmem:[%s7] sm:$0xff] %vm60, %v250
    %253 = vst.msk [vmem:[%s7 + $0x8] sm:$0xff] %vm60, %v251
  $region37: #{transformer_ocr_forward.19} parent=0 // pred_fallthru
    _
  // Predicated region
  $region38: #{transformer_ocr_forward.19} parent=0 // pred_check
    _
  $region39: #{transformer_ocr_forward.19} parent=0 // pred_check_branch
    %255 = sbr.rel (0) target = $region41
  $region40: #{transformer_ocr_forward.19} parent=0 // pred_region
    _
  $region41: #{transformer_ocr_forward.19} parent=0 // pred_fallthru
    _
  // Predicated region
  $region42: #{transformer_ocr_forward.19} parent=0 // pred_check
    _
  $region43: #{transformer_ocr_forward.19} parent=0 // pred_check_branch
    %257 = sbr.rel (0) target = $region45
  $region44: #{transformer_ocr_forward.19} parent=0 // pred_region
    _
  $region45: #{transformer_ocr_forward.19} parent=0 // pred_fallthru
    _

</llo_original>
